<compile_context>
chip_gen: v6e
topology: v6e:2x2x1
jax: 0.10.0
libtpu: 0.0.40
codegen_flags: <defaults>
</compile_context>

<pallas_src>
import functools

import jax
import jax.numpy as jnp
from jax import lax
from jax.experimental import pallas as pl
from jax.experimental.pallas import tpu as pltpu

F = 11             # atom_features (module default)
D = 3              # spatial dims
FD = F + D         # packed node-state / packed message width [h | x] / [msg_h | msg_x]
F2 = 2 * F         # fused h-path / x-path hidden width
NUM_LAYERS = 4     # num_layers (module default)

PARAM_ORDER = [
    "w1i", "w1j", "w1d", "b1", "w2", "b2",          # mlp_msg_h
    "wa", "ba",                                     # mlp_attn_msg_h
    "wu1h", "wu1a", "bu1", "wu2", "bu2",            # mlp_upd_h
    "wx1i", "wx1j", "wx1d", "bx1", "wx2", "bx2",    # mlp_msg_x (layers 1,2)
    "wx3", "bx3",                                   # mlp_msg_x (final F->1)
    "wp", "bp",                                     # lin_pred
]


def _silu(v):
    return v * jax.nn.sigmoid(v)


# ------------------------------- kernel -----------------------------------
def egnn_kernel(hx0_ref, idx_ref,
                w1i_ref, w1j_ref, w1d_ref, b1_ref, w2_ref, b2_ref,
                wa_ref, ba_ref, wx3_ref, bx3_ref,
                wu1h_ref, wu1a_ref, bu1_ref, wu2_ref, bu2_ref,
                out_ref,
                hx_s, agg_s):
    l = pl.program_id(0)                      # layer index
    e = pl.program_id(1)                      # edge-tile index
    last_l = pl.num_programs(0) - 1
    last_e = pl.num_programs(1) - 1
    te = idx_ref.shape[0] // 2                # edge_tile (static)
    n = hx_s.shape[0]                         # num nodes (static)

    dot = functools.partial(jnp.dot, preferred_element_type=jnp.float32)
    # transposed contraction (TE,N)x(TE,K) -> (N,K): the scatter-add
    dot_t = functools.partial(
        lax.dot_general,
        dimension_numbers=(((0,), (0,)), ((), ())),
        preferred_element_type=jnp.float32)

    @pl.when(jnp.logical_and(l == 0, e == 0))
    def _():
        pltpu.sync_copy(hx0_ref, hx_s)        # one-shot load of initial [h | x]

    @pl.when(e == 0)
    def _():
        agg_s[...] = jnp.zeros_like(agg_s)    # per-layer merged [agg_h | agg_x]

    # lane masks for the packed [h | x] layout (1 vreg, rebuilt per step — negligible)
    lane = lax.broadcasted_iota(jnp.int32, (1, FD), 1)
    xmask = (lane >= F).astype(jnp.float32)   # 1 on x lanes
    hmask = 1.0 - xmask                       # 1 on h lanes

    # ---- build the stacked [dst | src] one-hot in-register from int32 indices ----
    idx2 = idx_ref[...]                                         # (2*TE, 1) int32
    node = lax.broadcasted_iota(jnp.int32, (2 * te, n), 1)      # node id along lanes
    o2 = (node == idx2).astype(jnp.float32)                     # (2*TE, N); padded rows all-zero

    hx = hx_s[...]                                              # (N, FD) = [h | x]
    hx2 = dot(o2, hx)                                           # both endpoint gathers, one matmul
    hx_i = hx2[:te]                                             # (TE, FD) target (dst) endpoints
    hx_j = hx2[te:]                                             # (TE, FD) source (src) endpoints

    diff = (hx_i - hx_j) * xmask                                # x_i - x_j on x lanes, 0 on h lanes
    d2 = jnp.sum(diff * diff, axis=-1, keepdims=True)           # ||x_i - x_j||^2, (TE, 1)
    d = jnp.sqrt(d2)

    # fused mlp_msg_h / mlp_msg_x (weights zero-padded so packed hx feeds them directly)
    tu = _silu(dot(hx_i, w1i_ref[...]) + dot(hx_j, w1j_ref[...])
               + d2 * w1d_ref[...] + b1_ref[...])               # (TE, 2F) = [t | u]
    mu = _silu(dot(tu, w2_ref[...]) + b2_ref[...])              # (TE, 2F) = [m | u2]
    attn = jax.nn.sigmoid(dot(mu, wa_ref[...]) + ba_ref[...])   # (TE, 1)
    scale = dot(mu, wx3_ref[...]) + bx3_ref[...]                # (TE, 1)

    am = attn * mu                                              # lanes [:F] = msg_h
    # packed message [msg_h | msg_x]; the divide is (TE,1)-narrow, broadcast into diff
    msg = am[:, :FD] * hmask + diff * (scale / (d + 1.0))       # (TE, FD)

    # fused scatter-add of both message streams into the single merged accumulator
    agg_s[...] += dot_t(o2[:te], msg)                           # (N, FD) = [agg_h | agg_x]

    # ---------------- node update after the last edge tile of this layer ---
    @pl.when(e == last_e)
    def _():
        hx_cur = hx_s[...]
        agg = agg_s[...]
        upd = _silu(dot(hx_cur, wu1h_ref[...]) + dot(agg, wu1a_ref[...])
                    + bu1_ref[...])                             # (N, F)
        # h += mlp_upd_h(...)[2nd linear] ; x += agg_x — both lane groups at once
        hx_s[...] = hx_cur + dot(upd, wu2_ref[...]) + bu2_ref[...] + agg * xmask

    # ---------------- emit final node state at the very end -----------------
    @pl.when(jnp.logical_and(l == last_l, e == last_e))
    def _():
        out_ref[...] = hx_s[...]


# ----------------------------- wrapper -------------------------------------
def _fuse_params(p):
    """Pre-concatenate / zero-pad the per-layer weights (plain JAX, trace time)."""
    f32 = jnp.float32
    L = NUM_LAYERS
    zFF = jnp.zeros((L, F, F), f32)
    zDW = jnp.zeros((L, D, F2), f32)
    zF1 = jnp.zeros((L, F, 1), f32)
    zDF = jnp.zeros((L, D, F), f32)
    # layer-1 message weights: [h-path | x-path] columns, 3 zero rows for the x lanes
    w1i = jnp.concatenate(
        [jnp.concatenate([p["w1i"], p["wx1i"]], axis=-1), zDW], axis=1)   # (L,FD,2F)
    w1j = jnp.concatenate(
        [jnp.concatenate([p["w1j"], p["wx1j"]], axis=-1), zDW], axis=1)   # (L,FD,2F)
    w1d = jnp.concatenate([p["w1d"], p["wx1d"]], axis=-1)                 # (L,1,2F)
    b1 = jnp.concatenate([p["b1"], p["bx1"]], axis=-1)                    # (L,1,2F)
    # layer-2: block-diagonal
    w2 = jnp.concatenate(
        [jnp.concatenate([p["w2"], zFF], axis=-1),
         jnp.concatenate([zFF, p["wx2"]], axis=-1)], axis=1)              # (L,2F,2F)
    b2 = jnp.concatenate([p["b2"], p["bx2"]], axis=-1)                    # (L,1,2F)
    # heads: attention logit and coordinate scale as (2F,1) columns
    wa = jnp.concatenate([jnp.swapaxes(p["wa"], 1, 2), zF1], axis=1)      # (L,2F,1)
    wx3 = jnp.concatenate([zF1, jnp.swapaxes(p["wx3"], 1, 2)], axis=1)    # (L,2F,1)
    # update MLP: zero x-rows so packed hx / packed [agg_h|agg_x] feed it directly,
    # and widen the second linear to FD lanes so the result adds straight onto hx.
    wu1h = jnp.concatenate([p["wu1h"], zDF], axis=1)                      # (L,FD,F)
    wu1a = jnp.concatenate([p["wu1a"], zDF], axis=1)                      # (L,FD,F)
    wu2 = jnp.concatenate([p["wu2"], jnp.zeros((L, F, D), f32)], axis=-1)     # (L,F,FD)
    bu2 = jnp.concatenate([p["bu2"], jnp.zeros((L, 1, D), f32)], axis=-1)     # (L,1,FD)
    return [w1i, w1j, w1d, b1, w2, b2, wa, p["ba"], wx3, p["bx3"],
            wu1h, wu1a, p["bu1"], wu2, bu2]


@functools.partial(jax.jit, static_argnames=("num_graphs", "edge_tile"))
def e3egnn_forward(h, x, src, dst, batch, params, *, num_graphs, edge_tile=256):
    assert edge_tile % 8 == 0, "edge_tile must be a multiple of 8 (sublane slicing)"
    n = h.shape[0]
    num_edges = src.shape[0]
    e_pad = -(-num_edges // edge_tile) * edge_tile
    n_tiles = e_pad // edge_tile
    pad = e_pad - num_edges

    # int32 endpoint indices only (no E x N one-hot stream to HBM).  Padded edges get
    # index == n, so their in-kernel one-hot rows are all-zero (gather 0, scatter nothing).
    dst_p = jnp.pad(dst.astype(jnp.int32), (0, pad), constant_values=n)
    src_p = jnp.pad(src.astype(jnp.int32), (0, pad), constant_values=n)
    # per-tile stacked column: rows [0:TE] = dst tile, rows [TE:2TE] = src tile
    idx2 = jnp.stack([dst_p.reshape(n_tiles, edge_tile),
                      src_p.reshape(n_tiles, edge_tile)], axis=1).reshape(-1, 1)

    hx0 = jnp.concatenate([h, x], axis=-1)                       # (N, FD) packed [h | x]
    fused = _fuse_params(params)

    def layer_spec(w):
        # squeezed leading (layer) dim: the pipeline slices the layer's weights once,
        # instead of a dynamic w_ref[l] read in the hot tile body.
        return pl.BlockSpec((None,) + w.shape[1:], lambda l, e: (l, 0, 0))

    in_specs = ([pl.BlockSpec(memory_space=pl.ANY),                       # hx0 (HBM, one-shot copy)
                 pl.BlockSpec((2 * edge_tile, 1), lambda l, e: (e, 0))]   # [dst|src] index tiles
                + [layer_spec(w) for w in fused])

    # generation-aware scoped VMEM limit: ~96 MiB on v5e/v6e (128 MiB physical),
    # ~48 MiB on v7x (64 MiB physical).
    try:
        vmem_cap = int(pltpu.get_tpu_info().vmem_capacity_bytes)
    except Exception:
        vmem_cap = 64 * 1024 * 1024
    vmem_limit = min(vmem_cap * 3 // 4, 112 * 1024 * 1024)

    hx_out = pl.pallas_call(
        egnn_kernel,
        out_shape=jax.ShapeDtypeStruct((n, FD), jnp.float32),
        grid_spec=pltpu.PrefetchScalarGridSpec(
            num_scalar_prefetch=0,
            grid=(NUM_LAYERS, n_tiles),
            in_specs=in_specs,
            out_specs=pl.BlockSpec((n, FD), lambda l, e: (0, 0)),
            scratch_shapes=[pltpu.VMEM((n, FD), jnp.float32),    # node state [h | x]
                            pltpu.VMEM((n, FD), jnp.float32)],   # merged [agg_h | agg_x]
        ),
        compiler_params=pltpu.CompilerParams(
            dimension_semantics=("arbitrary", "arbitrary"),
            vmem_limit_bytes=vmem_limit),
    )(hx0, idx2, *fused)

    # readout (global mean pool + lin_pred): trivial epilogue kept in plain XLA so the
    # (G, N) pool operator never occupies VMEM during the grid.  Empty-graph safe.
    pool = jax.nn.one_hot(batch, num_graphs, dtype=jnp.float32).T           # (G, N)
    pool = pool / jnp.maximum(jnp.sum(pool, axis=1, keepdims=True), 1.0)
    h_graph = pool @ hx_out[:, :F]                                          # (G, F)
    return (h_graph @ params["wp"].reshape(F, 1) + params["bp"]).reshape(-1)


# --------------------------- pure-JAX reference ----------------------------
def e3egnn_reference(h, x, src, dst, batch, num_graphs, params):
    num_nodes = h.shape[0]
    for l in range(NUM_LAYERS):
        h_j, h_i = h[src], h[dst]
        x_j, x_i = x[src], x[dst]
        diff = x_j - x_i
        d2 = jnp.sum(diff * diff, axis=-1, keepdims=True)
        d = jnp.sqrt(d2)
        t = _silu(h_i @ params["w1i"][l] + h_j @ params["w1j"][l]
                  + d2 * params["w1d"][l] + params["b1"][l])
        m = _silu(t @ params["w2"][l] + params["b2"][l])
        attn = jax.nn.sigmoid(jnp.sum(m * params["wa"][l], -1, keepdims=True)
                              + params["ba"][l])
        msg_h = attn * m
        u = _silu(h_i @ params["wx1i"][l] + h_j @ params["wx1j"][l]
                  + d2 * params["wx1d"][l] + params["bx1"][l])
        u = _silu(u @ params["wx2"][l] + params["bx2"][l])
        scale = jnp.sum(u * params["wx3"][l], -1, keepdims=True) + params["bx3"][l]
        msg_x = (x_i - x_j) / (d + 1.0) * scale
        agg_h = jax.ops.segment_sum(msg_h, dst, num_segments=num_nodes)
        agg_x = jax.ops.segment_sum(msg_x, dst, num_segments=num_nodes)
        upd = _silu(h @ params["wu1h"][l] + agg_h @ params["wu1a"][l]
                    + params["bu1"][l])
        out_h = upd @ params["wu2"][l] + params["bu2"][l]
        h = h + out_h
        x = x + agg_x
    pool = jax.nn.one_hot(batch, num_graphs, dtype=jnp.float32).T
    pool = pool / jnp.maximum(jnp.sum(pool, axis=1, keepdims=True), 1.0)
    h_graph = pool @ h
    return (jnp.sum(h_graph * params["wp"], -1, keepdims=True)
            + params["bp"]).reshape(-1)


# --------------------------- deterministic init -----------------------------
def init_params(key):
    def u(key, fan_in, shape):
        s = 1.0 / jnp.sqrt(jnp.float32(fan_in))
        return jax.random.uniform(key, shape, jnp.float32, -s, s)

    shapes = {  # (shape, fan_in) ; weights stored in (in, out) layout
        "w1i": ((NUM_LAYERS, F, F), 2 * F + 1),
        "w1j": ((NUM_LAYERS, F, F), 2 * F + 1),
        "w1d": ((NUM_LAYERS, 1, F), 2 * F + 1),
        "b1":  ((NUM_LAYERS, 1, F), 2 * F + 1),
        "w2":  ((NUM_LAYERS, F, F), F),
        "b2":  ((NUM_LAYERS, 1, F), F),
        "wa":  ((NUM_LAYERS, 1, F), F),
        "ba":  ((NUM_LAYERS, 1, 1), F),
        "wu1h": ((NUM_LAYERS, F, F), 2 * F),
        "wu1a": ((NUM_LAYERS, F, F), 2 * F),
        "bu1": ((NUM_LAYERS, 1, F), 2 * F),
        "wu2": ((NUM_LAYERS, F, F), F),
        "bu2": ((NUM_LAYERS, 1, F), F),
        "wx1i": ((NUM_LAYERS, F, F), 2 * F + 1),
        "wx1j": ((NUM_LAYERS, F, F), 2 * F + 1),
        "wx1d": ((NUM_LAYERS, 1, F), 2 * F + 1),
        "bx1": ((NUM_LAYERS, 1, F), 2 * F + 1),
        "wx2": ((NUM_LAYERS, F, F), F),
        "bx2": ((NUM_LAYERS, 1, F), F),
        "wx3": ((NUM_LAYERS, 1, F), F),
        "bx3": ((NUM_LAYERS, 1, 1), F),
        "wp":  ((1, F), F),
        "bp":  ((1, 1), F),
    }
    keys = jax.random.split(key, len(PARAM_ORDER))
    return {name: u(k, shapes[name][1], shapes[name][0])
            for name, k in zip(PARAM_ORDER, keys)}


if __name__ == "__main__":
    key = jax.random.PRNGKey(0)
    k_h, k_x, k_e1, k_e2, k_p = jax.random.split(key, 5)

    # small synthetic batch: 4 graphs x 16 nodes, 24 intra-graph edges each
    num_graphs = 4
    nodes_per_graph = 16
    edges_per_graph = 24
    n = num_graphs * nodes_per_graph              # 64 nodes
    num_edges = num_graphs * edges_per_graph      # 96 edges (padded to 256 internally)

    h0 = jax.random.normal(k_h, (n, F), jnp.float32)     # data.x
    x0 = jax.random.normal(k_x, (n, D), jnp.float32)     # data.pos
    src_local = jax.random.randint(k_e1, (num_graphs, edges_per_graph), 0, nodes_per_graph)
    dst_local = jax.random.randint(k_e2, (num_graphs, edges_per_graph), 0, nodes_per_graph)
    offsets = (jnp.arange(num_graphs) * nodes_per_graph)[:, None]
    src = (src_local + offsets).reshape(-1)              # edge_index[0]
    dst = (dst_local + offsets).reshape(-1)              # edge_index[1]
    batch = jnp.repeat(jnp.arange(num_graphs), nodes_per_graph)   # data.batch

    params = init_params(k_p)

    out = e3egnn_forward(h0, x0, src, dst, batch, params, num_graphs=num_graphs)
    out = jax.block_until_ready(out)

    ref = e3egnn_reference(h0, x0, src, dst, batch, num_graphs, params)
    assert out.shape == (num_graphs,)
    assert jnp.allclose(out, ref, atol=1e-3, rtol=1e-3), (out, ref)

    print("KERNEL_OK")
</pallas_src>

<mosaic_0001>
module attributes {stable_mosaic.version = 11 : i64} {
  func.func @egnn_kernel(%arg0: i32, %arg1: i32, %arg2: memref<64x14xf32, #tpu.memory_space<any>>, %arg3: memref<512x1xi32, #tpu.memory_space<vmem>>, %arg4: memref<1x14x22xf32, #tpu.memory_space<vmem>>, %arg5: memref<1x14x22xf32, #tpu.memory_space<vmem>>, %arg6: memref<1x1x22xf32, #tpu.memory_space<vmem>>, %arg7: memref<1x1x22xf32, #tpu.memory_space<vmem>>, %arg8: memref<1x22x22xf32, #tpu.memory_space<vmem>>, %arg9: memref<1x1x22xf32, #tpu.memory_space<vmem>>, %arg10: memref<1x22x1xf32, #tpu.memory_space<vmem>>, %arg11: memref<1x1x1xf32, #tpu.memory_space<vmem>>, %arg12: memref<1x22x1xf32, #tpu.memory_space<vmem>>, %arg13: memref<1x1x1xf32, #tpu.memory_space<vmem>>, %arg14: memref<1x14x11xf32, #tpu.memory_space<vmem>>, %arg15: memref<1x14x11xf32, #tpu.memory_space<vmem>>, %arg16: memref<1x1x11xf32, #tpu.memory_space<vmem>>, %arg17: memref<1x11x14xf32, #tpu.memory_space<vmem>>, %arg18: memref<1x1x14xf32, #tpu.memory_space<vmem>>, %arg19: memref<64x14xf32, #tpu.memory_space<vmem>>, %arg20: memref<64x14xf32, #tpu.memory_space<vmem>>, %arg21: memref<64x14xf32, #tpu.memory_space<vmem>>) attributes {dimension_semantics = [#tpu.dimension_semantics<arbitrary>, #tpu.dimension_semantics<arbitrary>], iteration_bounds = array<i64: 4, 1>, scalar_prefetch = 0 : i64, scratch_operands = 2 : i64, tpu.core_type = #tpu.core_type<tc>, window_params = [{}, {transform_indices = @transform_1, window_bounds = array<i64: 512, 1>}, {transform_indices = @transform_2, window_bounds = array<i64: 1, 14, 22>}, {transform_indices = @transform_3, window_bounds = array<i64: 1, 14, 22>}, {transform_indices = @transform_4, window_bounds = array<i64: 1, 1, 22>}, {transform_indices = @transform_5, window_bounds = array<i64: 1, 1, 22>}, {transform_indices = @transform_6, window_bounds = array<i64: 1, 22, 22>}, {transform_indices = @transform_7, window_bounds = array<i64: 1, 1, 22>}, {transform_indices = @transform_8, window_bounds = array<i64: 1, 22, 1>}, {transform_indices = @transform_9, window_bounds = array<i64: 1, 1, 1>}, {transform_indices = @transform_10, window_bounds = array<i64: 1, 22, 1>}, {transform_indices = @transform_11, window_bounds = array<i64: 1, 1, 1>}, {transform_indices = @transform_12, window_bounds = array<i64: 1, 14, 11>}, {transform_indices = @transform_13, window_bounds = array<i64: 1, 14, 11>}, {transform_indices = @transform_14, window_bounds = array<i64: 1, 1, 11>}, {transform_indices = @transform_15, window_bounds = array<i64: 1, 11, 14>}, {transform_indices = @transform_16, window_bounds = array<i64: 1, 1, 14>}, {pipeline_mode = #tpu.pipeline_mode<synchronous>, transform_indices = @transform_17, window_bounds = array<i64: 64, 14>}]} {
    %c0_i32 = arith.constant 0 : i32
    %0 = arith.cmpi eq, %arg0, %c0_i32 : i32
    %c0_i32_0 = arith.constant 0 : i32
    %1 = arith.cmpi eq, %arg1, %c0_i32_0 : i32
    %2 = arith.andi %0, %1 : i1
    %3 = arith.extui %2 : i1 to i32
    %c0_i32_1 = arith.constant 0 : i32
    %4 = arith.cmpi ne, %3, %c0_i32_1 : i32
    scf.if %4 {
      "tpu.region"() ({
        %111 = tpu.sem_alloc : memref<!tpu.dma_semaphore, #tpu.memory_space<semaphore_mem>>
        tpu.enqueue_dma source(%arg2 : memref<64x14xf32, #tpu.memory_space<any>>) target(%arg20 : memref<64x14xf32, #tpu.memory_space<vmem>>) target_semaphore(%111 : memref<!tpu.dma_semaphore, #tpu.memory_space<semaphore_mem>>)
        tpu.wait_dma2 semaphore(%111 : memref<!tpu.dma_semaphore, #tpu.memory_space<semaphore_mem>>) src(%arg2 : memref<64x14xf32, #tpu.memory_space<any>>) dst(%arg20 : memref<64x14xf32, #tpu.memory_space<vmem>>)
        tpu.yield
      }) : () -> ()
    } else {
    }
    %c0_i32_2 = arith.constant 0 : i32
    %5 = arith.cmpi eq, %arg1, %c0_i32_2 : i32
    %6 = arith.extui %5 : i1 to i32
    %c0_i32_3 = arith.constant 0 : i32
    %7 = arith.cmpi ne, %6, %c0_i32_3 : i32
    scf.if %7 {
      %cst_57 = arith.constant 0.000000e+00 : f32
      %111 = vector.broadcast %cst_57 : f32 to vector<64x14xf32>
      %c0_58 = arith.constant 0 : index
      %c0_59 = arith.constant 0 : index
      %112 = vector.load %arg21[%c0_58, %c0_59] : memref<64x14xf32, #tpu.memory_space<vmem>>, vector<64x14xf32>
      tpu.vector_store %arg21[%c0_58, %c0_59], %111 {strides = array<i32>} : memref<64x14xf32, #tpu.memory_space<vmem>>, vector<64x14xf32>,
    } else {
    }
    %8 = tpu.iota {dimensions = array<i32: 1>} : vector<1x14xi32>
    %c11_i32 = arith.constant 11 : i32
    %9 = vector.broadcast %c11_i32 : i32 to vector<1x14xi32>
    %10 = arith.cmpi sge, %8, %9 : vector<1x14xi32>
    %11 = arith.extui %10 : vector<1x14xi1> to vector<1x14xi32>
    %12 = arith.sitofp %11 : vector<1x14xi32> to vector<1x14xf32>
    %cst = arith.constant 1.000000e+00 : f32
    %13 = vector.broadcast %cst : f32 to vector<1x14xf32>
    %14 = arith.subf %13, %12 : vector<1x14xf32>
    %c0 = arith.constant 0 : index
    %c0_4 = arith.constant 0 : index
    %15 = vector.load %arg3[%c0, %c0_4] : memref<512x1xi32, #tpu.memory_space<vmem>>, vector<512x1xi32>
    %16 = tpu.iota {dimensions = array<i32: 1>} : vector<512x64xi32>
    %17 = vector.broadcast %15 : vector<512x1xi32> to vector<512x64xi32>
    %18 = arith.cmpi eq, %16, %17 : vector<512x64xi32>
    %19 = arith.extui %18 : vector<512x64xi1> to vector<512x64xi32>
    %20 = arith.sitofp %19 : vector<512x64xi32> to vector<512x64xf32>
    %c0_5 = arith.constant 0 : index
    %c0_6 = arith.constant 0 : index
    %21 = vector.load %arg20[%c0_5, %c0_6] : memref<64x14xf32, #tpu.memory_space<vmem>>, vector<64x14xf32>
    %cst_7 = arith.constant dense<0.000000e+00> : vector<512x14xf32>
    %22 = tpu.matmul %20, %21, %cst_7 {dimension_numbers = #tpu.dot_dimension_numbers<[1], [0], [0], [1], [0, 0, 1, 1], [], []>} : vector<512x64xf32>, vector<64x14xf32>, vector<512x14xf32> -> vector<512x14xf32>
    %23 = vector.extract_strided_slice %22 {offsets = [0, 0], sizes = [256, 14], strides = [1, 1]} : vector<512x14xf32> to vector<256x14xf32>
    %24 = vector.extract_strided_slice %22 {offsets = [256, 0], sizes = [256, 14], strides = [1, 1]} : vector<512x14xf32> to vector<256x14xf32>
    %25 = arith.subf %23, %24 : vector<256x14xf32>
    %26 = vector.broadcast %12 : vector<1x14xf32> to vector<256x14xf32>
    %27 = arith.mulf %25, %26 : vector<256x14xf32>
    %28 = arith.mulf %27, %27 : vector<256x14xf32>
    %cst_8 = arith.constant dense<0.000000e+00> : vector<256xf32>
    %29 = vector.multi_reduction <add>, %28, %cst_8 [1] : vector<256x14xf32> to vector<256xf32>
    %30 = vector.shape_cast %29 : vector<256xf32> to vector<256x1xf32>
    %31 = math.sqrt %30 : vector<256x1xf32>
    %c0_9 = arith.constant 0 : index
    %c0_10 = arith.constant 0 : index
    %c0_11 = arith.constant 0 : index
    %32 = vector.load %arg4[%c0_9, %c0_10, %c0_11] : memref<1x14x22xf32, #tpu.memory_space<vmem>>, vector<1x14x22xf32>
    %33 = vector.shape_cast %32 : vector<1x14x22xf32> to vector<14x22xf32>
    %cst_12 = arith.constant dense<0.000000e+00> : vector<256x22xf32>
    %34 = tpu.matmul %23, %33, %cst_12 {dimension_numbers = #tpu.dot_dimension_numbers<[1], [0], [0], [1], [0, 0, 1, 1], [], []>} : vector<256x14xf32>, vector<14x22xf32>, vector<256x22xf32> -> vector<256x22xf32>
    %c0_13 = arith.constant 0 : index
    %c0_14 = arith.constant 0 : index
    %c0_15 = arith.constant 0 : index
    %35 = vector.load %arg5[%c0_13, %c0_14, %c0_15] : memref<1x14x22xf32, #tpu.memory_space<vmem>>, vector<1x14x22xf32>
    %36 = vector.shape_cast %35 : vector<1x14x22xf32> to vector<14x22xf32>
    %cst_16 = arith.constant dense<0.000000e+00> : vector<256x22xf32>
    %37 = tpu.matmul %24, %36, %cst_16 {dimension_numbers = #tpu.dot_dimension_numbers<[1], [0], [0], [1], [0, 0, 1, 1], [], []>} : vector<256x14xf32>, vector<14x22xf32>, vector<256x22xf32> -> vector<256x22xf32>
    %38 = arith.addf %34, %37 : vector<256x22xf32>
    %c0_17 = arith.constant 0 : index
    %c0_18 = arith.constant 0 : index
    %c0_19 = arith.constant 0 : index
    %39 = vector.load %arg6[%c0_17, %c0_18, %c0_19] : memref<1x1x22xf32, #tpu.memory_space<vmem>>, vector<1x1x22xf32>
    %40 = vector.shape_cast %39 : vector<1x1x22xf32> to vector<1x22xf32>
    %41 = vector.broadcast %30 : vector<256x1xf32> to vector<256x22xf32>
    %42 = vector.broadcast %40 : vector<1x22xf32> to vector<256x22xf32>
    %43 = arith.mulf %41, %42 : vector<256x22xf32>
    %44 = arith.addf %38, %43 : vector<256x22xf32>
    %c0_20 = arith.constant 0 : index
    %c0_21 = arith.constant 0 : index
    %c0_22 = arith.constant 0 : index
    %45 = vector.load %arg7[%c0_20, %c0_21, %c0_22] : memref<1x1x22xf32, #tpu.memory_space<vmem>>, vector<1x1x22xf32>
    %46 = vector.shape_cast %45 : vector<1x1x22xf32> to vector<1x22xf32>
    %47 = vector.broadcast %46 : vector<1x22xf32> to vector<256x22xf32>
    %48 = arith.addf %44, %47 : vector<256x22xf32>
    %49 = arith.negf %48 : vector<256x22xf32>
    %50 = math.exp %49 : vector<256x22xf32>
    %cst_23 = arith.constant 1.000000e+00 : f32
    %51 = vector.broadcast %cst_23 : f32 to vector<256x22xf32>
    %52 = arith.addf %51, %50 : vector<256x22xf32>
    %53 = arith.divf %51, %52 : vector<256x22xf32>
    %54 = arith.mulf %48, %53 : vector<256x22xf32>
    %c0_24 = arith.constant 0 : index
    %c0_25 = arith.constant 0 : index
    %c0_26 = arith.constant 0 : index
    %55 = vector.load %arg8[%c0_24, %c0_25, %c0_26] : memref<1x22x22xf32, #tpu.memory_space<vmem>>, vector<1x22x22xf32>
    %56 = vector.shape_cast %55 : vector<1x22x22xf32> to vector<22x22xf32>
    %cst_27 = arith.constant dense<0.000000e+00> : vector<256x22xf32>
    %57 = tpu.matmul %54, %56, %cst_27 {dimension_numbers = #tpu.dot_dimension_numbers<[1], [0], [0], [1], [0, 0, 1, 1], [], []>} : vector<256x22xf32>, vector<22x22xf32>, vector<256x22xf32> -> vector<256x22xf32>
    %c0_28 = arith.constant 0 : index
    %c0_29 = arith.constant 0 : index
    %c0_30 = arith.constant 0 : index
    %58 = vector.load %arg9[%c0_28, %c0_29, %c0_30] : memref<1x1x22xf32, #tpu.memory_space<vmem>>, vector<1x1x22xf32>
    %59 = vector.shape_cast %58 : vector<1x1x22xf32> to vector<1x22xf32>
    %60 = vector.broadcast %59 : vector<1x22xf32> to vector<256x22xf32>
    %61 = arith.addf %57, %60 : vector<256x22xf32>
    %62 = arith.negf %61 : vector<256x22xf32>
    %63 = math.exp %62 : vector<256x22xf32>
    %cst_31 = arith.constant 1.000000e+00 : f32
    %64 = vector.broadcast %cst_31 : f32 to vector<256x22xf32>
    %65 = arith.addf %64, %63 : vector<256x22xf32>
    %66 = arith.divf %64, %65 : vector<256x22xf32>
    %67 = arith.mulf %61, %66 : vector<256x22xf32>
    %c0_32 = arith.constant 0 : index
    %c0_33 = arith.constant 0 : index
    %c0_34 = arith.constant 0 : index
    %68 = vector.load %arg10[%c0_32, %c0_33, %c0_34] : memref<1x22x1xf32, #tpu.memory_space<vmem>>, vector<1x22x1xf32>
    %69 = vector.shape_cast %68 : vector<1x22x1xf32> to vector<22x1xf32>
    %cst_35 = arith.constant dense<0.000000e+00> : vector<256x1xf32>
    %70 = tpu.matmul %67, %69, %cst_35 {dimension_numbers = #tpu.dot_dimension_numbers<[1], [0], [0], [1], [0, 0, 1, 1], [], []>} : vector<256x22xf32>, vector<22x1xf32>, vector<256x1xf32> -> vector<256x1xf32>
    %c0_36 = arith.constant 0 : index
    %c0_37 = arith.constant 0 : index
    %c0_38 = arith.constant 0 : index
    %71 = vector.load %arg11[%c0_36, %c0_37, %c0_38] : memref<1x1x1xf32, #tpu.memory_space<vmem>>, vector<1x1x1xf32>
    %72 = vector.shape_cast %71 : vector<1x1x1xf32> to vector<1x1xf32>
    %73 = vector.broadcast %72 : vector<1x1xf32> to vector<256x1xf32>
    %74 = arith.addf %70, %73 : vector<256x1xf32>
    %75 = arith.negf %74 : vector<256x1xf32>
    %76 = math.exp %75 : vector<256x1xf32>
    %cst_39 = arith.constant 1.000000e+00 : f32
    %77 = vector.broadcast %cst_39 : f32 to vector<256x1xf32>
    %78 = arith.addf %77, %76 : vector<256x1xf32>
    %79 = arith.divf %77, %78 : vector<256x1xf32>
    %c0_40 = arith.constant 0 : index
    %c0_41 = arith.constant 0 : index
    %c0_42 = arith.constant 0 : index
    %80 = vector.load %arg12[%c0_40, %c0_41, %c0_42] : memref<1x22x1xf32, #tpu.memory_space<vmem>>, vector<1x22x1xf32>
    %81 = vector.shape_cast %80 : vector<1x22x1xf32> to vector<22x1xf32>
    %cst_43 = arith.constant dense<0.000000e+00> : vector<256x1xf32>
    %82 = tpu.matmul %67, %81, %cst_43 {dimension_numbers = #tpu.dot_dimension_numbers<[1], [0], [0], [1], [0, 0, 1, 1], [], []>} : vector<256x22xf32>, vector<22x1xf32>, vector<256x1xf32> -> vector<256x1xf32>
    %c0_44 = arith.constant 0 : index
    %c0_45 = arith.constant 0 : index
    %c0_46 = arith.constant 0 : index
    %83 = vector.load %arg13[%c0_44, %c0_45, %c0_46] : memref<1x1x1xf32, #tpu.memory_space<vmem>>, vector<1x1x1xf32>
    %84 = vector.shape_cast %83 : vector<1x1x1xf32> to vector<1x1xf32>
    %85 = vector.broadcast %84 : vector<1x1xf32> to vector<256x1xf32>
    %86 = arith.addf %82, %85 : vector<256x1xf32>
    %87 = vector.broadcast %79 : vector<256x1xf32> to vector<256x22xf32>
    %88 = arith.mulf %87, %67 : vector<256x22xf32>
    %89 = vector.extract_strided_slice %88 {offsets = [0, 0], sizes = [256, 14], strides = [1, 1]} : vector<256x22xf32> to vector<256x14xf32>
    %90 = vector.broadcast %14 : vector<1x14xf32> to vector<256x14xf32>
    %91 = arith.mulf %89, %90 : vector<256x14xf32>
    %cst_47 = arith.constant 1.000000e+00 : f32
    %92 = vector.broadcast %cst_47 : f32 to vector<256x1xf32>
    %93 = arith.addf %31, %92 : vector<256x1xf32>
    %94 = arith.divf %86, %93 : vector<256x1xf32>
    %95 = vector.broadcast %94 : vector<256x1xf32> to vector<256x14xf32>
    %96 = arith.mulf %27, %95 : vector<256x14xf32>
    %97 = arith.addf %91, %96 : vector<256x14xf32>
    %c0_48 = arith.constant 0 : index
    %c0_49 = arith.constant 0 : index
    %98 = vector.load %arg21[%c0_48, %c0_49] : memref<64x14xf32, #tpu.memory_space<vmem>>, vector<64x14xf32>
    %99 = vector.extract_strided_slice %20 {offsets = [0, 0], sizes = [256, 64], strides = [1, 1]} : vector<512x64xf32> to vector<256x64xf32>
    %cst_50 = arith.constant dense<0.000000e+00> : vector<64x14xf32>
    %100 = tpu.matmul %99, %97, %cst_50 {dimension_numbers = #tpu.dot_dimension_numbers<[0], [0], [1], [1], [0, 1, 1, 1], [], []>} : vector<256x64xf32>, vector<256x14xf32>, vector<64x14xf32> -> vector<64x14xf32>
    %101 = arith.addf %98, %100 : vector<64x14xf32>
    %c0_51 = arith.constant 0 : index
    %c0_52 = arith.constant 0 : index
    %102 = vector.load %arg21[%c0_51, %c0_52] : memref<64x14xf32, #tpu.memory_space<vmem>>, vector<64x14xf32>
    tpu.vector_store %arg21[%c0_51, %c0_52], %101 {strides = array<i32>} : memref<64x14xf32, #tpu.memory_space<vmem>>, vector<64x14xf32>,
    %c0_i32_53 = arith.constant 0 : i32
    %103 = arith.cmpi eq, %arg1, %c0_i32_53 : i32
    %104 = arith.extui %103 : i1 to i32
    %c0_i32_54 = arith.constant 0 : i32
    %105 = arith.cmpi ne, %104, %c0_i32_54 : i32
    scf.if %105 {
      %c0_57 = arith.constant 0 : index
      %c0_58 = arith.constant 0 : index
      %111 = vector.load %arg20[%c0_57, %c0_58] : memref<64x14xf32, #tpu.memory_space<vmem>>, vector<64x14xf32>
      %c0_59 = arith.constant 0 : index
      %c0_60 = arith.constant 0 : index
      %112 = vector.load %arg21[%c0_59, %c0_60] : memref<64x14xf32, #tpu.memory_space<vmem>>, vector<64x14xf32>
      %c0_61 = arith.constant 0 : index
      %c0_62 = arith.constant 0 : index
      %c0_63 = arith.constant 0 : index
      %113 = vector.load %arg14[%c0_61, %c0_62, %c0_63] : memref<1x14x11xf32, #tpu.memory_space<vmem>>, vector<1x14x11xf32>
      %114 = vector.shape_cast %113 : vector<1x14x11xf32> to vector<14x11xf32>
      %cst_64 = arith.constant dense<0.000000e+00> : vector<64x11xf32>
      %115 = tpu.matmul %111, %114, %cst_64 {dimension_numbers = #tpu.dot_dimension_numbers<[1], [0], [0], [1], [0, 0, 1, 1], [], []>} : vector<64x14xf32>, vector<14x11xf32>, vector<64x11xf32> -> vector<64x11xf32>
      %c0_65 = arith.constant 0 : index
      %c0_66 = arith.constant 0 : index
      %c0_67 = arith.constant 0 : index
      %116 = vector.load %arg15[%c0_65, %c0_66, %c0_67] : memref<1x14x11xf32, #tpu.memory_space<vmem>>, vector<1x14x11xf32>
      %117 = vector.shape_cast %116 : vector<1x14x11xf32> to vector<14x11xf32>
      %cst_68 = arith.constant dense<0.000000e+00> : vector<64x11xf32>
      %118 = tpu.matmul %112, %117, %cst_68 {dimension_numbers = #tpu.dot_dimension_numbers<[1], [0], [0], [1], [0, 0, 1, 1], [], []>} : vector<64x14xf32>, vector<14x11xf32>, vector<64x11xf32> -> vector<64x11xf32>
      %119 = arith.addf %115, %118 : vector<64x11xf32>
      %c0_69 = arith.constant 0 : index
      %c0_70 = arith.constant 0 : index
      %c0_71 = arith.constant 0 : index
      %120 = vector.load %arg16[%c0_69, %c0_70, %c0_71] : memref<1x1x11xf32, #tpu.memory_space<vmem>>, vector<1x1x11xf32>
      %121 = vector.shape_cast %120 : vector<1x1x11xf32> to vector<1x11xf32>
      %122 = vector.broadcast %121 : vector<1x11xf32> to vector<64x11xf32>
      %123 = arith.addf %119, %122 : vector<64x11xf32>
      %124 = arith.negf %123 : vector<64x11xf32>
      %125 = math.exp %124 : vector<64x11xf32>
      %cst_72 = arith.constant 1.000000e+00 : f32
      %126 = vector.broadcast %cst_72 : f32 to vector<64x11xf32>
      %127 = arith.addf %126, %125 : vector<64x11xf32>
      %128 = arith.divf %126, %127 : vector<64x11xf32>
      %129 = arith.mulf %123, %128 : vector<64x11xf32>
      %c0_73 = arith.constant 0 : index
      %c0_74 = arith.constant 0 : index
      %c0_75 = arith.constant 0 : index
      %130 = vector.load %arg17[%c0_73, %c0_74, %c0_75] : memref<1x11x14xf32, #tpu.memory_space<vmem>>, vector<1x11x14xf32>
      %131 = vector.shape_cast %130 : vector<1x11x14xf32> to vector<11x14xf32>
      %cst_76 = arith.constant dense<0.000000e+00> : vector<64x14xf32>
      %132 = tpu.matmul %129, %131, %cst_76 {dimension_numbers = #tpu.dot_dimension_numbers<[1], [0], [0], [1], [0, 0, 1, 1], [], []>} : vector<64x11xf32>, vector<11x14xf32>, vector<64x14xf32> -> vector<64x14xf32>
      %133 = arith.addf %111, %132 : vector<64x14xf32>
      %c0_77 = arith.constant 0 : index
      %c0_78 = arith.constant 0 : index
      %c0_79 = arith.constant 0 : index
      %134 = vector.load %arg18[%c0_77, %c0_78, %c0_79] : memref<1x1x14xf32, #tpu.memory_space<vmem>>, vector<1x1x14xf32>
      %135 = vector.shape_cast %134 : vector<1x1x14xf32> to vector<1x14xf32>
      %136 = vector.broadcast %135 : vector<1x14xf32> to vector<64x14xf32>
      %137 = arith.addf %133, %136 : vector<64x14xf32>
      %138 = vector.broadcast %12 : vector<1x14xf32> to vector<64x14xf32>
      %139 = arith.mulf %112, %138 : vector<64x14xf32>
      %140 = arith.addf %137, %139 : vector<64x14xf32>
      %c0_80 = arith.constant 0 : index
      %c0_81 = arith.constant 0 : index
      %141 = vector.load %arg20[%c0_80, %c0_81] : memref<64x14xf32, #tpu.memory_space<vmem>>, vector<64x14xf32>
      tpu.vector_store %arg20[%c0_80, %c0_81], %140 {strides = array<i32>} : memref<64x14xf32, #tpu.memory_space<vmem>>, vector<64x14xf32>,
    } else {
    }
    %c3_i32 = arith.constant 3 : i32
    %106 = arith.cmpi eq, %arg0, %c3_i32 : i32
    %c0_i32_55 = arith.constant 0 : i32
    %107 = arith.cmpi eq, %arg1, %c0_i32_55 : i32
    %108 = arith.andi %106, %107 : i1
    %109 = arith.extui %108 : i1 to i32
    %c0_i32_56 = arith.constant 0 : i32
    %110 = arith.cmpi ne, %109, %c0_i32_56 : i32
    scf.if %110 {
      %c0_57 = arith.constant 0 : index
      %c0_58 = arith.constant 0 : index
      %111 = vector.load %arg20[%c0_57, %c0_58] : memref<64x14xf32, #tpu.memory_space<vmem>>, vector<64x14xf32>
      %c0_59 = arith.constant 0 : index
      %c0_60 = arith.constant 0 : index
      %112 = vector.load %arg19[%c0_59, %c0_60] : memref<64x14xf32, #tpu.memory_space<vmem>>, vector<64x14xf32>
      tpu.vector_store %arg19[%c0_59, %c0_60], %111 {strides = array<i32>} : memref<64x14xf32, #tpu.memory_space<vmem>>, vector<64x14xf32>,
    } else {
    }
    return
  }
  func.func @transform_1(%arg0: i32, %arg1: i32) -> (i32, i32) {
    %c0_i32 = arith.constant 0 : i32
    %c0_i32_0 = arith.constant 0 : i32
    return %arg1, %c0_i32 : i32, i32
  }
  func.func @transform_2(%arg0: i32, %arg1: i32) -> (i32, i32, i32) {
    %c0_i32 = arith.constant 0 : i32
    %c0_i32_0 = arith.constant 0 : i32
    %c0_i32_1 = arith.constant 0 : i32
    return %arg0, %c0_i32, %c0_i32_0 : i32, i32, i32
  }
  func.func @transform_3(%arg0: i32, %arg1: i32) -> (i32, i32, i32) {
    %c0_i32 = arith.constant 0 : i32
    %c0_i32_0 = arith.constant 0 : i32
    %c0_i32_1 = arith.constant 0 : i32
    return %arg0, %c0_i32, %c0_i32_0 : i32, i32, i32
  }
  func.func @transform_4(%arg0: i32, %arg1: i32) -> (i32, i32, i32) {
    %c0_i32 = arith.constant 0 : i32
    %c0_i32_0 = arith.constant 0 : i32
    %c0_i32_1 = arith.constant 0 : i32
    return %arg0, %c0_i32, %c0_i32_0 : i32, i32, i32
  }
  func.func @transform_5(%arg0: i32, %arg1: i32) -> (i32, i32, i32) {
    %c0_i32 = arith.constant 0 : i32
    %c0_i32_0 = arith.constant 0 : i32
    %c0_i32_1 = arith.constant 0 : i32
    return %arg0, %c0_i32, %c0_i32_0 : i32, i32, i32
  }
  func.func @transform_6(%arg0: i32, %arg1: i32) -> (i32, i32, i32) {
    %c0_i32 = arith.constant 0 : i32
    %c0_i32_0 = arith.constant 0 : i32
    %c0_i32_1 = arith.constant 0 : i32
    return %arg0, %c0_i32, %c0_i32_0 : i32, i32, i32
  }
  func.func @transform_7(%arg0: i32, %arg1: i32) -> (i32, i32, i32) {
    %c0_i32 = arith.constant 0 : i32
    %c0_i32_0 = arith.constant 0 : i32
    %c0_i32_1 = arith.constant 0 : i32
    return %arg0, %c0_i32, %c0_i32_0 : i32, i32, i32
  }
  func.func @transform_8(%arg0: i32, %arg1: i32) -> (i32, i32, i32) {
    %c0_i32 = arith.constant 0 : i32
    %c0_i32_0 = arith.constant 0 : i32
    %c0_i32_1 = arith.constant 0 : i32
    return %arg0, %c0_i32, %c0_i32_0 : i32, i32, i32
  }
  func.func @transform_9(%arg0: i32, %arg1: i32) -> (i32, i32, i32) {
    %c0_i32 = arith.constant 0 : i32
    %c0_i32_0 = arith.constant 0 : i32
    %c0_i32_1 = arith.constant 0 : i32
    return %arg0, %c0_i32, %c0_i32_0 : i32, i32, i32
  }
  func.func @transform_10(%arg0: i32, %arg1: i32) -> (i32, i32, i32) {
    %c0_i32 = arith.constant 0 : i32
    %c0_i32_0 = arith.constant 0 : i32
    %c0_i32_1 = arith.constant 0 : i32
    return %arg0, %c0_i32, %c0_i32_0 : i32, i32, i32
  }
  func.func @transform_11(%arg0: i32, %arg1: i32) -> (i32, i32, i32) {
    %c0_i32 = arith.constant 0 : i32
    %c0_i32_0 = arith.constant 0 : i32
    %c0_i32_1 = arith.constant 0 : i32
    return %arg0, %c0_i32, %c0_i32_0 : i32, i32, i32
  }
  func.func @transform_12(%arg0: i32, %arg1: i32) -> (i32, i32, i32) {
    %c0_i32 = arith.constant 0 : i32
    %c0_i32_0 = arith.constant 0 : i32
    %c0_i32_1 = arith.constant 0 : i32
    return %arg0, %c0_i32, %c0_i32_0 : i32, i32, i32
  }
  func.func @transform_13(%arg0: i32, %arg1: i32) -> (i32, i32, i32) {
    %c0_i32 = arith.constant 0 : i32
    %c0_i32_0 = arith.constant 0 : i32
    %c0_i32_1 = arith.constant 0 : i32
    return %arg0, %c0_i32, %c0_i32_0 : i32, i32, i32
  }
  func.func @transform_14(%arg0: i32, %arg1: i32) -> (i32, i32, i32) {
    %c0_i32 = arith.constant 0 : i32
    %c0_i32_0 = arith.constant 0 : i32
    %c0_i32_1 = arith.constant 0 : i32
    return %arg0, %c0_i32, %c0_i32_0 : i32, i32, i32
  }
  func.func @transform_15(%arg0: i32, %arg1: i32) -> (i32, i32, i32) {
    %c0_i32 = arith.constant 0 : i32
    %c0_i32_0 = arith.constant 0 : i32
    %c0_i32_1 = arith.constant 0 : i32
    return %arg0, %c0_i32, %c0_i32_0 : i32, i32, i32
  }
  func.func @transform_16(%arg0: i32, %arg1: i32) -> (i32, i32, i32) {
    %c0_i32 = arith.constant 0 : i32
    %c0_i32_0 = arith.constant 0 : i32
    %c0_i32_1 = arith.constant 0 : i32
    return %arg0, %c0_i32, %c0_i32_0 : i32, i32, i32
  }
  func.func @transform_17(%arg0: i32, %arg1: i32) -> (i32, i32) {
    %c0_i32 = arith.constant 0 : i32
    %c0_i32_0 = arith.constant 0 : i32
    %c0_i32_1 = arith.constant 0 : i32
    return %c0_i32, %c0_i32_0 : i32, i32
  }
}

</mosaic_0001>

<llo_original>
// kernel: e3egnn_forward.1
$region0: #{e3egnn_forward.1}
  #allocation0 [shape = 'u32[]', space=smem, size = 0x4, offset = 0x4, fixed_abs, tag = 'smem constant byte address 0x4 - core index']
  #allocation1 [shape = 'u32[144,128]{1,0:T(1,128)}', space=vmem, size = 0x12000, scoped, tag = 'internal scratch']
  #allocation2 [shape = 'f32[64,14]{1,0:T(8,128)}', space=vmem, size = 0x8000, scoped, tag = 'scratch operand']
  #allocation3 [shape = 'f32[64,14]{1,0:T(8,128)}', space=vmem, size = 0x8000, scoped, tag = 'scratch operand']
  #allocation5 [shape = 's32[]', space=sflag, size = 0x4, offset = 0, fixed_abs, tag = 'sflag constant byte address 0x0 - dummy sync flag']
  %s0 = inlined_call_operand.vmem [shape: f32[64,14], index: 0, kind: input, shape index: {}]
  %s1 = inlined_call_operand.vmem [shape: s32[512,1], index: 1, kind: input, shape index: {}]
  %s2 = inlined_call_operand.vmem [shape: f32[4,14,22], index: 2, kind: input, shape index: {}]
  %s3 = inlined_call_operand.vmem [shape: f32[4,14,22], index: 3, kind: input, shape index: {}]
  %s4 = inlined_call_operand.vmem [shape: f32[4,1,22], index: 4, kind: input, shape index: {}]
  %s5 = inlined_call_operand.vmem [shape: f32[4,1,22], index: 5, kind: input, shape index: {}]
  %s6 = inlined_call_operand.vmem [shape: f32[4,22,22], index: 6, kind: input, shape index: {}]
  %s7 = inlined_call_operand.vmem [shape: f32[4,1,22], index: 7, kind: input, shape index: {}]
  %s8 = inlined_call_operand.vmem [shape: f32[4,22,1], index: 8, kind: input, shape index: {}]
  %s9 = inlined_call_operand.vmem [shape: f32[4,1,1], index: 9, kind: input, shape index: {}]
  %s10 = inlined_call_operand.vmem [shape: f32[4,22,1], index: 10, kind: input, shape index: {}]
  %s11 = inlined_call_operand.vmem [shape: f32[4,1,1], index: 11, kind: input, shape index: {}]
  %s12 = inlined_call_operand.vmem [shape: f32[4,14,11], index: 12, kind: input, shape index: {}]
  %s13 = inlined_call_operand.vmem [shape: f32[4,14,11], index: 13, kind: input, shape index: {}]
  %s14 = inlined_call_operand.vmem [shape: f32[4,1,11], index: 14, kind: input, shape index: {}]
  %s15 = inlined_call_operand.vmem [shape: f32[4,11,14], index: 15, kind: input, shape index: {}]
  %s16 = inlined_call_operand.vmem [shape: f32[4,1,14], index: 16, kind: input, shape index: {}]
  %s17 = inlined_call_operand.vmem [shape: f32[64,14], index: 17, kind: output, shape index: {}]
  %s18 = sld [smem:[#allocation0]]
  $region148: #{e3egnn_forward.1} parent=0
    _
  %s20 = ssub.s32 1, %s18
  %s21 = scalar_select 0, %s20, %s18
  loop: start=0, step=1, limit=6
  $region2: #{e3egnn_forward.1} parent=0 // loop_pre_header
    _
  $region3: #{e3egnn_forward.1} parent=0 // loop_header
    %s23 = sphi 0, %s27
    %p24 = scmp.ge.s32.totalorder %s23, 6
    %s30 = sphi 0, %s42
    %s31 = sphi 0, %s38
    %s32 = sphi 0, %s30
    %s33 = sphi 0, %s31
    %s34 = sphi 0, %s32
    %s35 = sphi 0, %s33
    %s45 = sphi 0, %s47
    %s48 = sphi 0, %s45
    %s49 = sphi 0, %s48
    %s65 = sphi 0, %s49
    %s71 = sphi 0, %s73
    %s74 = sphi 0, %s71
    %s75 = sphi 0, %s74
    %s91 = sphi 0, %s75
    %s97 = sphi 0, %s99
    %s100 = sphi 0, %s97
    %s101 = sphi 0, %s100
    %s117 = sphi 0, %s101
    %s123 = sphi 0, %s125
    %s126 = sphi 0, %s123
    %s127 = sphi 0, %s126
    %s143 = sphi 0, %s127
    %s149 = sphi 0, %s151
    %s152 = sphi 0, %s149
    %s153 = sphi 0, %s152
    %s169 = sphi 0, %s153
    %s175 = sphi 0, %s177
    %s178 = sphi 0, %s175
    %s179 = sphi 0, %s178
    %s195 = sphi 0, %s179
    %s201 = sphi 0, %s203
    %s204 = sphi 0, %s201
    %s205 = sphi 0, %s204
    %s221 = sphi 0, %s205
    %s227 = sphi 0, %s229
    %s230 = sphi 0, %s227
    %s231 = sphi 0, %s230
    %s247 = sphi 0, %s231
    %s253 = sphi 0, %s255
    %s256 = sphi 0, %s253
    %s257 = sphi 0, %s256
    %s273 = sphi 0, %s257
    %s279 = sphi 0, %s281
    %s282 = sphi 0, %s279
    %s283 = sphi 0, %s282
    %s299 = sphi 0, %s283
    %s305 = sphi 0, %s307
    %s308 = sphi 0, %s305
    %s309 = sphi 0, %s308
    %s325 = sphi 0, %s309
    %s331 = sphi 0, %s333
    %s334 = sphi 0, %s331
    %s335 = sphi 0, %s334
    %s351 = sphi 0, %s335
    %s357 = sphi 0, %s359
    %s360 = sphi 0, %s357
    %s361 = sphi 0, %s360
    %s377 = sphi 0, %s361
    %s383 = sphi 0, %s385
    %s386 = sphi 0, %s383
    %s387 = sphi 0, %s386
    %s403 = sphi 0, %s387
    %s409 = sphi 0, %s411
    %s412 = sphi 0, %s409
    %s413 = sphi 0, %s412
    %s429 = sphi 0, %s413
    %s435 = sphi 0, %s437
    %s438 = sphi 0, %s435
    %s439 = sphi 0, %s438
    %s455 = sphi 0, %s439
    %s459 = sphi 0, %s459
    %s461 = sphi 0, %s459
    %s462 = sphi 0, %s461
    %s476 = sphi 0, %s462
  $region4: #{e3egnn_forward.1} parent=0 // loop_header_branch
    %26 = sbr.rel (%p24) target = $region8
  $region5: #{e3egnn_forward.1} parent=0 // loop_body
    %s28 = ssub.s32 %s23, 1
    %s29 = ssub.s32 %s23, 2
    %s36 = sadd.s32 1, %s31
    %p37 = scmp.ge.s32.totalorder %s36, 1
    %s38 = scalar_select %p37, 0, %s36
    %s39 = sadd.s32 1, %s30
    %s40 = scalar_select %p37, %s39, %s30
    %p41 = scmp.ge.s32.totalorder %s40, 4
    %s42 = scalar_select %p41, 0, %s40
    %s43 = ssub.s32 %s31, %s38
    %p44 = scmp.eq.s32.totalorder %s43, 0
    %s46 = sadd.s32 %s45, 1
    %s47 = scalar_select %p44, %s45, %s46
    %p50 = pneg %p44
    %p51 = scmp.eq.s32.totalorder %s23, 3
    %p52 = por %p50, %p51
    %p53 = scmp.ne.s32.totalorder %s45, %s48
    %p54 = scmp.eq.s32.totalorder %s23, 0
    %p55 = por %p53, %p54
    %p56 = scmp.ne.s32.totalorder %s45, %s48
    %p57 = scmp.eq.s32.totalorder %s28, 3
    %p58 = por %p56, %p57
    %p59 = scmp.ne.s32.totalorder %s48, %s49
    %p60 = scmp.eq.s32.totalorder %s28, 0
    %p61 = por %p59, %p60
    %p62 = scmp.ne.s32.totalorder %s48, %s49
    %p63 = scmp.eq.s32.totalorder %s29, 3
    %p64 = por %p62, %p63
    %p66 = scmp.ne.s32.totalorder %s49, %s65
    %p67 = scmp.eq.s32.totalorder %s29, 0
    %p68 = por %p66, %p67
    %s69 = ssub.s32 %s30, %s42
    %p70 = scmp.eq.s32.totalorder %s69, 0
    %s72 = sadd.s32 %s71, 1
    %s73 = scalar_select %p70, %s71, %s72
    %p76 = pneg %p70
    %p77 = scmp.eq.s32.totalorder %s23, 3
    %p78 = por %p76, %p77
    %p79 = scmp.ne.s32.totalorder %s71, %s74
    %p80 = scmp.eq.s32.totalorder %s23, 0
    %p81 = por %p79, %p80
    %p82 = scmp.ne.s32.totalorder %s71, %s74
    %p83 = scmp.eq.s32.totalorder %s28, 3
    %p84 = por %p82, %p83
    %p85 = scmp.ne.s32.totalorder %s74, %s75
    %p86 = scmp.eq.s32.totalorder %s28, 0
    %p87 = por %p85, %p86
    %p88 = scmp.ne.s32.totalorder %s74, %s75
    %p89 = scmp.eq.s32.totalorder %s29, 3
    %p90 = por %p88, %p89
    %p92 = scmp.ne.s32.totalorder %s75, %s91
    %p93 = scmp.eq.s32.totalorder %s29, 0
    %p94 = por %p92, %p93
    %s95 = ssub.s32 %s30, %s42
    %p96 = scmp.eq.s32.totalorder %s95, 0
    %s98 = sadd.s32 %s97, 1
    %s99 = scalar_select %p96, %s97, %s98
    %p102 = pneg %p96
    %p103 = scmp.eq.s32.totalorder %s23, 3
    %p104 = por %p102, %p103
    %p105 = scmp.ne.s32.totalorder %s97, %s100
    %p106 = scmp.eq.s32.totalorder %s23, 0
    %p107 = por %p105, %p106
    %p108 = scmp.ne.s32.totalorder %s97, %s100
    %p109 = scmp.eq.s32.totalorder %s28, 3
    %p110 = por %p108, %p109
    %p111 = scmp.ne.s32.totalorder %s100, %s101
    %p112 = scmp.eq.s32.totalorder %s28, 0
    %p113 = por %p111, %p112
    %p114 = scmp.ne.s32.totalorder %s100, %s101
    %p115 = scmp.eq.s32.totalorder %s29, 3
    %p116 = por %p114, %p115
    %p118 = scmp.ne.s32.totalorder %s101, %s117
    %p119 = scmp.eq.s32.totalorder %s29, 0
    %p120 = por %p118, %p119
    %s121 = ssub.s32 %s30, %s42
    %p122 = scmp.eq.s32.totalorder %s121, 0
    %s124 = sadd.s32 %s123, 1
    %s125 = scalar_select %p122, %s123, %s124
    %p128 = pneg %p122
    %p129 = scmp.eq.s32.totalorder %s23, 3
    %p130 = por %p128, %p129
    %p131 = scmp.ne.s32.totalorder %s123, %s126
    %p132 = scmp.eq.s32.totalorder %s23, 0
    %p133 = por %p131, %p132
    %p134 = scmp.ne.s32.totalorder %s123, %s126
    %p135 = scmp.eq.s32.totalorder %s28, 3
    %p136 = por %p134, %p135
    %p137 = scmp.ne.s32.totalorder %s126, %s127
    %p138 = scmp.eq.s32.totalorder %s28, 0
    %p139 = por %p137, %p138
    %p140 = scmp.ne.s32.totalorder %s126, %s127
    %p141 = scmp.eq.s32.totalorder %s29, 3
    %p142 = por %p140, %p141
    %p144 = scmp.ne.s32.totalorder %s127, %s143
    %p145 = scmp.eq.s32.totalorder %s29, 0
    %p146 = por %p144, %p145
    %s147 = ssub.s32 %s30, %s42
    %p148 = scmp.eq.s32.totalorder %s147, 0
    %s150 = sadd.s32 %s149, 1
    %s151 = scalar_select %p148, %s149, %s150
    %p154 = pneg %p148
    %p155 = scmp.eq.s32.totalorder %s23, 3
    %p156 = por %p154, %p155
    %p157 = scmp.ne.s32.totalorder %s149, %s152
    %p158 = scmp.eq.s32.totalorder %s23, 0
    %p159 = por %p157, %p158
    %p160 = scmp.ne.s32.totalorder %s149, %s152
    %p161 = scmp.eq.s32.totalorder %s28, 3
    %p162 = por %p160, %p161
    %p163 = scmp.ne.s32.totalorder %s152, %s153
    %p164 = scmp.eq.s32.totalorder %s28, 0
    %p165 = por %p163, %p164
    %p166 = scmp.ne.s32.totalorder %s152, %s153
    %p167 = scmp.eq.s32.totalorder %s29, 3
    %p168 = por %p166, %p167
    %p170 = scmp.ne.s32.totalorder %s153, %s169
    %p171 = scmp.eq.s32.totalorder %s29, 0
    %p172 = por %p170, %p171
    %s173 = ssub.s32 %s30, %s42
    %p174 = scmp.eq.s32.totalorder %s173, 0
    %s176 = sadd.s32 %s175, 1
    %s177 = scalar_select %p174, %s175, %s176
    %p180 = pneg %p174
    %p181 = scmp.eq.s32.totalorder %s23, 3
    %p182 = por %p180, %p181
    %p183 = scmp.ne.s32.totalorder %s175, %s178
    %p184 = scmp.eq.s32.totalorder %s23, 0
    %p185 = por %p183, %p184
    %p186 = scmp.ne.s32.totalorder %s175, %s178
    %p187 = scmp.eq.s32.totalorder %s28, 3
    %p188 = por %p186, %p187
    %p189 = scmp.ne.s32.totalorder %s178, %s179
    %p190 = scmp.eq.s32.totalorder %s28, 0
    %p191 = por %p189, %p190
    %p192 = scmp.ne.s32.totalorder %s178, %s179
    %p193 = scmp.eq.s32.totalorder %s29, 3
    %p194 = por %p192, %p193
    %p196 = scmp.ne.s32.totalorder %s179, %s195
    %p197 = scmp.eq.s32.totalorder %s29, 0
    %p198 = por %p196, %p197
    %s199 = ssub.s32 %s30, %s42
    %p200 = scmp.eq.s32.totalorder %s199, 0
    %s202 = sadd.s32 %s201, 1
    %s203 = scalar_select %p200, %s201, %s202
    %p206 = pneg %p200
    %p207 = scmp.eq.s32.totalorder %s23, 3
    %p208 = por %p206, %p207
    %p209 = scmp.ne.s32.totalorder %s201, %s204
    %p210 = scmp.eq.s32.totalorder %s23, 0
    %p211 = por %p209, %p210
    %p212 = scmp.ne.s32.totalorder %s201, %s204
    %p213 = scmp.eq.s32.totalorder %s28, 3
    %p214 = por %p212, %p213
    %p215 = scmp.ne.s32.totalorder %s204, %s205
    %p216 = scmp.eq.s32.totalorder %s28, 0
    %p217 = por %p215, %p216
    %p218 = scmp.ne.s32.totalorder %s204, %s205
    %p219 = scmp.eq.s32.totalorder %s29, 3
    %p220 = por %p218, %p219
    %p222 = scmp.ne.s32.totalorder %s205, %s221
    %p223 = scmp.eq.s32.totalorder %s29, 0
    %p224 = por %p222, %p223
    %s225 = ssub.s32 %s30, %s42
    %p226 = scmp.eq.s32.totalorder %s225, 0
    %s228 = sadd.s32 %s227, 1
    %s229 = scalar_select %p226, %s227, %s228
    %p232 = pneg %p226
    %p233 = scmp.eq.s32.totalorder %s23, 3
    %p234 = por %p232, %p233
    %p235 = scmp.ne.s32.totalorder %s227, %s230
    %p236 = scmp.eq.s32.totalorder %s23, 0
    %p237 = por %p235, %p236
    %p238 = scmp.ne.s32.totalorder %s227, %s230
    %p239 = scmp.eq.s32.totalorder %s28, 3
    %p240 = por %p238, %p239
    %p241 = scmp.ne.s32.totalorder %s230, %s231
    %p242 = scmp.eq.s32.totalorder %s28, 0
    %p243 = por %p241, %p242
    %p244 = scmp.ne.s32.totalorder %s230, %s231
    %p245 = scmp.eq.s32.totalorder %s29, 3
    %p246 = por %p244, %p245
    %p248 = scmp.ne.s32.totalorder %s231, %s247
    %p249 = scmp.eq.s32.totalorder %s29, 0
    %p250 = por %p248, %p249
    %s251 = ssub.s32 %s30, %s42
    %p252 = scmp.eq.s32.totalorder %s251, 0
    %s254 = sadd.s32 %s253, 1
    %s255 = scalar_select %p252, %s253, %s254
    %p258 = pneg %p252
    %p259 = scmp.eq.s32.totalorder %s23, 3
    %p260 = por %p258, %p259
    %p261 = scmp.ne.s32.totalorder %s253, %s256
    %p262 = scmp.eq.s32.totalorder %s23, 0
    %p263 = por %p261, %p262
    %p264 = scmp.ne.s32.totalorder %s253, %s256
    %p265 = scmp.eq.s32.totalorder %s28, 3
    %p266 = por %p264, %p265
    %p267 = scmp.ne.s32.totalorder %s256, %s257
    %p268 = scmp.eq.s32.totalorder %s28, 0
    %p269 = por %p267, %p268
    %p270 = scmp.ne.s32.totalorder %s256, %s257
    %p271 = scmp.eq.s32.totalorder %s29, 3
    %p272 = por %p270, %p271
    %p274 = scmp.ne.s32.totalorder %s257, %s273
    %p275 = scmp.eq.s32.totalorder %s29, 0
    %p276 = por %p274, %p275
    %s277 = ssub.s32 %s30, %s42
    %p278 = scmp.eq.s32.totalorder %s277, 0
    %s280 = sadd.s32 %s279, 1
    %s281 = scalar_select %p278, %s279, %s280
    %p284 = pneg %p278
    %p285 = scmp.eq.s32.totalorder %s23, 3
    %p286 = por %p284, %p285
    %p287 = scmp.ne.s32.totalorder %s279, %s282
    %p288 = scmp.eq.s32.totalorder %s23, 0
    %p289 = por %p287, %p288
    %p290 = scmp.ne.s32.totalorder %s279, %s282
    %p291 = scmp.eq.s32.totalorder %s28, 3
    %p292 = por %p290, %p291
    %p293 = scmp.ne.s32.totalorder %s282, %s283
    %p294 = scmp.eq.s32.totalorder %s28, 0
    %p295 = por %p293, %p294
    %p296 = scmp.ne.s32.totalorder %s282, %s283
    %p297 = scmp.eq.s32.totalorder %s29, 3
    %p298 = por %p296, %p297
    %p300 = scmp.ne.s32.totalorder %s283, %s299
    %p301 = scmp.eq.s32.totalorder %s29, 0
    %p302 = por %p300, %p301
    %s303 = ssub.s32 %s30, %s42
    %p304 = scmp.eq.s32.totalorder %s303, 0
    %s306 = sadd.s32 %s305, 1
    %s307 = scalar_select %p304, %s305, %s306
    %p310 = pneg %p304
    %p311 = scmp.eq.s32.totalorder %s23, 3
    %p312 = por %p310, %p311
    %p313 = scmp.ne.s32.totalorder %s305, %s308
    %p314 = scmp.eq.s32.totalorder %s23, 0
    %p315 = por %p313, %p314
    %p316 = scmp.ne.s32.totalorder %s305, %s308
    %p317 = scmp.eq.s32.totalorder %s28, 3
    %p318 = por %p316, %p317
    %p319 = scmp.ne.s32.totalorder %s308, %s309
    %p320 = scmp.eq.s32.totalorder %s28, 0
    %p321 = por %p319, %p320
    %p322 = scmp.ne.s32.totalorder %s308, %s309
    %p323 = scmp.eq.s32.totalorder %s29, 3
    %p324 = por %p322, %p323
    %p326 = scmp.ne.s32.totalorder %s309, %s325
    %p327 = scmp.eq.s32.totalorder %s29, 0
    %p328 = por %p326, %p327
    %s329 = ssub.s32 %s30, %s42
    %p330 = scmp.eq.s32.totalorder %s329, 0
    %s332 = sadd.s32 %s331, 1
    %s333 = scalar_select %p330, %s331, %s332
    %p336 = pneg %p330
    %p337 = scmp.eq.s32.totalorder %s23, 3
    %p338 = por %p336, %p337
    %p339 = scmp.ne.s32.totalorder %s331, %s334
    %p340 = scmp.eq.s32.totalorder %s23, 0
    %p341 = por %p339, %p340
    %p342 = scmp.ne.s32.totalorder %s331, %s334
    %p343 = scmp.eq.s32.totalorder %s28, 3
    %p344 = por %p342, %p343
    %p345 = scmp.ne.s32.totalorder %s334, %s335
    %p346 = scmp.eq.s32.totalorder %s28, 0
    %p347 = por %p345, %p346
    %p348 = scmp.ne.s32.totalorder %s334, %s335
    %p349 = scmp.eq.s32.totalorder %s29, 3
    %p350 = por %p348, %p349
    %p352 = scmp.ne.s32.totalorder %s335, %s351
    %p353 = scmp.eq.s32.totalorder %s29, 0
    %p354 = por %p352, %p353
    %s355 = ssub.s32 %s30, %s42
    %p356 = scmp.eq.s32.totalorder %s355, 0
    %s358 = sadd.s32 %s357, 1
    %s359 = scalar_select %p356, %s357, %s358
    %p362 = pneg %p356
    %p363 = scmp.eq.s32.totalorder %s23, 3
    %p364 = por %p362, %p363
    %p365 = scmp.ne.s32.totalorder %s357, %s360
    %p366 = scmp.eq.s32.totalorder %s23, 0
    %p367 = por %p365, %p366
    %p368 = scmp.ne.s32.totalorder %s357, %s360
    %p369 = scmp.eq.s32.totalorder %s28, 3
    %p370 = por %p368, %p369
    %p371 = scmp.ne.s32.totalorder %s360, %s361
    %p372 = scmp.eq.s32.totalorder %s28, 0
    %p373 = por %p371, %p372
    %p374 = scmp.ne.s32.totalorder %s360, %s361
    %p375 = scmp.eq.s32.totalorder %s29, 3
    %p376 = por %p374, %p375
    %p378 = scmp.ne.s32.totalorder %s361, %s377
    %p379 = scmp.eq.s32.totalorder %s29, 0
    %p380 = por %p378, %p379
    %s381 = ssub.s32 %s30, %s42
    %p382 = scmp.eq.s32.totalorder %s381, 0
    %s384 = sadd.s32 %s383, 1
    %s385 = scalar_select %p382, %s383, %s384
    %p388 = pneg %p382
    %p389 = scmp.eq.s32.totalorder %s23, 3
    %p390 = por %p388, %p389
    %p391 = scmp.ne.s32.totalorder %s383, %s386
    %p392 = scmp.eq.s32.totalorder %s23, 0
    %p393 = por %p391, %p392
    %p394 = scmp.ne.s32.totalorder %s383, %s386
    %p395 = scmp.eq.s32.totalorder %s28, 3
    %p396 = por %p394, %p395
    %p397 = scmp.ne.s32.totalorder %s386, %s387
    %p398 = scmp.eq.s32.totalorder %s28, 0
    %p399 = por %p397, %p398
    %p400 = scmp.ne.s32.totalorder %s386, %s387
    %p401 = scmp.eq.s32.totalorder %s29, 3
    %p402 = por %p400, %p401
    %p404 = scmp.ne.s32.totalorder %s387, %s403
    %p405 = scmp.eq.s32.totalorder %s29, 0
    %p406 = por %p404, %p405
    %s407 = ssub.s32 %s30, %s42
    %p408 = scmp.eq.s32.totalorder %s407, 0
    %s410 = sadd.s32 %s409, 1
    %s411 = scalar_select %p408, %s409, %s410
    %p414 = pneg %p408
    %p415 = scmp.eq.s32.totalorder %s23, 3
    %p416 = por %p414, %p415
    %p417 = scmp.ne.s32.totalorder %s409, %s412
    %p418 = scmp.eq.s32.totalorder %s23, 0
    %p419 = por %p417, %p418
    %p420 = scmp.ne.s32.totalorder %s409, %s412
    %p421 = scmp.eq.s32.totalorder %s28, 3
    %p422 = por %p420, %p421
    %p423 = scmp.ne.s32.totalorder %s412, %s413
    %p424 = scmp.eq.s32.totalorder %s28, 0
    %p425 = por %p423, %p424
    %p426 = scmp.ne.s32.totalorder %s412, %s413
    %p427 = scmp.eq.s32.totalorder %s29, 3
    %p428 = por %p426, %p427
    %p430 = scmp.ne.s32.totalorder %s413, %s429
    %p431 = scmp.eq.s32.totalorder %s29, 0
    %p432 = por %p430, %p431
    %s433 = ssub.s32 %s30, %s42
    %p434 = scmp.eq.s32.totalorder %s433, 0
    %s436 = sadd.s32 %s435, 1
    %s437 = scalar_select %p434, %s435, %s436
    %p440 = pneg %p434
    %p441 = scmp.eq.s32.totalorder %s23, 3
    %p442 = por %p440, %p441
    %p443 = scmp.ne.s32.totalorder %s435, %s438
    %p444 = scmp.eq.s32.totalorder %s23, 0
    %p445 = por %p443, %p444
    %p446 = scmp.ne.s32.totalorder %s435, %s438
    %p447 = scmp.eq.s32.totalorder %s28, 3
    %p448 = por %p446, %p447
    %p449 = scmp.ne.s32.totalorder %s438, %s439
    %p450 = scmp.eq.s32.totalorder %s28, 0
    %p451 = por %p449, %p450
    %p452 = scmp.ne.s32.totalorder %s438, %s439
    %p453 = scmp.eq.s32.totalorder %s29, 3
    %p454 = por %p452, %p453
    %p456 = scmp.ne.s32.totalorder %s439, %s455
    %p457 = scmp.eq.s32.totalorder %s29, 0
    %p458 = por %p456, %p457
    %s460 = sadd.s32 %s459, 1
    %p463 = scmp.eq.s32.totalorder %s23, 3
    %p464 = scmp.ne.s32.totalorder %s459, %s461
    %p465 = scmp.eq.s32.totalorder %s23, 0
    %p466 = por %p464, %p465
    %p467 = scmp.ne.s32.totalorder %s459, %s461
    %p468 = scmp.eq.s32.totalorder %s28, 3
    %p469 = por %p467, %p468
    %p470 = scmp.ne.s32.totalorder %s461, %s462
    %p471 = scmp.eq.s32.totalorder %s28, 0
    %p472 = por %p470, %p471
    %p473 = scmp.ne.s32.totalorder %s461, %s462
    %p474 = scmp.eq.s32.totalorder %s29, 3
    %p475 = por %p473, %p474
    %p477 = scmp.ne.s32.totalorder %s462, %s476
    %p478 = scmp.eq.s32.totalorder %s29, 0
    %p479 = por %p477, %p478
    %p480 = scmp.le.s32.totalorder 1, %s23
    %p481 = scmp.lt.s32.totalorder %s23, 5
    %p482 = pnand %p480, %p481
    %p483 = pneg %p482
    // Predicated region
    $region9: #{e3egnn_forward.1} parent=5 // pred_check
      _
    $region10: #{e3egnn_forward.1} parent=5 // pred_check_branch
      %485 = sbr.rel (%p482) target = $region12
    $region11: #{e3egnn_forward.1} parent=5 // pred_region
      %s486 = ssub.s32 %s23, 1
      // Predicated region
      $region13: #{e3egnn_forward.1} parent=11 // pred_check
        %p487 = pneg %p61
      $region14: #{e3egnn_forward.1} parent=11 // pred_check_branch
        %489 = sbr.rel (%p487) target = $region16
      $region15: #{e3egnn_forward.1} parent=11 // pred_region
        %s490 = smul.u32 64, %s33
        %p491 = scmp.lt.s32.totalorder %s490, 63
        %s492 = scalar_select %p491, %s490, 63
        %s493 = smul.addr %s492, 8
        %s494 = scalar_lea.vmem %s1, %s493
        %s495 = smul.u32 64, %s33
      $region16: #{e3egnn_forward.1} parent=11 // pred_fallthru
        _
    $region12: #{e3egnn_forward.1} parent=5 // pred_fallthru
      _
    %p496 = scmp.lt.s32.totalorder %s23, 4
    // Predicated region
    $region17: #{e3egnn_forward.1} parent=5 // pred_check
      %p497 = pneg %p496
    $region18: #{e3egnn_forward.1} parent=5 // pred_check_branch
      %499 = sbr.rel (%p497) target = $region20
    $region19: #{e3egnn_forward.1} parent=5 // pred_region
      // Predicated region
      $region21: #{e3egnn_forward.1} parent=19 // pred_check
        %p500 = pneg %p81
      $region22: #{e3egnn_forward.1} parent=19 // pred_check_branch
        %502 = sbr.rel (%p500) target = $region24
      $region23: #{e3egnn_forward.1} parent=19 // pred_region
        %p503 = scmp.lt.s32.totalorder %s30, 3
        %s504 = scalar_select %p503, %s30, 3
        %s505 = smul.addr %s504, 2
        %s506 = smul.addr %s505, 8
        %s507 = scalar_lea.vmem %s2, %s506
      $region24: #{e3egnn_forward.1} parent=19 // pred_fallthru
        _
      // Predicated region
      $region25: #{e3egnn_forward.1} parent=19 // pred_check
        %p508 = pneg %p107
      $region26: #{e3egnn_forward.1} parent=19 // pred_check_branch
        %510 = sbr.rel (%p508) target = $region28
      $region27: #{e3egnn_forward.1} parent=19 // pred_region
        %p511 = scmp.lt.s32.totalorder %s30, 3
        %s512 = scalar_select %p511, %s30, 3
        %s513 = smul.addr %s512, 2
        %s514 = smul.addr %s513, 8
        %s515 = scalar_lea.vmem %s3, %s514
      $region28: #{e3egnn_forward.1} parent=19 // pred_fallthru
        _
      // Predicated region
      $region29: #{e3egnn_forward.1} parent=19 // pred_check
        %p516 = pneg %p133
      $region30: #{e3egnn_forward.1} parent=19 // pred_check_branch
        %518 = sbr.rel (%p516) target = $region32
      $region31: #{e3egnn_forward.1} parent=19 // pred_region
        %p519 = scmp.lt.s32.totalorder %s30, 3
        %s520 = scalar_select %p519, %s30, 3
        %s521 = scalar_lea.vmem %s4, %s520
      $region32: #{e3egnn_forward.1} parent=19 // pred_fallthru
        _
      // Predicated region
      $region33: #{e3egnn_forward.1} parent=19 // pred_check
        %p522 = pneg %p159
      $region34: #{e3egnn_forward.1} parent=19 // pred_check_branch
        %524 = sbr.rel (%p522) target = $region36
      $region35: #{e3egnn_forward.1} parent=19 // pred_region
        %p525 = scmp.lt.s32.totalorder %s30, 3
        %s526 = scalar_select %p525, %s30, 3
        %s527 = scalar_lea.vmem %s5, %s526
      $region36: #{e3egnn_forward.1} parent=19 // pred_fallthru
        _
      // Predicated region
      $region37: #{e3egnn_forward.1} parent=19 // pred_check
        %p528 = pneg %p185
      $region38: #{e3egnn_forward.1} parent=19 // pred_check_branch
        %530 = sbr.rel (%p528) target = $region40
      $region39: #{e3egnn_forward.1} parent=19 // pred_region
        %p531 = scmp.lt.s32.totalorder %s30, 3
        %s532 = scalar_select %p531, %s30, 3
        %s533 = smul.addr %s532, 3
        %s534 = smul.addr %s533, 8
        %s535 = scalar_lea.vmem %s6, %s534
      $region40: #{e3egnn_forward.1} parent=19 // pred_fallthru
        _
      // Predicated region
      $region41: #{e3egnn_forward.1} parent=19 // pred_check
        %p536 = pneg %p211
      $region42: #{e3egnn_forward.1} parent=19 // pred_check_branch
        %538 = sbr.rel (%p536) target = $region44
      $region43: #{e3egnn_forward.1} parent=19 // pred_region
        %p539 = scmp.lt.s32.totalorder %s30, 3
        %s540 = scalar_select %p539, %s30, 3
        %s541 = scalar_lea.vmem %s7, %s540
      $region44: #{e3egnn_forward.1} parent=19 // pred_fallthru
        _
      // Predicated region
      $region45: #{e3egnn_forward.1} parent=19 // pred_check
        %p542 = pneg %p237
      $region46: #{e3egnn_forward.1} parent=19 // pred_check_branch
        %544 = sbr.rel (%p542) target = $region48
      $region47: #{e3egnn_forward.1} parent=19 // pred_region
        %p545 = scmp.lt.s32.totalorder %s30, 3
        %s546 = scalar_select %p545, %s30, 3
        %s547 = smul.addr %s546, 3
        %s548 = smul.addr %s547, 8
        %s549 = scalar_lea.vmem %s8, %s548
      $region48: #{e3egnn_forward.1} parent=19 // pred_fallthru
        _
      // Predicated region
      $region49: #{e3egnn_forward.1} parent=19 // pred_check
        %p550 = pneg %p263
      $region50: #{e3egnn_forward.1} parent=19 // pred_check_branch
        %552 = sbr.rel (%p550) target = $region52
      $region51: #{e3egnn_forward.1} parent=19 // pred_region
        %p553 = scmp.lt.s32.totalorder %s30, 3
        %s554 = scalar_select %p553, %s30, 3
        %s555 = scalar_lea.vmem %s9, %s554
      $region52: #{e3egnn_forward.1} parent=19 // pred_fallthru
        _
      // Predicated region
      $region53: #{e3egnn_forward.1} parent=19 // pred_check
        %p556 = pneg %p289
      $region54: #{e3egnn_forward.1} parent=19 // pred_check_branch
        %558 = sbr.rel (%p556) target = $region56
      $region55: #{e3egnn_forward.1} parent=19 // pred_region
        %p559 = scmp.lt.s32.totalorder %s30, 3
        %s560 = scalar_select %p559, %s30, 3
        %s561 = smul.addr %s560, 3
        %s562 = smul.addr %s561, 8
        %s563 = scalar_lea.vmem %s10, %s562
      $region56: #{e3egnn_forward.1} parent=19 // pred_fallthru
        _
      // Predicated region
      $region57: #{e3egnn_forward.1} parent=19 // pred_check
        %p564 = pneg %p315
      $region58: #{e3egnn_forward.1} parent=19 // pred_check_branch
        %566 = sbr.rel (%p564) target = $region60
      $region59: #{e3egnn_forward.1} parent=19 // pred_region
        %p567 = scmp.lt.s32.totalorder %s30, 3
        %s568 = scalar_select %p567, %s30, 3
        %s569 = scalar_lea.vmem %s11, %s568
      $region60: #{e3egnn_forward.1} parent=19 // pred_fallthru
        _
      // Predicated region
      $region61: #{e3egnn_forward.1} parent=19 // pred_check
        %p570 = pneg %p341
      $region62: #{e3egnn_forward.1} parent=19 // pred_check_branch
        %572 = sbr.rel (%p570) target = $region64
      $region63: #{e3egnn_forward.1} parent=19 // pred_region
        %p573 = scmp.lt.s32.totalorder %s30, 3
        %s574 = scalar_select %p573, %s30, 3
        %s575 = smul.addr %s574, 2
        %s576 = smul.addr %s575, 8
        %s577 = scalar_lea.vmem %s12, %s576
      $region64: #{e3egnn_forward.1} parent=19 // pred_fallthru
        _
      // Predicated region
      $region65: #{e3egnn_forward.1} parent=19 // pred_check
        %p578 = pneg %p367
      $region66: #{e3egnn_forward.1} parent=19 // pred_check_branch
        %580 = sbr.rel (%p578) target = $region68
      $region67: #{e3egnn_forward.1} parent=19 // pred_region
        %p581 = scmp.lt.s32.totalorder %s30, 3
        %s582 = scalar_select %p581, %s30, 3
        %s583 = smul.addr %s582, 2
        %s584 = smul.addr %s583, 8
        %s585 = scalar_lea.vmem %s13, %s584
      $region68: #{e3egnn_forward.1} parent=19 // pred_fallthru
        _
      // Predicated region
      $region69: #{e3egnn_forward.1} parent=19 // pred_check
        %p586 = pneg %p393
      $region70: #{e3egnn_forward.1} parent=19 // pred_check_branch
        %588 = sbr.rel (%p586) target = $region72
      $region71: #{e3egnn_forward.1} parent=19 // pred_region
        %p589 = scmp.lt.s32.totalorder %s30, 3
        %s590 = scalar_select %p589, %s30, 3
        %s591 = scalar_lea.vmem %s14, %s590
      $region72: #{e3egnn_forward.1} parent=19 // pred_fallthru
        _
      // Predicated region
      $region73: #{e3egnn_forward.1} parent=19 // pred_check
        %p592 = pneg %p419
      $region74: #{e3egnn_forward.1} parent=19 // pred_check_branch
        %594 = sbr.rel (%p592) target = $region76
      $region75: #{e3egnn_forward.1} parent=19 // pred_region
        %p595 = scmp.lt.s32.totalorder %s30, 3
        %s596 = scalar_select %p595, %s30, 3
        %s597 = smul.addr %s596, 2
        %s598 = smul.addr %s597, 8
        %s599 = scalar_lea.vmem %s15, %s598
      $region76: #{e3egnn_forward.1} parent=19 // pred_fallthru
        _
      // Predicated region
      $region77: #{e3egnn_forward.1} parent=19 // pred_check
        %p600 = pneg %p445
      $region78: #{e3egnn_forward.1} parent=19 // pred_check_branch
        %602 = sbr.rel (%p600) target = $region80
      $region79: #{e3egnn_forward.1} parent=19 // pred_region
        %p603 = scmp.lt.s32.totalorder %s30, 3
        %s604 = scalar_select %p603, %s30, 3
        %s605 = scalar_lea.vmem %s16, %s604
      $region80: #{e3egnn_forward.1} parent=19 // pred_fallthru
        _
    $region20: #{e3egnn_forward.1} parent=5 // pred_fallthru
      _
    %p606 = scmp.le.s32.totalorder 1, %s23
    %p607 = scmp.lt.s32.totalorder %s23, 5
    %p608 = pnand %p606, %p607
    %p609 = pneg %p608
    // Predicated region
    $region81: #{e3egnn_forward.1} parent=5 // pred_check
      _
    $region82: #{e3egnn_forward.1} parent=5 // pred_check_branch
      %611 = sbr.rel (%p608) target = $region84
    $region83: #{e3egnn_forward.1} parent=5 // pred_region
      %s612 = ssub.s32 %s23, 1
      %s613 = smul.u32 64, %s33
      %p614 = scmp.lt.s32.totalorder %s613, 63
      %s615 = scalar_select %p614, %s613, 63
      %s616 = smul.addr %s615, 8
      %s617 = scalar_lea.vmem %s1, %s616
      %p618 = pneg %p61
      %p619 = pneg %p58
      %p620 = scmp.lt.s32.totalorder %s32, 3
      %s621 = scalar_select %p620, %s32, 3
      %s622 = smul.addr %s621, 2
      %s623 = smul.addr %s622, 8
      %s624 = scalar_lea.vmem %s2, %s623
      %p625 = pneg %p87
      %p626 = pneg %p84
      %p627 = scmp.lt.s32.totalorder %s32, 3
      %s628 = scalar_select %p627, %s32, 3
      %s629 = smul.addr %s628, 2
      %s630 = smul.addr %s629, 8
      %s631 = scalar_lea.vmem %s3, %s630
      %p632 = pneg %p113
      %p633 = pneg %p110
      %p634 = scmp.lt.s32.totalorder %s32, 3
      %s635 = scalar_select %p634, %s32, 3
      %s636 = scalar_lea.vmem %s4, %s635
      %p637 = pneg %p139
      %p638 = pneg %p136
      %p639 = scmp.lt.s32.totalorder %s32, 3
      %s640 = scalar_select %p639, %s32, 3
      %s641 = scalar_lea.vmem %s5, %s640
      %p642 = pneg %p165
      %p643 = pneg %p162
      %p644 = scmp.lt.s32.totalorder %s32, 3
      %s645 = scalar_select %p644, %s32, 3
      %s646 = smul.addr %s645, 3
      %s647 = smul.addr %s646, 8
      %s648 = scalar_lea.vmem %s6, %s647
      %p649 = pneg %p191
      %p650 = pneg %p188
      %p651 = scmp.lt.s32.totalorder %s32, 3
      %s652 = scalar_select %p651, %s32, 3
      %s653 = scalar_lea.vmem %s7, %s652
      %p654 = pneg %p217
      %p655 = pneg %p214
      %p656 = scmp.lt.s32.totalorder %s32, 3
      %s657 = scalar_select %p656, %s32, 3
      %s658 = smul.addr %s657, 3
      %s659 = smul.addr %s658, 8
      %s660 = scalar_lea.vmem %s8, %s659
      %p661 = pneg %p243
      %p662 = pneg %p240
      %p663 = scmp.lt.s32.totalorder %s32, 3
      %s664 = scalar_select %p663, %s32, 3
      %s665 = scalar_lea.vmem %s9, %s664
      %p666 = pneg %p269
      %p667 = pneg %p266
      %p668 = scmp.lt.s32.totalorder %s32, 3
      %s669 = scalar_select %p668, %s32, 3
      %s670 = smul.addr %s669, 3
      %s671 = smul.addr %s670, 8
      %s672 = scalar_lea.vmem %s10, %s671
      %p673 = pneg %p295
      %p674 = pneg %p292
      %p675 = scmp.lt.s32.totalorder %s32, 3
      %s676 = scalar_select %p675, %s32, 3
      %s677 = scalar_lea.vmem %s11, %s676
      %p678 = pneg %p321
      %p679 = pneg %p318
      %p680 = scmp.lt.s32.totalorder %s32, 3
      %s681 = scalar_select %p680, %s32, 3
      %s682 = smul.addr %s681, 2
      %s683 = smul.addr %s682, 8
      %s684 = scalar_lea.vmem %s12, %s683
      %p685 = pneg %p347
      %p686 = pneg %p344
      %p687 = scmp.lt.s32.totalorder %s32, 3
      %s688 = scalar_select %p687, %s32, 3
      %s689 = smul.addr %s688, 2
      %s690 = smul.addr %s689, 8
      %s691 = scalar_lea.vmem %s13, %s690
      %p692 = pneg %p373
      %p693 = pneg %p370
      %p694 = scmp.lt.s32.totalorder %s32, 3
      %s695 = scalar_select %p694, %s32, 3
      %s696 = scalar_lea.vmem %s14, %s695
      %p697 = pneg %p399
      %p698 = pneg %p396
      %p699 = scmp.lt.s32.totalorder %s32, 3
      %s700 = scalar_select %p699, %s32, 3
      %s701 = smul.addr %s700, 2
      %s702 = smul.addr %s701, 8
      %s703 = scalar_lea.vmem %s15, %s702
      %p704 = pneg %p425
      %p705 = pneg %p422
      %p706 = scmp.lt.s32.totalorder %s32, 3
      %s707 = scalar_select %p706, %s32, 3
      %s708 = scalar_lea.vmem %s16, %s707
      %p709 = pneg %p451
      %p710 = pneg %p448
      %p711 = pneg %p472
      %p712 = pneg %p469
      %s713 = smul.u32 64, %s33
      %p714 = scmp.lt.s32.totalorder %s713, 63
      %s715 = scalar_select %p714, %s713, 63
      %s716 = smul.addr %s715, 8
      %s717 = scalar_lea.vmem %s1, %s716
      %s718 = smul.u32 64, %s33
      %p719 = scmp.lt.s32.totalorder %s32, 3
      %s720 = scalar_select %p719, %s32, 3
      %s721 = smul.addr %s720, 2
      %s722 = smul.addr %s721, 8
      %s723 = scalar_lea.vmem %s2, %s722
      %p724 = scmp.lt.s32.totalorder %s32, 3
      %s725 = scalar_select %p724, %s32, 3
      %s726 = smul.addr %s725, 2
      %s727 = smul.addr %s726, 8
      %s728 = scalar_lea.vmem %s3, %s727
      %p729 = scmp.lt.s32.totalorder %s32, 3
      %s730 = scalar_select %p729, %s32, 3
      %s731 = scalar_lea.vmem %s4, %s730
      %p732 = scmp.lt.s32.totalorder %s32, 3
      %s733 = scalar_select %p732, %s32, 3
      %s734 = scalar_lea.vmem %s5, %s733
      %p735 = scmp.lt.s32.totalorder %s32, 3
      %s736 = scalar_select %p735, %s32, 3
      %s737 = smul.addr %s736, 3
      %s738 = smul.addr %s737, 8
      %s739 = scalar_lea.vmem %s6, %s738
      %p740 = scmp.lt.s32.totalorder %s32, 3
      %s741 = scalar_select %p740, %s32, 3
      %s742 = scalar_lea.vmem %s7, %s741
      %p743 = scmp.lt.s32.totalorder %s32, 3
      %s744 = scalar_select %p743, %s32, 3
      %s745 = smul.addr %s744, 3
      %s746 = smul.addr %s745, 8
      %s747 = scalar_lea.vmem %s8, %s746
      %p748 = scmp.lt.s32.totalorder %s32, 3
      %s749 = scalar_select %p748, %s32, 3
      %s750 = scalar_lea.vmem %s9, %s749
      %p751 = scmp.lt.s32.totalorder %s32, 3
      %s752 = scalar_select %p751, %s32, 3
      %s753 = smul.addr %s752, 3
      %s754 = smul.addr %s753, 8
      %s755 = scalar_lea.vmem %s10, %s754
      %p756 = scmp.lt.s32.totalorder %s32, 3
      %s757 = scalar_select %p756, %s32, 3
      %s758 = scalar_lea.vmem %s11, %s757
      %p759 = scmp.lt.s32.totalorder %s32, 3
      %s760 = scalar_select %p759, %s32, 3
      %s761 = smul.addr %s760, 2
      %s762 = smul.addr %s761, 8
      %s763 = scalar_lea.vmem %s12, %s762
      %p764 = scmp.lt.s32.totalorder %s32, 3
      %s765 = scalar_select %p764, %s32, 3
      %s766 = smul.addr %s765, 2
      %s767 = smul.addr %s766, 8
      %s768 = scalar_lea.vmem %s13, %s767
      %p769 = scmp.lt.s32.totalorder %s32, 3
      %s770 = scalar_select %p769, %s32, 3
      %s771 = scalar_lea.vmem %s14, %s770
      %p772 = scmp.lt.s32.totalorder %s32, 3
      %s773 = scalar_select %p772, %s32, 3
      %s774 = smul.addr %s773, 2
      %s775 = smul.addr %s774, 8
      %s776 = scalar_lea.vmem %s15, %s775
      %p777 = scmp.lt.s32.totalorder %s32, 3
      %s778 = scalar_select %p777, %s32, 3
      %s779 = scalar_lea.vmem %s16, %s778
      %p780 = scmp.eq.s32.totalorder %s32, 0
      %p781 = scmp.eq.s32.totalorder %s33, 0
      %p782 = pnand %p780, %p781
      %p783 = pneg %p782
      // Predicated region
      $region85: #{e3egnn_forward.1} parent=83 // pred_check
        _
      $region86: #{e3egnn_forward.1} parent=83 // pred_check_branch
        %785 = sbr.rel (%p782) target = $region88
      $region87: #{e3egnn_forward.1} parent=83 // pred_region
        $region89: #{e3egnn_forward.1} parent=87
          #allocation4 [shape = 's32[1]{0}', space=sflag, size = 0x4, scoped, tag = 'scoped memory for e3egnn_forward.1']
          %p787 = scmp.lt.u32.totalorder 64, 8
          %p788 = pneg %p787
          // Predicated region
          $region90: #{e3egnn_forward.1} parent=89 // pred_check
            _
          $region91: #{e3egnn_forward.1} parent=89 // pred_check_branch
            %790 = sbr.rel (%p787) target = $region93
          $region92: #{e3egnn_forward.1} parent=89 // pred_region
            %s806 = sand.u32 64, 7
            %p807 = scmp.eq.s32.totalorder %s806, 0
            // Predicated region
            $region105: #{e3egnn_forward.1} parent=92 // pred_check
              %p808 = pneg %p807
            $region106: #{e3egnn_forward.1} parent=92 // pred_check_branch
              %810 = sbr.rel (%p808) target = $region108
            $region107: #{e3egnn_forward.1} parent=92 // pred_region
              loop: start=0, step=1, limit=1
              $region109: #{e3egnn_forward.1} parent=107 // loop_pre_header
                _
              $region110: #{e3egnn_forward.1} parent=107 // loop_header
                %s812 = sphi 0, %s816
                %p813 = scmp.ge.s32.totalorder %s812, 1
                %s817 = sphi %s0, %s0
                %s818 = sphi [#allocation2], [#allocation2]
              $region111: #{e3egnn_forward.1} parent=107 // loop_header_branch
                %815 = sbr.rel (%p813) target = $region115
              $region112: #{e3egnn_forward.1} parent=107 // loop_body
                %v819 = vld [vmem:[%s817] sm:$0xff]
                %820 = vst [vmem:[%s818] sm:$0xff] %v819
                %v821 = vld [vmem:[%s817 + $0x8] sm:$0xff]
                %822 = vst [vmem:[%s818 + $0x8] sm:$0xff] %v821
                %v823 = vld [vmem:[%s817 + $0x10] sm:$0xff]
                %824 = vst [vmem:[%s818 + $0x10] sm:$0xff] %v823
                %v825 = vld [vmem:[%s817 + $0x18] sm:$0xff]
                %826 = vst [vmem:[%s818 + $0x18] sm:$0xff] %v825
                %v827 = vld [vmem:[%s817 + $0x20] sm:$0xff]
                %828 = vst [vmem:[%s818 + $0x20] sm:$0xff] %v827
                %v829 = vld [vmem:[%s817 + $0x28] sm:$0xff]
                %830 = vst [vmem:[%s818 + $0x28] sm:$0xff] %v829
                %v831 = vld [vmem:[%s817 + $0x30] sm:$0xff]
                %832 = vst [vmem:[%s818 + $0x30] sm:$0xff] %v831
                %v833 = vld [vmem:[%s817 + $0x38] sm:$0xff]
                %834 = vst [vmem:[%s818 + $0x38] sm:$0xff] %v833
              $region113: #{e3egnn_forward.1} parent=107 // loop_footer
                %s816 = sadd.s32 1, %s812
              $region114: #{e3egnn_forward.1} parent=107 // loop_footer_branch
                %811 = sbr.rel target = $region110
              $region115: #{e3egnn_forward.1} parent=107 // loop_exit
                _
            $region108: #{e3egnn_forward.1} parent=92 // pred_fallthru
              _
            %p835 = pneg %p807
            // Predicated region
            $region116: #{e3egnn_forward.1} parent=92 // pred_check
              _
            $region117: #{e3egnn_forward.1} parent=92 // pred_check_branch
              %837 = sbr.rel (%p807) target = $region119
            $region118: #{e3egnn_forward.1} parent=92 // pred_region
              %s838 = sand.u32 64, 7
            $region119: #{e3egnn_forward.1} parent=92 // pred_fallthru
              _
          $region93: #{e3egnn_forward.1} parent=89 // pred_fallthru
            _
          // Predicated region
          $region94: #{e3egnn_forward.1} parent=89 // pred_check
            %p791 = pneg %p787
          $region95: #{e3egnn_forward.1} parent=89 // pred_check_branch
            %793 = sbr.rel (%p791) target = $region97
          $region96: #{e3egnn_forward.1} parent=89 // pred_region
            %s794 = sshll.u32 1, 64
            %s795 = ssub.s32 %s794, 1
            loop: start=0, step=1, limit=1
            $region98: #{e3egnn_forward.1} parent=96 // loop_pre_header
              _
            $region99: #{e3egnn_forward.1} parent=96 // loop_header
              %s797 = sphi 0, %s801
              %p798 = scmp.ge.s32.totalorder %s797, 1
              %s802 = sphi %s0, %s0
              %s803 = sphi [#allocation2], [#allocation2]
            $region100: #{e3egnn_forward.1} parent=96 // loop_header_branch
              %800 = sbr.rel (%p798) target = $region104
            $region101: #{e3egnn_forward.1} parent=96 // loop_body
              %v804 = vld [vmem:[%s802] sm:%s795]
              %805 = vst [vmem:[%s803] sm:%s795] %v804
            $region102: #{e3egnn_forward.1} parent=96 // loop_footer
              %s801 = sadd.s32 1, %s797
            $region103: #{e3egnn_forward.1} parent=96 // loop_footer_branch
              %796 = sbr.rel target = $region99
            $region104: #{e3egnn_forward.1} parent=96 // loop_exit
              _
          $region97: #{e3egnn_forward.1} parent=89 // pred_fallthru
            _
          // Predicated region
          $region120: #{e3egnn_forward.1} parent=89 // pred_check
            _
          $region121: #{e3egnn_forward.1} parent=89 // pred_check_branch
            %841 = sbr.rel (0) target = $region123
          $region122: #{e3egnn_forward.1} parent=89 // pred_region
            %842 = vsyncadd [#allocation4], 1024
          $region123: #{e3egnn_forward.1} parent=89 // pred_fallthru
            _
          %s843 = smul.u32 64, 1
          %s844 = sshll.u32 %s843, 4
          %845 = dma.done [#allocation4], %s844
      $region88: #{e3egnn_forward.1} parent=83 // pred_fallthru
        _
      // Predicated region
      $region124: #{e3egnn_forward.1} parent=83 // pred_check
        %p846 = pneg %p781
      $region125: #{e3egnn_forward.1} parent=83 // pred_check_branch
        %848 = sbr.rel (%p846) target = $region127
      $region126: #{e3egnn_forward.1} parent=83 // pred_region
        %vm849 = vcmask 113664
        %850 = vst.msk [vmem:[#allocation3] sm:$0xff] %vm849, 0.0
        %851 = vst.msk [vmem:[#allocation3 + $0x8] sm:$0xff] %vm849, 0.0
        %852 = vst.msk [vmem:[#allocation3 + $0x10] sm:$0xff] %vm849, 0.0
        %853 = vst.msk [vmem:[#allocation3 + $0x18] sm:$0xff] %vm849, 0.0
        %854 = vst.msk [vmem:[#allocation3 + $0x20] sm:$0xff] %vm849, 0.0
        %855 = vst.msk [vmem:[#allocation3 + $0x28] sm:$0xff] %vm849, 0.0
        %856 = vst.msk [vmem:[#allocation3 + $0x30] sm:$0xff] %vm849, 0.0
        %857 = vst.msk [vmem:[#allocation3 + $0x38] sm:$0xff] %vm849, 0.0
      $region127: #{e3egnn_forward.1} parent=83 // pred_fallthru
        _
      %v858 = vlaneseq
      %v859 = vand.u32 %v858, 127
      %vm860 = vcmp.ge.s32.totalorder %v859, 11
      %v861 = vsel %vm860, 1, 0
      %v862 = vcvt.s32.f32 %v861
      %v863 = vsub.f32 1.0, %v862
      %v864 = vld [vmem:[%s717] sm:$0xff]
      %v865 = vld [vmem:[%s717 + $0x8] sm:$0xff]
      %v866 = vld [vmem:[%s717 + $0x10] sm:$0xff]
      %v867 = vld [vmem:[%s717 + $0x18] sm:$0xff]
      %v868 = vld [vmem:[%s717 + $0x20] sm:$0xff]
      %v869 = vld [vmem:[%s717 + $0x28] sm:$0xff]
      %v870 = vld [vmem:[%s717 + $0x30] sm:$0xff]
      %v871 = vld [vmem:[%s717 + $0x38] sm:$0xff]
      %v872 = vld [vmem:[%s717 + $0x40] sm:$0xff]
      %v873 = vld [vmem:[%s717 + $0x48] sm:$0xff]
      %v874 = vld [vmem:[%s717 + $0x50] sm:$0xff]
      %v875 = vld [vmem:[%s717 + $0x58] sm:$0xff]
      %v876 = vld [vmem:[%s717 + $0x60] sm:$0xff]
      %v877 = vld [vmem:[%s717 + $0x68] sm:$0xff]
      %v878 = vld [vmem:[%s717 + $0x70] sm:$0xff]
      %v879 = vld [vmem:[%s717 + $0x78] sm:$0xff]
      %v880 = vld [vmem:[%s717 + $0x80] sm:$0xff]
      %v881 = vld [vmem:[%s717 + $0x88] sm:$0xff]
      %v882 = vld [vmem:[%s717 + $0x90] sm:$0xff]
      %v883 = vld [vmem:[%s717 + $0x98] sm:$0xff]
      %v884 = vld [vmem:[%s717 + $0xa0] sm:$0xff]
      %v885 = vld [vmem:[%s717 + $0xa8] sm:$0xff]
      %v886 = vld [vmem:[%s717 + $0xb0] sm:$0xff]
      %v887 = vld [vmem:[%s717 + $0xb8] sm:$0xff]
      %v888 = vld [vmem:[%s717 + $0xc0] sm:$0xff]
      %v889 = vld [vmem:[%s717 + $0xc8] sm:$0xff]
      %v890 = vld [vmem:[%s717 + $0xd0] sm:$0xff]
      %v891 = vld [vmem:[%s717 + $0xd8] sm:$0xff]
      %v892 = vld [vmem:[%s717 + $0xe0] sm:$0xff]
      %v893 = vld [vmem:[%s717 + $0xe8] sm:$0xff]
      %v894 = vld [vmem:[%s717 + $0xf0] sm:$0xff]
      %v895 = vld [vmem:[%s717 + $0xf8] sm:$0xff]
      %v896 = vld [vmem:[%s717 + $0x100] sm:$0xff]
      %v897 = vld [vmem:[%s717 + $0x108] sm:$0xff]
      %v898 = vld [vmem:[%s717 + $0x110] sm:$0xff]
      %v899 = vld [vmem:[%s717 + $0x118] sm:$0xff]
      %v900 = vld [vmem:[%s717 + $0x120] sm:$0xff]
      %v901 = vld [vmem:[%s717 + $0x128] sm:$0xff]
      %v902 = vld [vmem:[%s717 + $0x130] sm:$0xff]
      %v903 = vld [vmem:[%s717 + $0x138] sm:$0xff]
      %v904 = vld [vmem:[%s717 + $0x140] sm:$0xff]
      %v905 = vld [vmem:[%s717 + $0x148] sm:$0xff]
      %v906 = vld [vmem:[%s717 + $0x150] sm:$0xff]
      %v907 = vld [vmem:[%s717 + $0x158] sm:$0xff]
      %v908 = vld [vmem:[%s717 + $0x160] sm:$0xff]
      %v909 = vld [vmem:[%s717 + $0x168] sm:$0xff]
      %v910 = vld [vmem:[%s717 + $0x170] sm:$0xff]
      %v911 = vld [vmem:[%s717 + $0x178] sm:$0xff]
      %v912 = vld [vmem:[%s717 + $0x180] sm:$0xff]
      %v913 = vld [vmem:[%s717 + $0x188] sm:$0xff]
      %v914 = vld [vmem:[%s717 + $0x190] sm:$0xff]
      %v915 = vld [vmem:[%s717 + $0x198] sm:$0xff]
      %v916 = vld [vmem:[%s717 + $0x1a0] sm:$0xff]
      %v917 = vld [vmem:[%s717 + $0x1a8] sm:$0xff]
      %v918 = vld [vmem:[%s717 + $0x1b0] sm:$0xff]
      %v919 = vld [vmem:[%s717 + $0x1b8] sm:$0xff]
      %v920 = vld [vmem:[%s717 + $0x1c0] sm:$0xff]
      %v921 = vld [vmem:[%s717 + $0x1c8] sm:$0xff]
      %v922 = vld [vmem:[%s717 + $0x1d0] sm:$0xff]
      %v923 = vld [vmem:[%s717 + $0x1d8] sm:$0xff]
      %v924 = vld [vmem:[%s717 + $0x1e0] sm:$0xff]
      %v925 = vld [vmem:[%s717 + $0x1e8] sm:$0xff]
      %v926 = vld [vmem:[%s717 + $0x1f0] sm:$0xff]
      %v927 = vld [vmem:[%s717 + $0x1f8] sm:$0xff]
      %928 = vset.pattern.permute.xlu0 0
      %929 = vperm.xlu0 %928, %v864
      %v930 = vpop.permute.xlu0 %929
      %931 = vset.pattern.permute.xlu0 0
      %932 = vperm.xlu0 %931, %v865
      %v933 = vpop.permute.xlu0 %932
      %934 = vset.pattern.permute.xlu0 0
      %935 = vperm.xlu0 %934, %v866
      %v936 = vpop.permute.xlu0 %935
      %937 = vset.pattern.permute.xlu0 0
      %938 = vperm.xlu0 %937, %v867
      %v939 = vpop.permute.xlu0 %938
      %940 = vset.pattern.permute.xlu0 0
      %941 = vperm.xlu0 %940, %v868
      %v942 = vpop.permute.xlu0 %941
      %943 = vset.pattern.permute.xlu0 0
      %944 = vperm.xlu0 %943, %v869
      %v945 = vpop.permute.xlu0 %944
      %946 = vset.pattern.permute.xlu0 0
      %947 = vperm.xlu0 %946, %v870
      %v948 = vpop.permute.xlu0 %947
      %949 = vset.pattern.permute.xlu0 0
      %950 = vperm.xlu0 %949, %v871
      %v951 = vpop.permute.xlu0 %950
      %952 = vset.pattern.permute.xlu0 0
      %953 = vperm.xlu0 %952, %v872
      %v954 = vpop.permute.xlu0 %953
      %955 = vset.pattern.permute.xlu0 0
      %956 = vperm.xlu0 %955, %v873
      %v957 = vpop.permute.xlu0 %956
      %958 = vset.pattern.permute.xlu0 0
      %959 = vperm.xlu0 %958, %v874
      %v960 = vpop.permute.xlu0 %959
      %961 = vset.pattern.permute.xlu0 0
      %962 = vperm.xlu0 %961, %v875
      %v963 = vpop.permute.xlu0 %962
      %964 = vset.pattern.permute.xlu0 0
      %965 = vperm.xlu0 %964, %v876
      %v966 = vpop.permute.xlu0 %965
      %967 = vset.pattern.permute.xlu0 0
      %968 = vperm.xlu0 %967, %v877
      %v969 = vpop.permute.xlu0 %968
      %970 = vset.pattern.permute.xlu0 0
      %971 = vperm.xlu0 %970, %v878
      %v972 = vpop.permute.xlu0 %971
      %973 = vset.pattern.permute.xlu0 0
      %974 = vperm.xlu0 %973, %v879
      %v975 = vpop.permute.xlu0 %974
      %976 = vset.pattern.permute.xlu0 0
      %977 = vperm.xlu0 %976, %v880
      %v978 = vpop.permute.xlu0 %977
      %979 = vset.pattern.permute.xlu0 0
      %980 = vperm.xlu0 %979, %v881
      %v981 = vpop.permute.xlu0 %980
      %982 = vset.pattern.permute.xlu0 0
      %983 = vperm.xlu0 %982, %v882
      %v984 = vpop.permute.xlu0 %983
      %985 = vset.pattern.permute.xlu0 0
      %986 = vperm.xlu0 %985, %v883
      %v987 = vpop.permute.xlu0 %986
      %988 = vset.pattern.permute.xlu0 0
      %989 = vperm.xlu0 %988, %v884
      %v990 = vpop.permute.xlu0 %989
      %991 = vset.pattern.permute.xlu0 0
      %992 = vperm.xlu0 %991, %v885
      %v993 = vpop.permute.xlu0 %992
      %994 = vset.pattern.permute.xlu0 0
      %995 = vperm.xlu0 %994, %v886
      %v996 = vpop.permute.xlu0 %995
      %997 = vset.pattern.permute.xlu0 0
      %998 = vperm.xlu0 %997, %v887
      %v999 = vpop.permute.xlu0 %998
      %1000 = vset.pattern.permute.xlu0 0
      %1001 = vperm.xlu0 %1000, %v888
      %v1002 = vpop.permute.xlu0 %1001
      %1003 = vset.pattern.permute.xlu0 0
      %1004 = vperm.xlu0 %1003, %v889
      %v1005 = vpop.permute.xlu0 %1004
      %1006 = vset.pattern.permute.xlu0 0
      %1007 = vperm.xlu0 %1006, %v890
      %v1008 = vpop.permute.xlu0 %1007
      %1009 = vset.pattern.permute.xlu0 0
      %1010 = vperm.xlu0 %1009, %v891
      %v1011 = vpop.permute.xlu0 %1010
      %1012 = vset.pattern.permute.xlu0 0
      %1013 = vperm.xlu0 %1012, %v892
      %v1014 = vpop.permute.xlu0 %1013
      %1015 = vset.pattern.permute.xlu0 0
      %1016 = vperm.xlu0 %1015, %v893
      %v1017 = vpop.permute.xlu0 %1016
      %1018 = vset.pattern.permute.xlu0 0
      %1019 = vperm.xlu0 %1018, %v894
      %v1020 = vpop.permute.xlu0 %1019
      %1021 = vset.pattern.permute.xlu0 0
      %1022 = vperm.xlu0 %1021, %v895
      %v1023 = vpop.permute.xlu0 %1022
      %1024 = vset.pattern.permute.xlu0 0
      %1025 = vperm.xlu0 %1024, %v896
      %v1026 = vpop.permute.xlu0 %1025
      %1027 = vset.pattern.permute.xlu0 0
      %1028 = vperm.xlu0 %1027, %v897
      %v1029 = vpop.permute.xlu0 %1028
      %1030 = vset.pattern.permute.xlu0 0
      %1031 = vperm.xlu0 %1030, %v898
      %v1032 = vpop.permute.xlu0 %1031
      %1033 = vset.pattern.permute.xlu0 0
      %1034 = vperm.xlu0 %1033, %v899
      %v1035 = vpop.permute.xlu0 %1034
      %1036 = vset.pattern.permute.xlu0 0
      %1037 = vperm.xlu0 %1036, %v900
      %v1038 = vpop.permute.xlu0 %1037
      %1039 = vset.pattern.permute.xlu0 0
      %1040 = vperm.xlu0 %1039, %v901
      %v1041 = vpop.permute.xlu0 %1040
      %1042 = vset.pattern.permute.xlu0 0
      %1043 = vperm.xlu0 %1042, %v902
      %v1044 = vpop.permute.xlu0 %1043
      %1045 = vset.pattern.permute.xlu0 0
      %1046 = vperm.xlu0 %1045, %v903
      %v1047 = vpop.permute.xlu0 %1046
      %1048 = vset.pattern.permute.xlu0 0
      %1049 = vperm.xlu0 %1048, %v904
      %v1050 = vpop.permute.xlu0 %1049
      %1051 = vset.pattern.permute.xlu0 0
      %1052 = vperm.xlu0 %1051, %v905
      %v1053 = vpop.permute.xlu0 %1052
      %1054 = vset.pattern.permute.xlu0 0
      %1055 = vperm.xlu0 %1054, %v906
      %v1056 = vpop.permute.xlu0 %1055
      %1057 = vset.pattern.permute.xlu0 0
      %1058 = vperm.xlu0 %1057, %v907
      %v1059 = vpop.permute.xlu0 %1058
      %1060 = vset.pattern.permute.xlu0 0
      %1061 = vperm.xlu0 %1060, %v908
      %v1062 = vpop.permute.xlu0 %1061
      %1063 = vset.pattern.permute.xlu0 0
      %1064 = vperm.xlu0 %1063, %v909
      %v1065 = vpop.permute.xlu0 %1064
      %1066 = vset.pattern.permute.xlu0 0
      %1067 = vperm.xlu0 %1066, %v910
      %v1068 = vpop.permute.xlu0 %1067
      %1069 = vset.pattern.permute.xlu0 0
      %1070 = vperm.xlu0 %1069, %v911
      %v1071 = vpop.permute.xlu0 %1070
      %1072 = vset.pattern.permute.xlu0 0
      %1073 = vperm.xlu0 %1072, %v912
      %v1074 = vpop.permute.xlu0 %1073
      %1075 = vset.pattern.permute.xlu0 0
      %1076 = vperm.xlu0 %1075, %v913
      %v1077 = vpop.permute.xlu0 %1076
      %1078 = vset.pattern.permute.xlu0 0
      %1079 = vperm.xlu0 %1078, %v914
      %v1080 = vpop.permute.xlu0 %1079
      %1081 = vset.pattern.permute.xlu0 0
      %1082 = vperm.xlu0 %1081, %v915
      %v1083 = vpop.permute.xlu0 %1082
      %1084 = vset.pattern.permute.xlu0 0
      %1085 = vperm.xlu0 %1084, %v916
      %v1086 = vpop.permute.xlu0 %1085
      %1087 = vset.pattern.permute.xlu0 0
      %1088 = vperm.xlu0 %1087, %v917
      %v1089 = vpop.permute.xlu0 %1088
      %1090 = vset.pattern.permute.xlu0 0
      %1091 = vperm.xlu0 %1090, %v918
      %v1092 = vpop.permute.xlu0 %1091
      %1093 = vset.pattern.permute.xlu0 0
      %1094 = vperm.xlu0 %1093, %v919
      %v1095 = vpop.permute.xlu0 %1094
      %1096 = vset.pattern.permute.xlu0 0
      %1097 = vperm.xlu0 %1096, %v920
      %v1098 = vpop.permute.xlu0 %1097
      %1099 = vset.pattern.permute.xlu0 0
      %1100 = vperm.xlu0 %1099, %v921
      %v1101 = vpop.permute.xlu0 %1100
      %1102 = vset.pattern.permute.xlu0 0
      %1103 = vperm.xlu0 %1102, %v922
      %v1104 = vpop.permute.xlu0 %1103
      %1105 = vset.pattern.permute.xlu0 0
      %1106 = vperm.xlu0 %1105, %v923
      %v1107 = vpop.permute.xlu0 %1106
      %1108 = vset.pattern.permute.xlu0 0
      %1109 = vperm.xlu0 %1108, %v924
      %v1110 = vpop.permute.xlu0 %1109
      %1111 = vset.pattern.permute.xlu0 0
      %1112 = vperm.xlu0 %1111, %v925
      %v1113 = vpop.permute.xlu0 %1112
      %1114 = vset.pattern.permute.xlu0 0
      %1115 = vperm.xlu0 %1114, %v926
      %v1116 = vpop.permute.xlu0 %1115
      %1117 = vset.pattern.permute.xlu0 0
      %1118 = vperm.xlu0 %1117, %v927
      %v1119 = vpop.permute.xlu0 %1118
      %vm1120 = vcmp.eq.s32.totalorder %v859, %v930
      %vm1121 = vcmp.eq.s32.totalorder %v859, %v933
      %vm1122 = vcmp.eq.s32.totalorder %v859, %v936
      %vm1123 = vcmp.eq.s32.totalorder %v859, %v939
      %vm1124 = vcmp.eq.s32.totalorder %v859, %v942
      %vm1125 = vcmp.eq.s32.totalorder %v859, %v945
      %vm1126 = vcmp.eq.s32.totalorder %v859, %v948
      %vm1127 = vcmp.eq.s32.totalorder %v859, %v951
      %vm1128 = vcmp.eq.s32.totalorder %v859, %v954
      %vm1129 = vcmp.eq.s32.totalorder %v859, %v957
      %vm1130 = vcmp.eq.s32.totalorder %v859, %v960
      %vm1131 = vcmp.eq.s32.totalorder %v859, %v963
      %vm1132 = vcmp.eq.s32.totalorder %v859, %v966
      %vm1133 = vcmp.eq.s32.totalorder %v859, %v969
      %vm1134 = vcmp.eq.s32.totalorder %v859, %v972
      %vm1135 = vcmp.eq.s32.totalorder %v859, %v975
      %vm1136 = vcmp.eq.s32.totalorder %v859, %v978
      %vm1137 = vcmp.eq.s32.totalorder %v859, %v981
      %vm1138 = vcmp.eq.s32.totalorder %v859, %v984
      %vm1139 = vcmp.eq.s32.totalorder %v859, %v987
      %vm1140 = vcmp.eq.s32.totalorder %v859, %v990
      %vm1141 = vcmp.eq.s32.totalorder %v859, %v993
      %vm1142 = vcmp.eq.s32.totalorder %v859, %v996
      %vm1143 = vcmp.eq.s32.totalorder %v859, %v999
      %vm1144 = vcmp.eq.s32.totalorder %v859, %v1002
      %vm1145 = vcmp.eq.s32.totalorder %v859, %v1005
      %vm1146 = vcmp.eq.s32.totalorder %v859, %v1008
      %vm1147 = vcmp.eq.s32.totalorder %v859, %v1011
      %vm1148 = vcmp.eq.s32.totalorder %v859, %v1014
      %vm1149 = vcmp.eq.s32.totalorder %v859, %v1017
      %vm1150 = vcmp.eq.s32.totalorder %v859, %v1020
      %vm1151 = vcmp.eq.s32.totalorder %v859, %v1023
      %vm1152 = vcmp.eq.s32.totalorder %v859, %v1026
      %vm1153 = vcmp.eq.s32.totalorder %v859, %v1029
      %vm1154 = vcmp.eq.s32.totalorder %v859, %v1032
      %vm1155 = vcmp.eq.s32.totalorder %v859, %v1035
      %vm1156 = vcmp.eq.s32.totalorder %v859, %v1038
      %vm1157 = vcmp.eq.s32.totalorder %v859, %v1041
      %vm1158 = vcmp.eq.s32.totalorder %v859, %v1044
      %vm1159 = vcmp.eq.s32.totalorder %v859, %v1047
      %vm1160 = vcmp.eq.s32.totalorder %v859, %v1050
      %vm1161 = vcmp.eq.s32.totalorder %v859, %v1053
      %vm1162 = vcmp.eq.s32.totalorder %v859, %v1056
      %vm1163 = vcmp.eq.s32.totalorder %v859, %v1059
      %vm1164 = vcmp.eq.s32.totalorder %v859, %v1062
      %vm1165 = vcmp.eq.s32.totalorder %v859, %v1065
      %vm1166 = vcmp.eq.s32.totalorder %v859, %v1068
      %vm1167 = vcmp.eq.s32.totalorder %v859, %v1071
      %vm1168 = vcmp.eq.s32.totalorder %v859, %v1074
      %vm1169 = vcmp.eq.s32.totalorder %v859, %v1077
      %vm1170 = vcmp.eq.s32.totalorder %v859, %v1080
      %vm1171 = vcmp.eq.s32.totalorder %v859, %v1083
      %vm1172 = vcmp.eq.s32.totalorder %v859, %v1086
      %vm1173 = vcmp.eq.s32.totalorder %v859, %v1089
      %vm1174 = vcmp.eq.s32.totalorder %v859, %v1092
      %vm1175 = vcmp.eq.s32.totalorder %v859, %v1095
      %vm1176 = vcmp.eq.s32.totalorder %v859, %v1098
      %vm1177 = vcmp.eq.s32.totalorder %v859, %v1101
      %vm1178 = vcmp.eq.s32.totalorder %v859, %v1104
      %vm1179 = vcmp.eq.s32.totalorder %v859, %v1107
      %vm1180 = vcmp.eq.s32.totalorder %v859, %v1110
      %vm1181 = vcmp.eq.s32.totalorder %v859, %v1113
      %vm1182 = vcmp.eq.s32.totalorder %v859, %v1116
      %vm1183 = vcmp.eq.s32.totalorder %v859, %v1119
      %v1184 = vsel %vm1120, 1, 0
      %v1185 = vsel %vm1121, 1, 0
      %v1186 = vsel %vm1122, 1, 0
      %v1187 = vsel %vm1123, 1, 0
      %v1188 = vsel %vm1124, 1, 0
      %v1189 = vsel %vm1125, 1, 0
      %v1190 = vsel %vm1126, 1, 0
      %v1191 = vsel %vm1127, 1, 0
      %v1192 = vsel %vm1128, 1, 0
      %v1193 = vsel %vm1129, 1, 0
      %v1194 = vsel %vm1130, 1, 0
      %v1195 = vsel %vm1131, 1, 0
      %v1196 = vsel %vm1132, 1, 0
      %v1197 = vsel %vm1133, 1, 0
      %v1198 = vsel %vm1134, 1, 0
      %v1199 = vsel %vm1135, 1, 0
      %v1200 = vsel %vm1136, 1, 0
      %v1201 = vsel %vm1137, 1, 0
      %v1202 = vsel %vm1138, 1, 0
      %v1203 = vsel %vm1139, 1, 0
      %v1204 = vsel %vm1140, 1, 0
      %v1205 = vsel %vm1141, 1, 0
      %v1206 = vsel %vm1142, 1, 0
      %v1207 = vsel %vm1143, 1, 0
      %v1208 = vsel %vm1144, 1, 0
      %v1209 = vsel %vm1145, 1, 0
      %v1210 = vsel %vm1146, 1, 0
      %v1211 = vsel %vm1147, 1, 0
      %v1212 = vsel %vm1148, 1, 0
      %v1213 = vsel %vm1149, 1, 0
      %v1214 = vsel %vm1150, 1, 0
      %v1215 = vsel %vm1151, 1, 0
      %v1216 = vsel %vm1152, 1, 0
      %v1217 = vsel %vm1153, 1, 0
      %v1218 = vsel %vm1154, 1, 0
      %v1219 = vsel %vm1155, 1, 0
      %v1220 = vsel %vm1156, 1, 0
      %v1221 = vsel %vm1157, 1, 0
      %v1222 = vsel %vm1158, 1, 0
      %v1223 = vsel %vm1159, 1, 0
      %v1224 = vsel %vm1160, 1, 0
      %v1225 = vsel %vm1161, 1, 0
      %v1226 = vsel %vm1162, 1, 0
      %v1227 = vsel %vm1163, 1, 0
      %v1228 = vsel %vm1164, 1, 0
      %v1229 = vsel %vm1165, 1, 0
      %v1230 = vsel %vm1166, 1, 0
      %v1231 = vsel %vm1167, 1, 0
      %v1232 = vsel %vm1168, 1, 0
      %v1233 = vsel %vm1169, 1, 0
      %v1234 = vsel %vm1170, 1, 0
      %v1235 = vsel %vm1171, 1, 0
      %v1236 = vsel %vm1172, 1, 0
      %v1237 = vsel %vm1173, 1, 0
      %v1238 = vsel %vm1174, 1, 0
      %v1239 = vsel %vm1175, 1, 0
      %v1240 = vsel %vm1176, 1, 0
      %v1241 = vsel %vm1177, 1, 0
      %v1242 = vsel %vm1178, 1, 0
      %v1243 = vsel %vm1179, 1, 0
      %v1244 = vsel %vm1180, 1, 0
      %v1245 = vsel %vm1181, 1, 0
      %v1246 = vsel %vm1182, 1, 0
      %v1247 = vsel %vm1183, 1, 0
      %v1248 = vcvt.s32.f32 %v1184
      %v1249 = vcvt.s32.f32 %v1185
      %v1250 = vcvt.s32.f32 %v1186
      %v1251 = vcvt.s32.f32 %v1187
      %v1252 = vcvt.s32.f32 %v1188
      %v1253 = vcvt.s32.f32 %v1189
      %v1254 = vcvt.s32.f32 %v1190
      %v1255 = vcvt.s32.f32 %v1191
      %v1256 = vcvt.s32.f32 %v1192
      %v1257 = vcvt.s32.f32 %v1193
      %v1258 = vcvt.s32.f32 %v1194
      %v1259 = vcvt.s32.f32 %v1195
      %v1260 = vcvt.s32.f32 %v1196
      %v1261 = vcvt.s32.f32 %v1197
      %v1262 = vcvt.s32.f32 %v1198
      %v1263 = vcvt.s32.f32 %v1199
      %v1264 = vcvt.s32.f32 %v1200
      %v1265 = vcvt.s32.f32 %v1201
      %v1266 = vcvt.s32.f32 %v1202
      %v1267 = vcvt.s32.f32 %v1203
      %v1268 = vcvt.s32.f32 %v1204
      %v1269 = vcvt.s32.f32 %v1205
      %v1270 = vcvt.s32.f32 %v1206
      %v1271 = vcvt.s32.f32 %v1207
      %v1272 = vcvt.s32.f32 %v1208
      %v1273 = vcvt.s32.f32 %v1209
      %v1274 = vcvt.s32.f32 %v1210
      %v1275 = vcvt.s32.f32 %v1211
      %v1276 = vcvt.s32.f32 %v1212
      %v1277 = vcvt.s32.f32 %v1213
      %v1278 = vcvt.s32.f32 %v1214
      %v1279 = vcvt.s32.f32 %v1215
      %v1280 = vcvt.s32.f32 %v1216
      %v1281 = vcvt.s32.f32 %v1217
      %v1282 = vcvt.s32.f32 %v1218
      %v1283 = vcvt.s32.f32 %v1219
      %v1284 = vcvt.s32.f32 %v1220
      %v1285 = vcvt.s32.f32 %v1221
      %v1286 = vcvt.s32.f32 %v1222
      %v1287 = vcvt.s32.f32 %v1223
      %v1288 = vcvt.s32.f32 %v1224
      %v1289 = vcvt.s32.f32 %v1225
      %v1290 = vcvt.s32.f32 %v1226
      %v1291 = vcvt.s32.f32 %v1227
      %v1292 = vcvt.s32.f32 %v1228
      %v1293 = vcvt.s32.f32 %v1229
      %v1294 = vcvt.s32.f32 %v1230
      %v1295 = vcvt.s32.f32 %v1231
      %v1296 = vcvt.s32.f32 %v1232
      %v1297 = vcvt.s32.f32 %v1233
      %v1298 = vcvt.s32.f32 %v1234
      %v1299 = vcvt.s32.f32 %v1235
      %v1300 = vcvt.s32.f32 %v1236
      %v1301 = vcvt.s32.f32 %v1237
      %v1302 = vcvt.s32.f32 %v1238
      %v1303 = vcvt.s32.f32 %v1239
      %v1304 = vcvt.s32.f32 %v1240
      %v1305 = vcvt.s32.f32 %v1241
      %v1306 = vcvt.s32.f32 %v1242
      %v1307 = vcvt.s32.f32 %v1243
      %v1308 = vcvt.s32.f32 %v1244
      %v1309 = vcvt.s32.f32 %v1245
      %v1310 = vcvt.s32.f32 %v1246
      %v1311 = vcvt.s32.f32 %v1247
      %v1312 = vld [vmem:[#allocation2] sm:$0xff]
      %v1313 = vld [vmem:[#allocation2 + $0x8] sm:$0xff]
      %v1314 = vld [vmem:[#allocation2 + $0x10] sm:$0xff]
      %v1315 = vld [vmem:[#allocation2 + $0x18] sm:$0xff]
      %v1316 = vld [vmem:[#allocation2 + $0x20] sm:$0xff]
      %v1317 = vld [vmem:[#allocation2 + $0x28] sm:$0xff]
      %v1318 = vld [vmem:[#allocation2 + $0x30] sm:$0xff]
      %v1319 = vld [vmem:[#allocation2 + $0x38] sm:$0xff]
      %vm1320 = vcmask 523264
      %v1322 = vsel %vm1320, %v1248, 0
      %v1325 = vsel %vm1320, %v1249, 0
      %v1328 = vsel %vm1320, %v1250, 0
      %v1331 = vsel %vm1320, %v1251, 0
      %v1334 = vsel %vm1320, %v1252, 0
      %v1337 = vsel %vm1320, %v1253, 0
      %v1340 = vsel %vm1320, %v1254, 0
      %v1343 = vsel %vm1320, %v1255, 0
      %v1346 = vsel %vm1320, %v1256, 0
      %v1349 = vsel %vm1320, %v1257, 0
      %v1352 = vsel %vm1320, %v1258, 0
      %v1355 = vsel %vm1320, %v1259, 0
      %v1358 = vsel %vm1320, %v1260, 0
      %v1361 = vsel %vm1320, %v1261, 0
      %v1364 = vsel %vm1320, %v1262, 0
      %v1367 = vsel %vm1320, %v1263, 0
      %v1370 = vsel %vm1320, %v1264, 0
      %v1373 = vsel %vm1320, %v1265, 0
      %v1376 = vsel %vm1320, %v1266, 0
      %v1379 = vsel %vm1320, %v1267, 0
      %v1382 = vsel %vm1320, %v1268, 0
      %v1385 = vsel %vm1320, %v1269, 0
      %v1388 = vsel %vm1320, %v1270, 0
      %v1391 = vsel %vm1320, %v1271, 0
      %v1394 = vsel %vm1320, %v1272, 0
      %v1397 = vsel %vm1320, %v1273, 0
      %v1400 = vsel %vm1320, %v1274, 0
      %v1403 = vsel %vm1320, %v1275, 0
      %v1406 = vsel %vm1320, %v1276, 0
      %v1409 = vsel %vm1320, %v1277, 0
      %v1412 = vsel %vm1320, %v1278, 0
      %v1415 = vsel %vm1320, %v1279, 0
      %v1418 = vsel %vm1320, %v1280, 0
      %v1421 = vsel %vm1320, %v1281, 0
      %v1424 = vsel %vm1320, %v1282, 0
      %v1427 = vsel %vm1320, %v1283, 0
      %v1430 = vsel %vm1320, %v1284, 0
      %v1433 = vsel %vm1320, %v1285, 0
      %v1436 = vsel %vm1320, %v1286, 0
      %v1439 = vsel %vm1320, %v1287, 0
      %v1442 = vsel %vm1320, %v1288, 0
      %v1445 = vsel %vm1320, %v1289, 0
      %v1448 = vsel %vm1320, %v1290, 0
      %v1451 = vsel %vm1320, %v1291, 0
      %v1454 = vsel %vm1320, %v1292, 0
      %v1457 = vsel %vm1320, %v1293, 0
      %v1460 = vsel %vm1320, %v1294, 0
      %v1463 = vsel %vm1320, %v1295, 0
      %v1466 = vsel %vm1320, %v1296, 0
      %v1469 = vsel %vm1320, %v1297, 0
      %v1472 = vsel %vm1320, %v1298, 0
      %v1475 = vsel %vm1320, %v1299, 0
      %v1478 = vsel %vm1320, %v1300, 0
      %v1481 = vsel %vm1320, %v1301, 0
      %v1484 = vsel %vm1320, %v1302, 0
      %v1487 = vsel %vm1320, %v1303, 0
      %v1490 = vsel %vm1320, %v1304, 0
      %v1493 = vsel %vm1320, %v1305, 0
      %v1496 = vsel %vm1320, %v1306, 0
      %v1499 = vsel %vm1320, %v1307, 0
      %v1502 = vsel %vm1320, %v1308, 0
      %v1505 = vsel %vm1320, %v1309, 0
      %v1508 = vsel %vm1320, %v1310, 0
      %v1511 = vsel %vm1320, %v1311, 0
      %1513 = vmatprep.subr.mxu0 0.0
      %1514 = vmatpush1.msra.mxu0 0.0
      %1515 = vmatprep.subr.mxu0 0.0
      %1516 = vmatpush1.msra.mxu0 0.0
      %1517 = vmatprep.subr.mxu0 0.0
      %1518 = vmatpush1.msra.mxu0 0.0
      %1519 = vmatprep.subr.mxu0 0.0
      %1520 = vmatpush1.msra.mxu0 0.0
      %1521 = vmatprep.subr.mxu0 0.0
      %1522 = vmatpush1.msra.mxu0 0.0
      %1523 = vmatprep.subr.mxu0 0.0
      %1524 = vmatpush1.msra.mxu0 0.0
      %1525 = vmatprep.subr.mxu0 0.0
      %1526 = vmatpush1.msra.mxu0 0.0
      %1527 = vmatprep.subr.mxu0 0.0
      %1528 = vmatpush1.msra.mxu0 0.0
      %1529 = vmatprep.subr.mxu0 0.0
      %1530 = vmatpush1.msra.mxu0 %v1319
      %1531 = vmatprep.subr.mxu0 0.0
      %1532 = vmatpush1.msra.mxu0 %v1318
      %1533 = vmatprep.subr.mxu0 0.0
      %1534 = vmatpush1.msra.mxu0 %v1317
      %1535 = vmatprep.subr.mxu0 0.0
      %1536 = vmatpush1.msra.mxu0 %v1316
      %1537 = vmatprep.subr.mxu0 0.0
      %1538 = vmatpush1.msra.mxu0 %v1315
      %1539 = vmatprep.subr.mxu0 0.0
      %1540 = vmatpush1.msra.mxu0 %v1314
      %1541 = vmatprep.subr.mxu0 0.0
      %1542 = vmatpush1.msra.mxu0 %v1313
      %1543 = vmatprep.subr.mxu0 0.0
      %1544 = vmatpush1.msra.mxu0 %v1312
      %1545 = vmatprep.subr.mxu0 0.0
      %1546 = vmatpush2.msra.mxu0 0.0
      %1547 = vmatprep.subr.mxu0 0.0
      %1548 = vmatpush2.msra.mxu0 0.0
      %1549 = vmatprep.subr.mxu0 0.0
      %1550 = vmatpush2.msra.mxu0 0.0
      %1551 = vmatprep.subr.mxu0 0.0
      %1552 = vmatpush2.msra.mxu0 0.0
      %1553 = vmatprep.subr.mxu0 0.0
      %1554 = vmatpush2.msra.mxu0 0.0
      %1555 = vmatprep.subr.mxu0 0.0
      %1556 = vmatpush2.msra.mxu0 0.0
      %1557 = vmatprep.subr.mxu0 0.0
      %1558 = vmatpush2.msra.mxu0 0.0
      %1559 = vmatprep.subr.mxu0 0.0
      %1560 = vmatpush2.msra.mxu0 0.0
      %1561 = vmatprep.subr.mxu0 0.0
      %1562 = vmatpush2.msra.mxu0 0.0
      %1563 = vmatprep.subr.mxu0 0.0
      %1564 = vmatpush2.msra.mxu0 0.0
      %1565 = vmatprep.subr.mxu0 0.0
      %1566 = vmatpush2.msra.mxu0 0.0
      %1567 = vmatprep.subr.mxu0 0.0
      %1568 = vmatpush2.msra.mxu0 0.0
      %1569 = vmatprep.subr.mxu0 0.0
      %1570 = vmatpush2.msra.mxu0 0.0
      %1571 = vmatprep.subr.mxu0 0.0
      %1572 = vmatpush2.msra.mxu0 0.0
      %1573 = vmatprep.subr.mxu0 0.0
      %1574 = vmatpush2.msra.mxu0 0.0
      %1575 = vmatprep.subr.mxu0 0.0
      %1576 = vmatpush2.msra.mxu0 0.0
      %1577 = vmatprep.mubr.f32.mxu0 0.0
      %1578 = vmatmul.mubr.f32.gmra.mxu0 %v1322
      %v1579 = vpop.f32.mrf.mxu0
      %v1580 = vadd.f32 0.0, %v1579
      %v1581 = vpop.f32.mrf.mxu0
      %1582 = vmatprep.mubr.f32.mxu0 0.0
      %1583 = vmatmul.mubr.f32.gmra.mxu0 %v1325
      %v1584 = vpop.f32.mrf.mxu0
      %v1585 = vadd.f32 0.0, %v1584
      %v1586 = vpop.f32.mrf.mxu0
      %1587 = vmatprep.mubr.f32.mxu0 0.0
      %1588 = vmatmul.mubr.f32.gmra.mxu0 %v1328
      %v1589 = vpop.f32.mrf.mxu0
      %v1590 = vadd.f32 0.0, %v1589
      %v1591 = vpop.f32.mrf.mxu0
      %1592 = vmatprep.mubr.f32.mxu0 0.0
      %1593 = vmatmul.mubr.f32.gmra.mxu0 %v1331
      %v1594 = vpop.f32.mrf.mxu0
      %v1595 = vadd.f32 0.0, %v1594
      %v1596 = vpop.f32.mrf.mxu0
      %1597 = vmatprep.mubr.f32.mxu0 0.0
      %1598 = vmatmul.mubr.f32.gmra.mxu0 %v1334
      %v1599 = vpop.f32.mrf.mxu0
      %v1600 = vadd.f32 0.0, %v1599
      %v1601 = vpop.f32.mrf.mxu0
      %1602 = vmatprep.mubr.f32.mxu0 0.0
      %1603 = vmatmul.mubr.f32.gmra.mxu0 %v1337
      %v1604 = vpop.f32.mrf.mxu0
      %v1605 = vadd.f32 0.0, %v1604
      %v1606 = vpop.f32.mrf.mxu0
      %1607 = vmatprep.mubr.f32.mxu0 0.0
      %1608 = vmatmul.mubr.f32.gmra.mxu0 %v1340
      %v1609 = vpop.f32.mrf.mxu0
      %v1610 = vadd.f32 0.0, %v1609
      %v1611 = vpop.f32.mrf.mxu0
      %1612 = vmatprep.mubr.f32.mxu0 0.0
      %1613 = vmatmul.mubr.f32.gmra.mxu0 %v1343
      %v1614 = vpop.f32.mrf.mxu0
      %v1615 = vadd.f32 0.0, %v1614
      %v1616 = vpop.f32.mrf.mxu0
      %1617 = vmatprep.mubr.f32.mxu0 0.0
      %1618 = vmatmul.mubr.f32.gmra.mxu0 %v1346
      %v1619 = vpop.f32.mrf.mxu0
      %v1620 = vadd.f32 0.0, %v1619
      %v1621 = vpop.f32.mrf.mxu0
      %1622 = vmatprep.mubr.f32.mxu0 0.0
      %1623 = vmatmul.mubr.f32.gmra.mxu0 %v1349
      %v1624 = vpop.f32.mrf.mxu0
      %v1625 = vadd.f32 0.0, %v1624
      %v1626 = vpop.f32.mrf.mxu0
      %1627 = vmatprep.mubr.f32.mxu0 0.0
      %1628 = vmatmul.mubr.f32.gmra.mxu0 %v1352
      %v1629 = vpop.f32.mrf.mxu0
      %v1630 = vadd.f32 0.0, %v1629
      %v1631 = vpop.f32.mrf.mxu0
      %1632 = vmatprep.mubr.f32.mxu0 0.0
      %1633 = vmatmul.mubr.f32.gmra.mxu0 %v1355
      %v1634 = vpop.f32.mrf.mxu0
      %v1635 = vadd.f32 0.0, %v1634
      %v1636 = vpop.f32.mrf.mxu0
      %1637 = vmatprep.mubr.f32.mxu0 0.0
      %1638 = vmatmul.mubr.f32.gmra.mxu0 %v1358
      %v1639 = vpop.f32.mrf.mxu0
      %v1640 = vadd.f32 0.0, %v1639
      %v1641 = vpop.f32.mrf.mxu0
      %1642 = vmatprep.mubr.f32.mxu0 0.0
      %1643 = vmatmul.mubr.f32.gmra.mxu0 %v1361
      %v1644 = vpop.f32.mrf.mxu0
      %v1645 = vadd.f32 0.0, %v1644
      %v1646 = vpop.f32.mrf.mxu0
      %1647 = vmatprep.mubr.f32.mxu0 0.0
      %1648 = vmatmul.mubr.f32.gmra.mxu0 %v1364
      %v1649 = vpop.f32.mrf.mxu0
      %v1650 = vadd.f32 0.0, %v1649
      %v1651 = vpop.f32.mrf.mxu0
      %1652 = vmatprep.mubr.f32.mxu0 0.0
      %1653 = vmatmul.mubr.f32.gmra.mxu0 %v1367
      %v1654 = vpop.f32.mrf.mxu0
      %v1655 = vadd.f32 0.0, %v1654
      %v1656 = vpop.f32.mrf.mxu0
      %1657 = vmatprep.mubr.f32.mxu0 0.0
      %1658 = vmatmul.mubr.f32.gmra.mxu0 %v1370
      %v1659 = vpop.f32.mrf.mxu0
      %v1660 = vadd.f32 0.0, %v1659
      %v1661 = vpop.f32.mrf.mxu0
      %1662 = vmatprep.mubr.f32.mxu0 0.0
      %1663 = vmatmul.mubr.f32.gmra.mxu0 %v1373
      %v1664 = vpop.f32.mrf.mxu0
      %v1665 = vadd.f32 0.0, %v1664
      %v1666 = vpop.f32.mrf.mxu0
      %1667 = vmatprep.mubr.f32.mxu0 0.0
      %1668 = vmatmul.mubr.f32.gmra.mxu0 %v1376
      %v1669 = vpop.f32.mrf.mxu0
      %v1670 = vadd.f32 0.0, %v1669
      %v1671 = vpop.f32.mrf.mxu0
      %1672 = vmatprep.mubr.f32.mxu0 0.0
      %1673 = vmatmul.mubr.f32.gmra.mxu0 %v1379
      %v1674 = vpop.f32.mrf.mxu0
      %v1675 = vadd.f32 0.0, %v1674
      %v1676 = vpop.f32.mrf.mxu0
      %1677 = vmatprep.mubr.f32.mxu0 0.0
      %1678 = vmatmul.mubr.f32.gmra.mxu0 %v1382
      %v1679 = vpop.f32.mrf.mxu0
      %v1680 = vadd.f32 0.0, %v1679
      %v1681 = vpop.f32.mrf.mxu0
      %1682 = vmatprep.mubr.f32.mxu0 0.0
      %1683 = vmatmul.mubr.f32.gmra.mxu0 %v1385
      %v1684 = vpop.f32.mrf.mxu0
      %v1685 = vadd.f32 0.0, %v1684
      %v1686 = vpop.f32.mrf.mxu0
      %1687 = vmatprep.mubr.f32.mxu0 0.0
      %1688 = vmatmul.mubr.f32.gmra.mxu0 %v1388
      %v1689 = vpop.f32.mrf.mxu0
      %v1690 = vadd.f32 0.0, %v1689
      %v1691 = vpop.f32.mrf.mxu0
      %1692 = vmatprep.mubr.f32.mxu0 0.0
      %1693 = vmatmul.mubr.f32.gmra.mxu0 %v1391
      %v1694 = vpop.f32.mrf.mxu0
      %v1695 = vadd.f32 0.0, %v1694
      %v1696 = vpop.f32.mrf.mxu0
      %1697 = vmatprep.mubr.f32.mxu0 0.0
      %1698 = vmatmul.mubr.f32.gmra.mxu0 %v1394
      %v1699 = vpop.f32.mrf.mxu0
      %v1700 = vadd.f32 0.0, %v1699
      %v1701 = vpop.f32.mrf.mxu0
      %1702 = vmatprep.mubr.f32.mxu0 0.0
      %1703 = vmatmul.mubr.f32.gmra.mxu0 %v1397
      %v1704 = vpop.f32.mrf.mxu0
      %v1705 = vadd.f32 0.0, %v1704
      %v1706 = vpop.f32.mrf.mxu0
      %1707 = vmatprep.mubr.f32.mxu0 0.0
      %1708 = vmatmul.mubr.f32.gmra.mxu0 %v1400
      %v1709 = vpop.f32.mrf.mxu0
      %v1710 = vadd.f32 0.0, %v1709
      %v1711 = vpop.f32.mrf.mxu0
      %1712 = vmatprep.mubr.f32.mxu0 0.0
      %1713 = vmatmul.mubr.f32.gmra.mxu0 %v1403
      %v1714 = vpop.f32.mrf.mxu0
      %v1715 = vadd.f32 0.0, %v1714
      %v1716 = vpop.f32.mrf.mxu0
      %1717 = vmatprep.mubr.f32.mxu0 0.0
      %1718 = vmatmul.mubr.f32.gmra.mxu0 %v1406
      %v1719 = vpop.f32.mrf.mxu0
      %v1720 = vadd.f32 0.0, %v1719
      %v1721 = vpop.f32.mrf.mxu0
      %1722 = vmatprep.mubr.f32.mxu0 0.0
      %1723 = vmatmul.mubr.f32.gmra.mxu0 %v1409
      %v1724 = vpop.f32.mrf.mxu0
      %v1725 = vadd.f32 0.0, %v1724
      %v1726 = vpop.f32.mrf.mxu0
      %1727 = vmatprep.mubr.f32.mxu0 0.0
      %1728 = vmatmul.mubr.f32.gmra.mxu0 %v1412
      %v1729 = vpop.f32.mrf.mxu0
      %v1730 = vadd.f32 0.0, %v1729
      %v1731 = vpop.f32.mrf.mxu0
      %1732 = vmatprep.mubr.f32.mxu0 0.0
      %1733 = vmatmul.mubr.f32.gmra.mxu0 %v1415
      %v1734 = vpop.f32.mrf.mxu0
      %v1735 = vadd.f32 0.0, %v1734
      %v1736 = vpop.f32.mrf.mxu0
      %1737 = vmatprep.mubr.f32.mxu0 0.0
      %1738 = vmatmul.mubr.f32.gmra.mxu0 %v1418
      %v1739 = vpop.f32.mrf.mxu0
      %v1740 = vadd.f32 0.0, %v1739
      %v1741 = vpop.f32.mrf.mxu0
      %1742 = vmatprep.mubr.f32.mxu0 0.0
      %1743 = vmatmul.mubr.f32.gmra.mxu0 %v1421
      %v1744 = vpop.f32.mrf.mxu0
      %v1745 = vadd.f32 0.0, %v1744
      %v1746 = vpop.f32.mrf.mxu0
      %1747 = vmatprep.mubr.f32.mxu0 0.0
      %1748 = vmatmul.mubr.f32.gmra.mxu0 %v1424
      %v1749 = vpop.f32.mrf.mxu0
      %v1750 = vadd.f32 0.0, %v1749
      %v1751 = vpop.f32.mrf.mxu0
      %1752 = vmatprep.mubr.f32.mxu0 0.0
      %1753 = vmatmul.mubr.f32.gmra.mxu0 %v1427
      %v1754 = vpop.f32.mrf.mxu0
      %v1755 = vadd.f32 0.0, %v1754
      %v1756 = vpop.f32.mrf.mxu0
      %1757 = vmatprep.mubr.f32.mxu0 0.0
      %1758 = vmatmul.mubr.f32.gmra.mxu0 %v1430
      %v1759 = vpop.f32.mrf.mxu0
      %v1760 = vadd.f32 0.0, %v1759
      %v1761 = vpop.f32.mrf.mxu0
      %1762 = vmatprep.mubr.f32.mxu0 0.0
      %1763 = vmatmul.mubr.f32.gmra.mxu0 %v1433
      %v1764 = vpop.f32.mrf.mxu0
      %v1765 = vadd.f32 0.0, %v1764
      %v1766 = vpop.f32.mrf.mxu0
      %1767 = vmatprep.mubr.f32.mxu0 0.0
      %1768 = vmatmul.mubr.f32.gmra.mxu0 %v1436
      %v1769 = vpop.f32.mrf.mxu0
      %v1770 = vadd.f32 0.0, %v1769
      %v1771 = vpop.f32.mrf.mxu0
      %1772 = vmatprep.mubr.f32.mxu0 0.0
      %1773 = vmatmul.mubr.f32.gmra.mxu0 %v1439
      %v1774 = vpop.f32.mrf.mxu0
      %v1775 = vadd.f32 0.0, %v1774
      %v1776 = vpop.f32.mrf.mxu0
      %1777 = vmatprep.mubr.f32.mxu0 0.0
      %1778 = vmatmul.mubr.f32.gmra.mxu0 %v1442
      %v1779 = vpop.f32.mrf.mxu0
      %v1780 = vadd.f32 0.0, %v1779
      %v1781 = vpop.f32.mrf.mxu0
      %1782 = vmatprep.mubr.f32.mxu0 0.0
      %1783 = vmatmul.mubr.f32.gmra.mxu0 %v1445
      %v1784 = vpop.f32.mrf.mxu0
      %v1785 = vadd.f32 0.0, %v1784
      %v1786 = vpop.f32.mrf.mxu0
      %1787 = vmatprep.mubr.f32.mxu0 0.0
      %1788 = vmatmul.mubr.f32.gmra.mxu0 %v1448
      %v1789 = vpop.f32.mrf.mxu0
      %v1790 = vadd.f32 0.0, %v1789
      %v1791 = vpop.f32.mrf.mxu0
      %1792 = vmatprep.mubr.f32.mxu0 0.0
      %1793 = vmatmul.mubr.f32.gmra.mxu0 %v1451
      %v1794 = vpop.f32.mrf.mxu0
      %v1795 = vadd.f32 0.0, %v1794
      %v1796 = vpop.f32.mrf.mxu0
      %1797 = vmatprep.mubr.f32.mxu0 0.0
      %1798 = vmatmul.mubr.f32.gmra.mxu0 %v1454
      %v1799 = vpop.f32.mrf.mxu0
      %v1800 = vadd.f32 0.0, %v1799
      %v1801 = vpop.f32.mrf.mxu0
      %1802 = vmatprep.mubr.f32.mxu0 0.0
      %1803 = vmatmul.mubr.f32.gmra.mxu0 %v1457
      %v1804 = vpop.f32.mrf.mxu0
      %v1805 = vadd.f32 0.0, %v1804
      %v1806 = vpop.f32.mrf.mxu0
      %1807 = vmatprep.mubr.f32.mxu0 0.0
      %1808 = vmatmul.mubr.f32.gmra.mxu0 %v1460
      %v1809 = vpop.f32.mrf.mxu0
      %v1810 = vadd.f32 0.0, %v1809
      %v1811 = vpop.f32.mrf.mxu0
      %1812 = vmatprep.mubr.f32.mxu0 0.0
      %1813 = vmatmul.mubr.f32.gmra.mxu0 %v1463
      %v1814 = vpop.f32.mrf.mxu0
      %v1815 = vadd.f32 0.0, %v1814
      %v1816 = vpop.f32.mrf.mxu0
      %1817 = vmatprep.mubr.f32.mxu0 0.0
      %1818 = vmatmul.mubr.f32.gmra.mxu0 %v1466
      %v1819 = vpop.f32.mrf.mxu0
      %v1820 = vadd.f32 0.0, %v1819
      %v1821 = vpop.f32.mrf.mxu0
      %1822 = vmatprep.mubr.f32.mxu0 0.0
      %1823 = vmatmul.mubr.f32.gmra.mxu0 %v1469
      %v1824 = vpop.f32.mrf.mxu0
      %v1825 = vadd.f32 0.0, %v1824
      %v1826 = vpop.f32.mrf.mxu0
      %1827 = vmatprep.mubr.f32.mxu0 0.0
      %1828 = vmatmul.mubr.f32.gmra.mxu0 %v1472
      %v1829 = vpop.f32.mrf.mxu0
      %v1830 = vadd.f32 0.0, %v1829
      %v1831 = vpop.f32.mrf.mxu0
      %1832 = vmatprep.mubr.f32.mxu0 0.0
      %1833 = vmatmul.mubr.f32.gmra.mxu0 %v1475
      %v1834 = vpop.f32.mrf.mxu0
      %v1835 = vadd.f32 0.0, %v1834
      %v1836 = vpop.f32.mrf.mxu0
      %1837 = vmatprep.mubr.f32.mxu0 0.0
      %1838 = vmatmul.mubr.f32.gmra.mxu0 %v1478
      %v1839 = vpop.f32.mrf.mxu0
      %v1840 = vadd.f32 0.0, %v1839
      %v1841 = vpop.f32.mrf.mxu0
      %1842 = vmatprep.mubr.f32.mxu0 0.0
      %1843 = vmatmul.mubr.f32.gmra.mxu0 %v1481
      %v1844 = vpop.f32.mrf.mxu0
      %v1845 = vadd.f32 0.0, %v1844
      %v1846 = vpop.f32.mrf.mxu0
      %1847 = vmatprep.mubr.f32.mxu0 0.0
      %1848 = vmatmul.mubr.f32.gmra.mxu0 %v1484
      %v1849 = vpop.f32.mrf.mxu0
      %v1850 = vadd.f32 0.0, %v1849
      %v1851 = vpop.f32.mrf.mxu0
      %1852 = vmatprep.mubr.f32.mxu0 0.0
      %1853 = vmatmul.mubr.f32.gmra.mxu0 %v1487
      %v1854 = vpop.f32.mrf.mxu0
      %v1855 = vadd.f32 0.0, %v1854
      %v1856 = vpop.f32.mrf.mxu0
      %1857 = vmatprep.mubr.f32.mxu0 0.0
      %1858 = vmatmul.mubr.f32.gmra.mxu0 %v1490
      %v1859 = vpop.f32.mrf.mxu0
      %v1860 = vadd.f32 0.0, %v1859
      %v1861 = vpop.f32.mrf.mxu0
      %1862 = vmatprep.mubr.f32.mxu0 0.0
      %1863 = vmatmul.mubr.f32.gmra.mxu0 %v1493
      %v1864 = vpop.f32.mrf.mxu0
      %v1865 = vadd.f32 0.0, %v1864
      %v1866 = vpop.f32.mrf.mxu0
      %1867 = vmatprep.mubr.f32.mxu0 0.0
      %1868 = vmatmul.mubr.f32.gmra.mxu0 %v1496
      %v1869 = vpop.f32.mrf.mxu0
      %v1870 = vadd.f32 0.0, %v1869
      %v1871 = vpop.f32.mrf.mxu0
      %1872 = vmatprep.mubr.f32.mxu0 0.0
      %1873 = vmatmul.mubr.f32.gmra.mxu0 %v1499
      %v1874 = vpop.f32.mrf.mxu0
      %v1875 = vadd.f32 0.0, %v1874
      %v1876 = vpop.f32.mrf.mxu0
      %1877 = vmatprep.mubr.f32.mxu0 0.0
      %1878 = vmatmul.mubr.f32.gmra.mxu0 %v1502
      %v1879 = vpop.f32.mrf.mxu0
      %v1880 = vadd.f32 0.0, %v1879
      %v1881 = vpop.f32.mrf.mxu0
      %1882 = vmatprep.mubr.f32.mxu0 0.0
      %1883 = vmatmul.mubr.f32.gmra.mxu0 %v1505
      %v1884 = vpop.f32.mrf.mxu0
      %v1885 = vadd.f32 0.0, %v1884
      %v1886 = vpop.f32.mrf.mxu0
      %1887 = vmatprep.mubr.f32.mxu0 0.0
      %1888 = vmatmul.mubr.f32.gmra.mxu0 %v1508
      %v1889 = vpop.f32.mrf.mxu0
      %v1890 = vadd.f32 0.0, %v1889
      %v1891 = vpop.f32.mrf.mxu0
      %1892 = vmatprep.mubr.f32.mxu0 0.0
      %1893 = vmatmul.mubr.f32.gmra.mxu0 %v1511
      %v1894 = vpop.f32.mrf.mxu0
      %v1895 = vadd.f32 0.0, %v1894
      %v1896 = vpop.f32.mrf.mxu0
      %1897 = vdwg.mxu0
      %v1898 = vsub.f32 %v1580, %v1740
      %v1899 = vsub.f32 %v1585, %v1745
      %v1900 = vsub.f32 %v1590, %v1750
      %v1901 = vsub.f32 %v1595, %v1755
      %v1902 = vsub.f32 %v1600, %v1760
      %v1903 = vsub.f32 %v1605, %v1765
      %v1904 = vsub.f32 %v1610, %v1770
      %v1905 = vsub.f32 %v1615, %v1775
      %v1906 = vsub.f32 %v1620, %v1780
      %v1907 = vsub.f32 %v1625, %v1785
      %v1908 = vsub.f32 %v1630, %v1790
      %v1909 = vsub.f32 %v1635, %v1795
      %v1910 = vsub.f32 %v1640, %v1800
      %v1911 = vsub.f32 %v1645, %v1805
      %v1912 = vsub.f32 %v1650, %v1810
      %v1913 = vsub.f32 %v1655, %v1815
      %v1914 = vsub.f32 %v1660, %v1820
      %v1915 = vsub.f32 %v1665, %v1825
      %v1916 = vsub.f32 %v1670, %v1830
      %v1917 = vsub.f32 %v1675, %v1835
      %v1918 = vsub.f32 %v1680, %v1840
      %v1919 = vsub.f32 %v1685, %v1845
      %v1920 = vsub.f32 %v1690, %v1850
      %v1921 = vsub.f32 %v1695, %v1855
      %v1922 = vsub.f32 %v1700, %v1860
      %v1923 = vsub.f32 %v1705, %v1865
      %v1924 = vsub.f32 %v1710, %v1870
      %v1925 = vsub.f32 %v1715, %v1875
      %v1926 = vsub.f32 %v1720, %v1880
      %v1927 = vsub.f32 %v1725, %v1885
      %v1928 = vsub.f32 %v1730, %v1890
      %v1929 = vsub.f32 %v1735, %v1895
      %v1930 = vmul.f32 %v1898, %v862
      %v1931 = vmul.f32 %v1899, %v862
      %v1932 = vmul.f32 %v1900, %v862
      %v1933 = vmul.f32 %v1901, %v862
      %v1934 = vmul.f32 %v1902, %v862
      %v1935 = vmul.f32 %v1903, %v862
      %v1936 = vmul.f32 %v1904, %v862
      %v1937 = vmul.f32 %v1905, %v862
      %v1938 = vmul.f32 %v1906, %v862
      %v1939 = vmul.f32 %v1907, %v862
      %v1940 = vmul.f32 %v1908, %v862
      %v1941 = vmul.f32 %v1909, %v862
      %v1942 = vmul.f32 %v1910, %v862
      %v1943 = vmul.f32 %v1911, %v862
      %v1944 = vmul.f32 %v1912, %v862
      %v1945 = vmul.f32 %v1913, %v862
      %v1946 = vmul.f32 %v1914, %v862
      %v1947 = vmul.f32 %v1915, %v862
      %v1948 = vmul.f32 %v1916, %v862
      %v1949 = vmul.f32 %v1917, %v862
      %v1950 = vmul.f32 %v1918, %v862
      %v1951 = vmul.f32 %v1919, %v862
      %v1952 = vmul.f32 %v1920, %v862
      %v1953 = vmul.f32 %v1921, %v862
      %v1954 = vmul.f32 %v1922, %v862
      %v1955 = vmul.f32 %v1923, %v862
      %v1956 = vmul.f32 %v1924, %v862
      %v1957 = vmul.f32 %v1925, %v862
      %v1958 = vmul.f32 %v1926, %v862
      %v1959 = vmul.f32 %v1927, %v862
      %v1960 = vmul.f32 %v1928, %v862
      %v1961 = vmul.f32 %v1929, %v862
      %v1962 = vmul.f32 %v1930, %v1930
      %v1963 = vmul.f32 %v1931, %v1931
      %v1964 = vmul.f32 %v1932, %v1932
      %v1965 = vmul.f32 %v1933, %v1933
      %v1966 = vmul.f32 %v1934, %v1934
      %v1967 = vmul.f32 %v1935, %v1935
      %v1968 = vmul.f32 %v1936, %v1936
      %v1969 = vmul.f32 %v1937, %v1937
      %v1970 = vmul.f32 %v1938, %v1938
      %v1971 = vmul.f32 %v1939, %v1939
      %v1972 = vmul.f32 %v1940, %v1940
      %v1973 = vmul.f32 %v1941, %v1941
      %v1974 = vmul.f32 %v1942, %v1942
      %v1975 = vmul.f32 %v1943, %v1943
      %v1976 = vmul.f32 %v1944, %v1944
      %v1977 = vmul.f32 %v1945, %v1945
      %v1978 = vmul.f32 %v1946, %v1946
      %v1979 = vmul.f32 %v1947, %v1947
      %v1980 = vmul.f32 %v1948, %v1948
      %v1981 = vmul.f32 %v1949, %v1949
      %v1982 = vmul.f32 %v1950, %v1950
      %v1983 = vmul.f32 %v1951, %v1951
      %v1984 = vmul.f32 %v1952, %v1952
      %v1985 = vmul.f32 %v1953, %v1953
      %v1986 = vmul.f32 %v1954, %v1954
      %v1987 = vmul.f32 %v1955, %v1955
      %v1988 = vmul.f32 %v1956, %v1956
      %v1989 = vmul.f32 %v1957, %v1957
      %v1990 = vmul.f32 %v1958, %v1958
      %v1991 = vmul.f32 %v1959, %v1959
      %v1992 = vmul.f32 %v1960, %v1960
      %v1993 = vmul.f32 %v1961, %v1961
      %vm1994 = vcmask 113664
      %v1995 = vsel %vm1994, %v1962, 0.0
      %1996 = vadd.xlane.f32.xlu0 %v1995
      %v1997 = vpop.xlane.xlu0 %1996
      %v1998 = vsel %vm1994, %v1963, 0.0
      %1999 = vadd.xlane.f32.xlu0 %v1998
      %v2000 = vpop.xlane.xlu0 %1999
      %v2001 = vsel %vm1994, %v1964, 0.0
      %2002 = vadd.xlane.f32.xlu0 %v2001
      %v2003 = vpop.xlane.xlu0 %2002
      %v2004 = vsel %vm1994, %v1965, 0.0
      %2005 = vadd.xlane.f32.xlu0 %v2004
      %v2006 = vpop.xlane.xlu0 %2005
      %v2007 = vsel %vm1994, %v1966, 0.0
      %2008 = vadd.xlane.f32.xlu0 %v2007
      %v2009 = vpop.xlane.xlu0 %2008
      %v2010 = vsel %vm1994, %v1967, 0.0
      %2011 = vadd.xlane.f32.xlu0 %v2010
      %v2012 = vpop.xlane.xlu0 %2011
      %v2013 = vsel %vm1994, %v1968, 0.0
      %2014 = vadd.xlane.f32.xlu0 %v2013
      %v2015 = vpop.xlane.xlu0 %2014
      %v2016 = vsel %vm1994, %v1969, 0.0
      %2017 = vadd.xlane.f32.xlu0 %v2016
      %v2018 = vpop.xlane.xlu0 %2017
      %v2019 = vsel %vm1994, %v1970, 0.0
      %2020 = vadd.xlane.f32.xlu0 %v2019
      %v2021 = vpop.xlane.xlu0 %2020
      %v2022 = vsel %vm1994, %v1971, 0.0
      %2023 = vadd.xlane.f32.xlu0 %v2022
      %v2024 = vpop.xlane.xlu0 %2023
      %v2025 = vsel %vm1994, %v1972, 0.0
      %2026 = vadd.xlane.f32.xlu0 %v2025
      %v2027 = vpop.xlane.xlu0 %2026
      %v2028 = vsel %vm1994, %v1973, 0.0
      %2029 = vadd.xlane.f32.xlu0 %v2028
      %v2030 = vpop.xlane.xlu0 %2029
      %v2031 = vsel %vm1994, %v1974, 0.0
      %2032 = vadd.xlane.f32.xlu0 %v2031
      %v2033 = vpop.xlane.xlu0 %2032
      %v2034 = vsel %vm1994, %v1975, 0.0
      %2035 = vadd.xlane.f32.xlu0 %v2034
      %v2036 = vpop.xlane.xlu0 %2035
      %v2037 = vsel %vm1994, %v1976, 0.0
      %2038 = vadd.xlane.f32.xlu0 %v2037
      %v2039 = vpop.xlane.xlu0 %2038
      %v2040 = vsel %vm1994, %v1977, 0.0
      %2041 = vadd.xlane.f32.xlu0 %v2040
      %v2042 = vpop.xlane.xlu0 %2041
      %v2043 = vsel %vm1994, %v1978, 0.0
      %2044 = vadd.xlane.f32.xlu0 %v2043
      %v2045 = vpop.xlane.xlu0 %2044
      %v2046 = vsel %vm1994, %v1979, 0.0
      %2047 = vadd.xlane.f32.xlu0 %v2046
      %v2048 = vpop.xlane.xlu0 %2047
      %v2049 = vsel %vm1994, %v1980, 0.0
      %2050 = vadd.xlane.f32.xlu0 %v2049
      %v2051 = vpop.xlane.xlu0 %2050
      %v2052 = vsel %vm1994, %v1981, 0.0
      %2053 = vadd.xlane.f32.xlu0 %v2052
      %v2054 = vpop.xlane.xlu0 %2053
      %v2055 = vsel %vm1994, %v1982, 0.0
      %2056 = vadd.xlane.f32.xlu0 %v2055
      %v2057 = vpop.xlane.xlu0 %2056
      %v2058 = vsel %vm1994, %v1983, 0.0
      %2059 = vadd.xlane.f32.xlu0 %v2058
      %v2060 = vpop.xlane.xlu0 %2059
      %v2061 = vsel %vm1994, %v1984, 0.0
      %2062 = vadd.xlane.f32.xlu0 %v2061
      %v2063 = vpop.xlane.xlu0 %2062
      %v2064 = vsel %vm1994, %v1985, 0.0
      %2065 = vadd.xlane.f32.xlu0 %v2064
      %v2066 = vpop.xlane.xlu0 %2065
      %v2067 = vsel %vm1994, %v1986, 0.0
      %2068 = vadd.xlane.f32.xlu0 %v2067
      %v2069 = vpop.xlane.xlu0 %2068
      %v2070 = vsel %vm1994, %v1987, 0.0
      %2071 = vadd.xlane.f32.xlu0 %v2070
      %v2072 = vpop.xlane.xlu0 %2071
      %v2073 = vsel %vm1994, %v1988, 0.0
      %2074 = vadd.xlane.f32.xlu0 %v2073
      %v2075 = vpop.xlane.xlu0 %2074
      %v2076 = vsel %vm1994, %v1989, 0.0
      %2077 = vadd.xlane.f32.xlu0 %v2076
      %v2078 = vpop.xlane.xlu0 %2077
      %v2079 = vsel %vm1994, %v1990, 0.0
      %2080 = vadd.xlane.f32.xlu0 %v2079
      %v2081 = vpop.xlane.xlu0 %2080
      %v2082 = vsel %vm1994, %v1991, 0.0
      %2083 = vadd.xlane.f32.xlu0 %v2082
      %v2084 = vpop.xlane.xlu0 %2083
      %v2085 = vsel %vm1994, %v1992, 0.0
      %2086 = vadd.xlane.f32.xlu0 %v2085
      %v2087 = vpop.xlane.xlu0 %2086
      %v2088 = vsel %vm1994, %v1993, 0.0
      %2089 = vadd.xlane.f32.xlu0 %v2088
      %v2090 = vpop.xlane.xlu0 %2089
      %v2091 = vrsqrt.pop %v1997
      %v2092 = vmul.f32 %v1997, %v2091
      %vm2093 = vcmp.eq.f32.partialorder %v1997, inf
      %v2094 = vsel %vm2093, %v1997, %v2092
      %vm2095 = vcmp.eq.f32.partialorder %v1997, 0.0
      %v2096 = vand.u32 %v1997, 2147483648
      %v2097 = vsel %vm2095, %v2096, %v2094
      %v2098 = vrsqrt.pop %v2000
      %v2099 = vmul.f32 %v2000, %v2098
      %vm2100 = vcmp.eq.f32.partialorder %v2000, inf
      %v2101 = vsel %vm2100, %v2000, %v2099
      %vm2102 = vcmp.eq.f32.partialorder %v2000, 0.0
      %v2103 = vand.u32 %v2000, 2147483648
      %v2104 = vsel %vm2102, %v2103, %v2101
      %v2105 = vrsqrt.pop %v2003
      %v2106 = vmul.f32 %v2003, %v2105
      %vm2107 = vcmp.eq.f32.partialorder %v2003, inf
      %v2108 = vsel %vm2107, %v2003, %v2106
      %vm2109 = vcmp.eq.f32.partialorder %v2003, 0.0
      %v2110 = vand.u32 %v2003, 2147483648
      %v2111 = vsel %vm2109, %v2110, %v2108
      %v2112 = vrsqrt.pop %v2006
      %v2113 = vmul.f32 %v2006, %v2112
      %vm2114 = vcmp.eq.f32.partialorder %v2006, inf
      %v2115 = vsel %vm2114, %v2006, %v2113
      %vm2116 = vcmp.eq.f32.partialorder %v2006, 0.0
      %v2117 = vand.u32 %v2006, 2147483648
      %v2118 = vsel %vm2116, %v2117, %v2115
      %v2119 = vrsqrt.pop %v2009
      %v2120 = vmul.f32 %v2009, %v2119
      %vm2121 = vcmp.eq.f32.partialorder %v2009, inf
      %v2122 = vsel %vm2121, %v2009, %v2120
      %vm2123 = vcmp.eq.f32.partialorder %v2009, 0.0
      %v2124 = vand.u32 %v2009, 2147483648
      %v2125 = vsel %vm2123, %v2124, %v2122
      %v2126 = vrsqrt.pop %v2012
      %v2127 = vmul.f32 %v2012, %v2126
      %vm2128 = vcmp.eq.f32.partialorder %v2012, inf
      %v2129 = vsel %vm2128, %v2012, %v2127
      %vm2130 = vcmp.eq.f32.partialorder %v2012, 0.0
      %v2131 = vand.u32 %v2012, 2147483648
      %v2132 = vsel %vm2130, %v2131, %v2129
      %v2133 = vrsqrt.pop %v2015
      %v2134 = vmul.f32 %v2015, %v2133
      %vm2135 = vcmp.eq.f32.partialorder %v2015, inf
      %v2136 = vsel %vm2135, %v2015, %v2134
      %vm2137 = vcmp.eq.f32.partialorder %v2015, 0.0
      %v2138 = vand.u32 %v2015, 2147483648
      %v2139 = vsel %vm2137, %v2138, %v2136
      %v2140 = vrsqrt.pop %v2018
      %v2141 = vmul.f32 %v2018, %v2140
      %vm2142 = vcmp.eq.f32.partialorder %v2018, inf
      %v2143 = vsel %vm2142, %v2018, %v2141
      %vm2144 = vcmp.eq.f32.partialorder %v2018, 0.0
      %v2145 = vand.u32 %v2018, 2147483648
      %v2146 = vsel %vm2144, %v2145, %v2143
      %v2147 = vrsqrt.pop %v2021
      %v2148 = vmul.f32 %v2021, %v2147
      %vm2149 = vcmp.eq.f32.partialorder %v2021, inf
      %v2150 = vsel %vm2149, %v2021, %v2148
      %vm2151 = vcmp.eq.f32.partialorder %v2021, 0.0
      %v2152 = vand.u32 %v2021, 2147483648
      %v2153 = vsel %vm2151, %v2152, %v2150
      %v2154 = vrsqrt.pop %v2024
      %v2155 = vmul.f32 %v2024, %v2154
      %vm2156 = vcmp.eq.f32.partialorder %v2024, inf
      %v2157 = vsel %vm2156, %v2024, %v2155
      %vm2158 = vcmp.eq.f32.partialorder %v2024, 0.0
      %v2159 = vand.u32 %v2024, 2147483648
      %v2160 = vsel %vm2158, %v2159, %v2157
      %v2161 = vrsqrt.pop %v2027
      %v2162 = vmul.f32 %v2027, %v2161
      %vm2163 = vcmp.eq.f32.partialorder %v2027, inf
      %v2164 = vsel %vm2163, %v2027, %v2162
      %vm2165 = vcmp.eq.f32.partialorder %v2027, 0.0
      %v2166 = vand.u32 %v2027, 2147483648
      %v2167 = vsel %vm2165, %v2166, %v2164
      %v2168 = vrsqrt.pop %v2030
      %v2169 = vmul.f32 %v2030, %v2168
      %vm2170 = vcmp.eq.f32.partialorder %v2030, inf
      %v2171 = vsel %vm2170, %v2030, %v2169
      %vm2172 = vcmp.eq.f32.partialorder %v2030, 0.0
      %v2173 = vand.u32 %v2030, 2147483648
      %v2174 = vsel %vm2172, %v2173, %v2171
      %v2175 = vrsqrt.pop %v2033
      %v2176 = vmul.f32 %v2033, %v2175
      %vm2177 = vcmp.eq.f32.partialorder %v2033, inf
      %v2178 = vsel %vm2177, %v2033, %v2176
      %vm2179 = vcmp.eq.f32.partialorder %v2033, 0.0
      %v2180 = vand.u32 %v2033, 2147483648
      %v2181 = vsel %vm2179, %v2180, %v2178
      %v2182 = vrsqrt.pop %v2036
      %v2183 = vmul.f32 %v2036, %v2182
      %vm2184 = vcmp.eq.f32.partialorder %v2036, inf
      %v2185 = vsel %vm2184, %v2036, %v2183
      %vm2186 = vcmp.eq.f32.partialorder %v2036, 0.0
      %v2187 = vand.u32 %v2036, 2147483648
      %v2188 = vsel %vm2186, %v2187, %v2185
      %v2189 = vrsqrt.pop %v2039
      %v2190 = vmul.f32 %v2039, %v2189
      %vm2191 = vcmp.eq.f32.partialorder %v2039, inf
      %v2192 = vsel %vm2191, %v2039, %v2190
      %vm2193 = vcmp.eq.f32.partialorder %v2039, 0.0
      %v2194 = vand.u32 %v2039, 2147483648
      %v2195 = vsel %vm2193, %v2194, %v2192
      %v2196 = vrsqrt.pop %v2042
      %v2197 = vmul.f32 %v2042, %v2196
      %vm2198 = vcmp.eq.f32.partialorder %v2042, inf
      %v2199 = vsel %vm2198, %v2042, %v2197
      %vm2200 = vcmp.eq.f32.partialorder %v2042, 0.0
      %v2201 = vand.u32 %v2042, 2147483648
      %v2202 = vsel %vm2200, %v2201, %v2199
      %v2203 = vrsqrt.pop %v2045
      %v2204 = vmul.f32 %v2045, %v2203
      %vm2205 = vcmp.eq.f32.partialorder %v2045, inf
      %v2206 = vsel %vm2205, %v2045, %v2204
      %vm2207 = vcmp.eq.f32.partialorder %v2045, 0.0
      %v2208 = vand.u32 %v2045, 2147483648
      %v2209 = vsel %vm2207, %v2208, %v2206
      %v2210 = vrsqrt.pop %v2048
      %v2211 = vmul.f32 %v2048, %v2210
      %vm2212 = vcmp.eq.f32.partialorder %v2048, inf
      %v2213 = vsel %vm2212, %v2048, %v2211
      %vm2214 = vcmp.eq.f32.partialorder %v2048, 0.0
      %v2215 = vand.u32 %v2048, 2147483648
      %v2216 = vsel %vm2214, %v2215, %v2213
      %v2217 = vrsqrt.pop %v2051
      %v2218 = vmul.f32 %v2051, %v2217
      %vm2219 = vcmp.eq.f32.partialorder %v2051, inf
      %v2220 = vsel %vm2219, %v2051, %v2218
      %vm2221 = vcmp.eq.f32.partialorder %v2051, 0.0
      %v2222 = vand.u32 %v2051, 2147483648
      %v2223 = vsel %vm2221, %v2222, %v2220
      %v2224 = vrsqrt.pop %v2054
      %v2225 = vmul.f32 %v2054, %v2224
      %vm2226 = vcmp.eq.f32.partialorder %v2054, inf
      %v2227 = vsel %vm2226, %v2054, %v2225
      %vm2228 = vcmp.eq.f32.partialorder %v2054, 0.0
      %v2229 = vand.u32 %v2054, 2147483648
      %v2230 = vsel %vm2228, %v2229, %v2227
      %v2231 = vrsqrt.pop %v2057
      %v2232 = vmul.f32 %v2057, %v2231
      %vm2233 = vcmp.eq.f32.partialorder %v2057, inf
      %v2234 = vsel %vm2233, %v2057, %v2232
      %vm2235 = vcmp.eq.f32.partialorder %v2057, 0.0
      %v2236 = vand.u32 %v2057, 2147483648
      %v2237 = vsel %vm2235, %v2236, %v2234
      %v2238 = vrsqrt.pop %v2060
      %v2239 = vmul.f32 %v2060, %v2238
      %vm2240 = vcmp.eq.f32.partialorder %v2060, inf
      %v2241 = vsel %vm2240, %v2060, %v2239
      %vm2242 = vcmp.eq.f32.partialorder %v2060, 0.0
      %v2243 = vand.u32 %v2060, 2147483648
      %v2244 = vsel %vm2242, %v2243, %v2241
      %v2245 = vrsqrt.pop %v2063
      %v2246 = vmul.f32 %v2063, %v2245
      %vm2247 = vcmp.eq.f32.partialorder %v2063, inf
      %v2248 = vsel %vm2247, %v2063, %v2246
      %vm2249 = vcmp.eq.f32.partialorder %v2063, 0.0
      %v2250 = vand.u32 %v2063, 2147483648
      %v2251 = vsel %vm2249, %v2250, %v2248
      %v2252 = vrsqrt.pop %v2066
      %v2253 = vmul.f32 %v2066, %v2252
      %vm2254 = vcmp.eq.f32.partialorder %v2066, inf
      %v2255 = vsel %vm2254, %v2066, %v2253
      %vm2256 = vcmp.eq.f32.partialorder %v2066, 0.0
      %v2257 = vand.u32 %v2066, 2147483648
      %v2258 = vsel %vm2256, %v2257, %v2255
      %v2259 = vrsqrt.pop %v2069
      %v2260 = vmul.f32 %v2069, %v2259
      %vm2261 = vcmp.eq.f32.partialorder %v2069, inf
      %v2262 = vsel %vm2261, %v2069, %v2260
      %vm2263 = vcmp.eq.f32.partialorder %v2069, 0.0
      %v2264 = vand.u32 %v2069, 2147483648
      %v2265 = vsel %vm2263, %v2264, %v2262
      %v2266 = vrsqrt.pop %v2072
      %v2267 = vmul.f32 %v2072, %v2266
      %vm2268 = vcmp.eq.f32.partialorder %v2072, inf
      %v2269 = vsel %vm2268, %v2072, %v2267
      %vm2270 = vcmp.eq.f32.partialorder %v2072, 0.0
      %v2271 = vand.u32 %v2072, 2147483648
      %v2272 = vsel %vm2270, %v2271, %v2269
      %v2273 = vrsqrt.pop %v2075
      %v2274 = vmul.f32 %v2075, %v2273
      %vm2275 = vcmp.eq.f32.partialorder %v2075, inf
      %v2276 = vsel %vm2275, %v2075, %v2274
      %vm2277 = vcmp.eq.f32.partialorder %v2075, 0.0
      %v2278 = vand.u32 %v2075, 2147483648
      %v2279 = vsel %vm2277, %v2278, %v2276
      %v2280 = vrsqrt.pop %v2078
      %v2281 = vmul.f32 %v2078, %v2280
      %vm2282 = vcmp.eq.f32.partialorder %v2078, inf
      %v2283 = vsel %vm2282, %v2078, %v2281
      %vm2284 = vcmp.eq.f32.partialorder %v2078, 0.0
      %v2285 = vand.u32 %v2078, 2147483648
      %v2286 = vsel %vm2284, %v2285, %v2283
      %v2287 = vrsqrt.pop %v2081
      %v2288 = vmul.f32 %v2081, %v2287
      %vm2289 = vcmp.eq.f32.partialorder %v2081, inf
      %v2290 = vsel %vm2289, %v2081, %v2288
      %vm2291 = vcmp.eq.f32.partialorder %v2081, 0.0
      %v2292 = vand.u32 %v2081, 2147483648
      %v2293 = vsel %vm2291, %v2292, %v2290
      %v2294 = vrsqrt.pop %v2084
      %v2295 = vmul.f32 %v2084, %v2294
      %vm2296 = vcmp.eq.f32.partialorder %v2084, inf
      %v2297 = vsel %vm2296, %v2084, %v2295
      %vm2298 = vcmp.eq.f32.partialorder %v2084, 0.0
      %v2299 = vand.u32 %v2084, 2147483648
      %v2300 = vsel %vm2298, %v2299, %v2297
      %v2301 = vrsqrt.pop %v2087
      %v2302 = vmul.f32 %v2087, %v2301
      %vm2303 = vcmp.eq.f32.partialorder %v2087, inf
      %v2304 = vsel %vm2303, %v2087, %v2302
      %vm2305 = vcmp.eq.f32.partialorder %v2087, 0.0
      %v2306 = vand.u32 %v2087, 2147483648
      %v2307 = vsel %vm2305, %v2306, %v2304
      %v2308 = vrsqrt.pop %v2090
      %v2309 = vmul.f32 %v2090, %v2308
      %vm2310 = vcmp.eq.f32.partialorder %v2090, inf
      %v2311 = vsel %vm2310, %v2090, %v2309
      %vm2312 = vcmp.eq.f32.partialorder %v2090, 0.0
      %v2313 = vand.u32 %v2090, 2147483648
      %v2314 = vsel %vm2312, %v2313, %v2311
      %v2315 = vld [vmem:[%s723] sm:$0xff]
      %v2316 = vld [vmem:[%s723 + $0x8] sm:$0x3f]
      %v2317 = vld [vmem:[%s728] sm:$0xff]
      %v2318 = vld [vmem:[%s728 + $0x8] sm:$0x3f]
      %v2320 = vsel %vm1994, %v1740, 0
      %v2323 = vsel %vm1994, %v1745, 0
      %v2326 = vsel %vm1994, %v1750, 0
      %v2329 = vsel %vm1994, %v1755, 0
      %v2332 = vsel %vm1994, %v1760, 0
      %v2335 = vsel %vm1994, %v1765, 0
      %v2338 = vsel %vm1994, %v1770, 0
      %v2341 = vsel %vm1994, %v1775, 0
      %v2344 = vsel %vm1994, %v1780, 0
      %v2347 = vsel %vm1994, %v1785, 0
      %v2350 = vsel %vm1994, %v1790, 0
      %v2353 = vsel %vm1994, %v1795, 0
      %v2356 = vsel %vm1994, %v1800, 0
      %v2359 = vsel %vm1994, %v1805, 0
      %v2362 = vsel %vm1994, %v1810, 0
      %v2365 = vsel %vm1994, %v1815, 0
      %v2368 = vsel %vm1994, %v1820, 0
      %v2371 = vsel %vm1994, %v1825, 0
      %v2374 = vsel %vm1994, %v1830, 0
      %v2377 = vsel %vm1994, %v1835, 0
      %v2380 = vsel %vm1994, %v1840, 0
      %v2383 = vsel %vm1994, %v1845, 0
      %v2386 = vsel %vm1994, %v1850, 0
      %v2389 = vsel %vm1994, %v1855, 0
      %v2392 = vsel %vm1994, %v1860, 0
      %v2395 = vsel %vm1994, %v1865, 0
      %v2398 = vsel %vm1994, %v1870, 0
      %v2401 = vsel %vm1994, %v1875, 0
      %v2404 = vsel %vm1994, %v1880, 0
      %v2407 = vsel %vm1994, %v1885, 0
      %v2410 = vsel %vm1994, %v1890, 0
      %v2413 = vsel %vm1994, %v1895, 0
      %vm2415 = vcmask 1045504
      %v2417 = vsel %vm2415, %v2318, 0
      %2419 = vmatprep.subr.mxu0 0.0
      %2420 = vmatpush1.msra.mxu0 0.0
      %2421 = vmatprep.subr.mxu0 0.0
      %2422 = vmatpush1.msra.mxu0 0.0
      %2423 = vmatprep.subr.mxu0 0.0
      %2424 = vmatpush1.msra.mxu0 0.0
      %2425 = vmatprep.subr.mxu0 0.0
      %2426 = vmatpush1.msra.mxu0 0.0
      %2427 = vmatprep.subr.mxu0 0.0
      %2428 = vmatpush1.msra.mxu0 0.0
      %2429 = vmatprep.subr.mxu0 0.0
      %2430 = vmatpush1.msra.mxu0 0.0
      %2431 = vmatprep.subr.mxu0 0.0
      %2432 = vmatpush1.msra.mxu0 0.0
      %2433 = vmatprep.subr.mxu0 0.0
      %2434 = vmatpush1.msra.mxu0 0.0
      %2435 = vmatprep.subr.mxu0 0.0
      %2436 = vmatpush1.msra.mxu0 0.0
      %2437 = vmatprep.subr.mxu0 0.0
      %2438 = vmatpush1.msra.mxu0 0.0
      %2439 = vmatprep.subr.mxu0 0.0
      %2440 = vmatpush1.msra.mxu0 0.0
      %2441 = vmatprep.subr.mxu0 0.0
      %2442 = vmatpush1.msra.mxu0 0.0
      %2443 = vmatprep.subr.mxu0 0.0
      %2444 = vmatpush1.msra.mxu0 0.0
      %2445 = vmatprep.subr.mxu0 0.0
      %2446 = vmatpush1.msra.mxu0 0.0
      %2447 = vmatprep.subr.mxu0 0.0
      %2448 = vmatpush1.msra.mxu0 %v2417
      %2449 = vmatprep.subr.mxu0 0.0
      %2450 = vmatpush1.msra.mxu0 %v2317
      %2451 = vmatprep.subr.mxu0 0.0
      %2452 = vmatpush2.msra.mxu0 0.0
      %2453 = vmatprep.subr.mxu0 0.0
      %2454 = vmatpush2.msra.mxu0 0.0
      %2455 = vmatprep.subr.mxu0 0.0
      %2456 = vmatpush2.msra.mxu0 0.0
      %2457 = vmatprep.subr.mxu0 0.0
      %2458 = vmatpush2.msra.mxu0 0.0
      %2459 = vmatprep.subr.mxu0 0.0
      %2460 = vmatpush2.msra.mxu0 0.0
      %2461 = vmatprep.subr.mxu0 0.0
      %2462 = vmatpush2.msra.mxu0 0.0
      %2463 = vmatprep.subr.mxu0 0.0
      %2464 = vmatpush2.msra.mxu0 0.0
      %2465 = vmatprep.subr.mxu0 0.0
      %2466 = vmatpush2.msra.mxu0 0.0
      %2467 = vmatprep.subr.mxu0 0.0
      %2468 = vmatpush2.msra.mxu0 0.0
      %2469 = vmatprep.subr.mxu0 0.0
      %2470 = vmatpush2.msra.mxu0 0.0
      %2471 = vmatprep.subr.mxu0 0.0
      %2472 = vmatpush2.msra.mxu0 0.0
      %2473 = vmatprep.subr.mxu0 0.0
      %2474 = vmatpush2.msra.mxu0 0.0
      %2475 = vmatprep.subr.mxu0 0.0
      %2476 = vmatpush2.msra.mxu0 0.0
      %2477 = vmatprep.subr.mxu0 0.0
      %2478 = vmatpush2.msra.mxu0 0.0
      %2479 = vmatprep.subr.mxu0 0.0
      %2480 = vmatpush2.msra.mxu0 0.0
      %2481 = vmatprep.subr.mxu0 0.0
      %2482 = vmatpush2.msra.mxu0 0.0
      %2483 = vmatprep.mubr.f32.mxu0 0.0
      %2484 = vmatmul.mubr.f32.gmra.mxu0 %v2320
      %v2485 = vpop.f32.mrf.mxu0
      %v2486 = vadd.f32 0.0, %v2485
      %v2487 = vpop.f32.mrf.mxu0
      %2488 = vmatprep.mubr.f32.mxu0 0.0
      %2489 = vmatmul.mubr.f32.gmra.mxu0 %v2323
      %v2490 = vpop.f32.mrf.mxu0
      %v2491 = vadd.f32 0.0, %v2490
      %v2492 = vpop.f32.mrf.mxu0
      %2493 = vmatprep.mubr.f32.mxu0 0.0
      %2494 = vmatmul.mubr.f32.gmra.mxu0 %v2326
      %v2495 = vpop.f32.mrf.mxu0
      %v2496 = vadd.f32 0.0, %v2495
      %v2497 = vpop.f32.mrf.mxu0
      %2498 = vmatprep.mubr.f32.mxu0 0.0
      %2499 = vmatmul.mubr.f32.gmra.mxu0 %v2329
      %v2500 = vpop.f32.mrf.mxu0
      %v2501 = vadd.f32 0.0, %v2500
      %v2502 = vpop.f32.mrf.mxu0
      %2503 = vmatprep.mubr.f32.mxu0 0.0
      %2504 = vmatmul.mubr.f32.gmra.mxu0 %v2332
      %v2505 = vpop.f32.mrf.mxu0
      %v2506 = vadd.f32 0.0, %v2505
      %v2507 = vpop.f32.mrf.mxu0
      %2508 = vmatprep.mubr.f32.mxu0 0.0
      %2509 = vmatmul.mubr.f32.gmra.mxu0 %v2335
      %v2510 = vpop.f32.mrf.mxu0
      %v2511 = vadd.f32 0.0, %v2510
      %v2512 = vpop.f32.mrf.mxu0
      %2513 = vmatprep.mubr.f32.mxu0 0.0
      %2514 = vmatmul.mubr.f32.gmra.mxu0 %v2338
      %v2515 = vpop.f32.mrf.mxu0
      %v2516 = vadd.f32 0.0, %v2515
      %v2517 = vpop.f32.mrf.mxu0
      %2518 = vmatprep.mubr.f32.mxu0 0.0
      %2519 = vmatmul.mubr.f32.gmra.mxu0 %v2341
      %v2520 = vpop.f32.mrf.mxu0
      %v2521 = vadd.f32 0.0, %v2520
      %v2522 = vpop.f32.mrf.mxu0
      %2523 = vmatprep.mubr.f32.mxu0 0.0
      %2524 = vmatmul.mubr.f32.gmra.mxu0 %v2344
      %v2525 = vpop.f32.mrf.mxu0
      %v2526 = vadd.f32 0.0, %v2525
      %v2527 = vpop.f32.mrf.mxu0
      %2528 = vmatprep.mubr.f32.mxu0 0.0
      %2529 = vmatmul.mubr.f32.gmra.mxu0 %v2347
      %v2530 = vpop.f32.mrf.mxu0
      %v2531 = vadd.f32 0.0, %v2530
      %v2532 = vpop.f32.mrf.mxu0
      %2533 = vmatprep.mubr.f32.mxu0 0.0
      %2534 = vmatmul.mubr.f32.gmra.mxu0 %v2350
      %v2535 = vpop.f32.mrf.mxu0
      %v2536 = vadd.f32 0.0, %v2535
      %v2537 = vpop.f32.mrf.mxu0
      %2538 = vmatprep.mubr.f32.mxu0 0.0
      %2539 = vmatmul.mubr.f32.gmra.mxu0 %v2353
      %v2540 = vpop.f32.mrf.mxu0
      %v2541 = vadd.f32 0.0, %v2540
      %v2542 = vpop.f32.mrf.mxu0
      %2543 = vmatprep.mubr.f32.mxu0 0.0
      %2544 = vmatmul.mubr.f32.gmra.mxu0 %v2356
      %v2545 = vpop.f32.mrf.mxu0
      %v2546 = vadd.f32 0.0, %v2545
      %v2547 = vpop.f32.mrf.mxu0
      %2548 = vmatprep.mubr.f32.mxu0 0.0
      %2549 = vmatmul.mubr.f32.gmra.mxu0 %v2359
      %v2550 = vpop.f32.mrf.mxu0
      %v2551 = vadd.f32 0.0, %v2550
      %v2552 = vpop.f32.mrf.mxu0
      %2553 = vmatprep.mubr.f32.mxu0 0.0
      %2554 = vmatmul.mubr.f32.gmra.mxu0 %v2362
      %v2555 = vpop.f32.mrf.mxu0
      %v2556 = vadd.f32 0.0, %v2555
      %v2557 = vpop.f32.mrf.mxu0
      %2558 = vmatprep.mubr.f32.mxu0 0.0
      %2559 = vmatmul.mubr.f32.gmra.mxu0 %v2365
      %v2560 = vpop.f32.mrf.mxu0
      %v2561 = vadd.f32 0.0, %v2560
      %v2562 = vpop.f32.mrf.mxu0
      %2563 = vmatprep.mubr.f32.mxu0 0.0
      %2564 = vmatmul.mubr.f32.gmra.mxu0 %v2368
      %v2565 = vpop.f32.mrf.mxu0
      %v2566 = vadd.f32 0.0, %v2565
      %v2567 = vpop.f32.mrf.mxu0
      %2568 = vmatprep.mubr.f32.mxu0 0.0
      %2569 = vmatmul.mubr.f32.gmra.mxu0 %v2371
      %v2570 = vpop.f32.mrf.mxu0
      %v2571 = vadd.f32 0.0, %v2570
      %v2572 = vpop.f32.mrf.mxu0
      %2573 = vmatprep.mubr.f32.mxu0 0.0
      %2574 = vmatmul.mubr.f32.gmra.mxu0 %v2374
      %v2575 = vpop.f32.mrf.mxu0
      %v2576 = vadd.f32 0.0, %v2575
      %v2577 = vpop.f32.mrf.mxu0
      %2578 = vmatprep.mubr.f32.mxu0 0.0
      %2579 = vmatmul.mubr.f32.gmra.mxu0 %v2377
      %v2580 = vpop.f32.mrf.mxu0
      %v2581 = vadd.f32 0.0, %v2580
      %v2582 = vpop.f32.mrf.mxu0
      %2583 = vmatprep.mubr.f32.mxu0 0.0
      %2584 = vmatmul.mubr.f32.gmra.mxu0 %v2380
      %v2585 = vpop.f32.mrf.mxu0
      %v2586 = vadd.f32 0.0, %v2585
      %v2587 = vpop.f32.mrf.mxu0
      %2588 = vmatprep.mubr.f32.mxu0 0.0
      %2589 = vmatmul.mubr.f32.gmra.mxu0 %v2383
      %v2590 = vpop.f32.mrf.mxu0
      %v2591 = vadd.f32 0.0, %v2590
      %v2592 = vpop.f32.mrf.mxu0
      %2593 = vmatprep.mubr.f32.mxu0 0.0
      %2594 = vmatmul.mubr.f32.gmra.mxu0 %v2386
      %v2595 = vpop.f32.mrf.mxu0
      %v2596 = vadd.f32 0.0, %v2595
      %v2597 = vpop.f32.mrf.mxu0
      %2598 = vmatprep.mubr.f32.mxu0 0.0
      %2599 = vmatmul.mubr.f32.gmra.mxu0 %v2389
      %v2600 = vpop.f32.mrf.mxu0
      %v2601 = vadd.f32 0.0, %v2600
      %v2602 = vpop.f32.mrf.mxu0
      %2603 = vmatprep.mubr.f32.mxu0 0.0
      %2604 = vmatmul.mubr.f32.gmra.mxu0 %v2392
      %v2605 = vpop.f32.mrf.mxu0
      %v2606 = vadd.f32 0.0, %v2605
      %v2607 = vpop.f32.mrf.mxu0
      %2608 = vmatprep.mubr.f32.mxu0 0.0
      %2609 = vmatmul.mubr.f32.gmra.mxu0 %v2395
      %v2610 = vpop.f32.mrf.mxu0
      %v2611 = vadd.f32 0.0, %v2610
      %v2612 = vpop.f32.mrf.mxu0
      %2613 = vmatprep.mubr.f32.mxu0 0.0
      %2614 = vmatmul.mubr.f32.gmra.mxu0 %v2398
      %v2615 = vpop.f32.mrf.mxu0
      %v2616 = vadd.f32 0.0, %v2615
      %v2617 = vpop.f32.mrf.mxu0
      %2618 = vmatprep.mubr.f32.mxu0 0.0
      %2619 = vmatmul.mubr.f32.gmra.mxu0 %v2401
      %v2620 = vpop.f32.mrf.mxu0
      %v2621 = vadd.f32 0.0, %v2620
      %v2622 = vpop.f32.mrf.mxu0
      %2623 = vmatprep.mubr.f32.mxu0 0.0
      %2624 = vmatmul.mubr.f32.gmra.mxu0 %v2404
      %v2625 = vpop.f32.mrf.mxu0
      %v2626 = vadd.f32 0.0, %v2625
      %v2627 = vpop.f32.mrf.mxu0
      %2628 = vmatprep.mubr.f32.mxu0 0.0
      %2629 = vmatmul.mubr.f32.gmra.mxu0 %v2407
      %v2630 = vpop.f32.mrf.mxu0
      %v2631 = vadd.f32 0.0, %v2630
      %v2632 = vpop.f32.mrf.mxu0
      %2633 = vmatprep.mubr.f32.mxu0 0.0
      %2634 = vmatmul.mubr.f32.gmra.mxu0 %v2410
      %v2635 = vpop.f32.mrf.mxu0
      %v2636 = vadd.f32 0.0, %v2635
      %v2637 = vpop.f32.mrf.mxu0
      %2638 = vmatprep.mubr.f32.mxu0 0.0
      %2639 = vmatmul.mubr.f32.gmra.mxu0 %v2413
      %v2640 = vpop.f32.mrf.mxu0
      %v2641 = vadd.f32 0.0, %v2640
      %v2642 = vpop.f32.mrf.mxu0
      %2643 = vdwg.mxu0
      %v2645 = vsel %vm1994, %v1580, 0
      %v2648 = vsel %vm1994, %v1585, 0
      %v2651 = vsel %vm1994, %v1590, 0
      %v2654 = vsel %vm1994, %v1595, 0
      %v2657 = vsel %vm1994, %v1600, 0
      %v2660 = vsel %vm1994, %v1605, 0
      %v2663 = vsel %vm1994, %v1610, 0
      %v2666 = vsel %vm1994, %v1615, 0
      %v2669 = vsel %vm1994, %v1620, 0
      %v2672 = vsel %vm1994, %v1625, 0
      %v2675 = vsel %vm1994, %v1630, 0
      %v2678 = vsel %vm1994, %v1635, 0
      %v2681 = vsel %vm1994, %v1640, 0
      %v2684 = vsel %vm1994, %v1645, 0
      %v2687 = vsel %vm1994, %v1650, 0
      %v2690 = vsel %vm1994, %v1655, 0
      %v2693 = vsel %vm1994, %v1660, 0
      %v2696 = vsel %vm1994, %v1665, 0
      %v2699 = vsel %vm1994, %v1670, 0
      %v2702 = vsel %vm1994, %v1675, 0
      %v2705 = vsel %vm1994, %v1680, 0
      %v2708 = vsel %vm1994, %v1685, 0
      %v2711 = vsel %vm1994, %v1690, 0
      %v2714 = vsel %vm1994, %v1695, 0
      %v2717 = vsel %vm1994, %v1700, 0
      %v2720 = vsel %vm1994, %v1705, 0
      %v2723 = vsel %vm1994, %v1710, 0
      %v2726 = vsel %vm1994, %v1715, 0
      %v2729 = vsel %vm1994, %v1720, 0
      %v2732 = vsel %vm1994, %v1725, 0
      %v2735 = vsel %vm1994, %v1730, 0
      %v2738 = vsel %vm1994, %v1735, 0
      %v2741 = vsel %vm2415, %v2316, 0
      %2743 = vmatprep.subr.mxu0 0.0
      %2744 = vmatpush1.msra.mxu0 0.0
      %2745 = vmatprep.subr.mxu0 0.0
      %2746 = vmatpush1.msra.mxu0 0.0
      %2747 = vmatprep.subr.mxu0 0.0
      %2748 = vmatpush1.msra.mxu0 0.0
      %2749 = vmatprep.subr.mxu0 0.0
      %2750 = vmatpush1.msra.mxu0 0.0
      %2751 = vmatprep.subr.mxu0 0.0
      %2752 = vmatpush1.msra.mxu0 0.0
      %2753 = vmatprep.subr.mxu0 0.0
      %2754 = vmatpush1.msra.mxu0 0.0
      %2755 = vmatprep.subr.mxu0 0.0
      %2756 = vmatpush1.msra.mxu0 0.0
      %2757 = vmatprep.subr.mxu0 0.0
      %2758 = vmatpush1.msra.mxu0 0.0
      %2759 = vmatprep.subr.mxu0 0.0
      %2760 = vmatpush1.msra.mxu0 0.0
      %2761 = vmatprep.subr.mxu0 0.0
      %2762 = vmatpush1.msra.mxu0 0.0
      %2763 = vmatprep.subr.mxu0 0.0
      %2764 = vmatpush1.msra.mxu0 0.0
      %2765 = vmatprep.subr.mxu0 0.0
      %2766 = vmatpush1.msra.mxu0 0.0
      %2767 = vmatprep.subr.mxu0 0.0
      %2768 = vmatpush1.msra.mxu0 0.0
      %2769 = vmatprep.subr.mxu0 0.0
      %2770 = vmatpush1.msra.mxu0 0.0
      %2771 = vmatprep.subr.mxu0 0.0
      %2772 = vmatpush1.msra.mxu0 %v2741
      %2773 = vmatprep.subr.mxu0 0.0
      %2774 = vmatpush1.msra.mxu0 %v2315
      %2775 = vmatprep.subr.mxu0 0.0
      %2776 = vmatpush2.msra.mxu0 0.0
      %2777 = vmatprep.subr.mxu0 0.0
      %2778 = vmatpush2.msra.mxu0 0.0
      %2779 = vmatprep.subr.mxu0 0.0
      %2780 = vmatpush2.msra.mxu0 0.0
      %2781 = vmatprep.subr.mxu0 0.0
      %2782 = vmatpush2.msra.mxu0 0.0
      %2783 = vmatprep.subr.mxu0 0.0
      %2784 = vmatpush2.msra.mxu0 0.0
      %2785 = vmatprep.subr.mxu0 0.0
      %2786 = vmatpush2.msra.mxu0 0.0
      %2787 = vmatprep.subr.mxu0 0.0
      %2788 = vmatpush2.msra.mxu0 0.0
      %2789 = vmatprep.subr.mxu0 0.0
      %2790 = vmatpush2.msra.mxu0 0.0
      %2791 = vmatprep.subr.mxu0 0.0
      %2792 = vmatpush2.msra.mxu0 0.0
      %2793 = vmatprep.subr.mxu0 0.0
      %2794 = vmatpush2.msra.mxu0 0.0
      %2795 = vmatprep.subr.mxu0 0.0
      %2796 = vmatpush2.msra.mxu0 0.0
      %2797 = vmatprep.subr.mxu0 0.0
      %2798 = vmatpush2.msra.mxu0 0.0
      %2799 = vmatprep.subr.mxu0 0.0
      %2800 = vmatpush2.msra.mxu0 0.0
      %2801 = vmatprep.subr.mxu0 0.0
      %2802 = vmatpush2.msra.mxu0 0.0
      %2803 = vmatprep.subr.mxu0 0.0
      %2804 = vmatpush2.msra.mxu0 0.0
      %2805 = vmatprep.subr.mxu0 0.0
      %2806 = vmatpush2.msra.mxu0 0.0
      %2807 = vmatprep.mubr.f32.mxu0 0.0
      %2808 = vmatmul.mubr.f32.gmra.mxu0 %v2645
      %v2809 = vpop.f32.mrf.mxu0
      %v2810 = vadd.f32 %v2486, %v2809
      %v2811 = vpop.f32.mrf.mxu0
      %2812 = vmatprep.mubr.f32.mxu0 0.0
      %2813 = vmatmul.mubr.f32.gmra.mxu0 %v2648
      %v2814 = vpop.f32.mrf.mxu0
      %v2815 = vadd.f32 %v2491, %v2814
      %v2816 = vpop.f32.mrf.mxu0
      %2817 = vmatprep.mubr.f32.mxu0 0.0
      %2818 = vmatmul.mubr.f32.gmra.mxu0 %v2651
      %v2819 = vpop.f32.mrf.mxu0
      %v2820 = vadd.f32 %v2496, %v2819
      %v2821 = vpop.f32.mrf.mxu0
      %2822 = vmatprep.mubr.f32.mxu0 0.0
      %2823 = vmatmul.mubr.f32.gmra.mxu0 %v2654
      %v2824 = vpop.f32.mrf.mxu0
      %v2825 = vadd.f32 %v2501, %v2824
      %v2826 = vpop.f32.mrf.mxu0
      %2827 = vmatprep.mubr.f32.mxu0 0.0
      %2828 = vmatmul.mubr.f32.gmra.mxu0 %v2657
      %v2829 = vpop.f32.mrf.mxu0
      %v2830 = vadd.f32 %v2506, %v2829
      %v2831 = vpop.f32.mrf.mxu0
      %2832 = vmatprep.mubr.f32.mxu0 0.0
      %2833 = vmatmul.mubr.f32.gmra.mxu0 %v2660
      %v2834 = vpop.f32.mrf.mxu0
      %v2835 = vadd.f32 %v2511, %v2834
      %v2836 = vpop.f32.mrf.mxu0
      %2837 = vmatprep.mubr.f32.mxu0 0.0
      %2838 = vmatmul.mubr.f32.gmra.mxu0 %v2663
      %v2839 = vpop.f32.mrf.mxu0
      %v2840 = vadd.f32 %v2516, %v2839
      %v2841 = vpop.f32.mrf.mxu0
      %2842 = vmatprep.mubr.f32.mxu0 0.0
      %2843 = vmatmul.mubr.f32.gmra.mxu0 %v2666
      %v2844 = vpop.f32.mrf.mxu0
      %v2845 = vadd.f32 %v2521, %v2844
      %v2846 = vpop.f32.mrf.mxu0
      %2847 = vmatprep.mubr.f32.mxu0 0.0
      %2848 = vmatmul.mubr.f32.gmra.mxu0 %v2669
      %v2849 = vpop.f32.mrf.mxu0
      %v2850 = vadd.f32 %v2526, %v2849
      %v2851 = vpop.f32.mrf.mxu0
      %2852 = vmatprep.mubr.f32.mxu0 0.0
      %2853 = vmatmul.mubr.f32.gmra.mxu0 %v2672
      %v2854 = vpop.f32.mrf.mxu0
      %v2855 = vadd.f32 %v2531, %v2854
      %v2856 = vpop.f32.mrf.mxu0
      %2857 = vmatprep.mubr.f32.mxu0 0.0
      %2858 = vmatmul.mubr.f32.gmra.mxu0 %v2675
      %v2859 = vpop.f32.mrf.mxu0
      %v2860 = vadd.f32 %v2536, %v2859
      %v2861 = vpop.f32.mrf.mxu0
      %2862 = vmatprep.mubr.f32.mxu0 0.0
      %2863 = vmatmul.mubr.f32.gmra.mxu0 %v2678
      %v2864 = vpop.f32.mrf.mxu0
      %v2865 = vadd.f32 %v2541, %v2864
      %v2866 = vpop.f32.mrf.mxu0
      %2867 = vmatprep.mubr.f32.mxu0 0.0
      %2868 = vmatmul.mubr.f32.gmra.mxu0 %v2681
      %v2869 = vpop.f32.mrf.mxu0
      %v2870 = vadd.f32 %v2546, %v2869
      %v2871 = vpop.f32.mrf.mxu0
      %2872 = vmatprep.mubr.f32.mxu0 0.0
      %2873 = vmatmul.mubr.f32.gmra.mxu0 %v2684
      %v2874 = vpop.f32.mrf.mxu0
      %v2875 = vadd.f32 %v2551, %v2874
      %v2876 = vpop.f32.mrf.mxu0
      %2877 = vmatprep.mubr.f32.mxu0 0.0
      %2878 = vmatmul.mubr.f32.gmra.mxu0 %v2687
      %v2879 = vpop.f32.mrf.mxu0
      %v2880 = vadd.f32 %v2556, %v2879
      %v2881 = vpop.f32.mrf.mxu0
      %2882 = vmatprep.mubr.f32.mxu0 0.0
      %2883 = vmatmul.mubr.f32.gmra.mxu0 %v2690
      %v2884 = vpop.f32.mrf.mxu0
      %v2885 = vadd.f32 %v2561, %v2884
      %v2886 = vpop.f32.mrf.mxu0
      %2887 = vmatprep.mubr.f32.mxu0 0.0
      %2888 = vmatmul.mubr.f32.gmra.mxu0 %v2693
      %v2889 = vpop.f32.mrf.mxu0
      %v2890 = vadd.f32 %v2566, %v2889
      %v2891 = vpop.f32.mrf.mxu0
      %2892 = vmatprep.mubr.f32.mxu0 0.0
      %2893 = vmatmul.mubr.f32.gmra.mxu0 %v2696
      %v2894 = vpop.f32.mrf.mxu0
      %v2895 = vadd.f32 %v2571, %v2894
      %v2896 = vpop.f32.mrf.mxu0
      %2897 = vmatprep.mubr.f32.mxu0 0.0
      %2898 = vmatmul.mubr.f32.gmra.mxu0 %v2699
      %v2899 = vpop.f32.mrf.mxu0
      %v2900 = vadd.f32 %v2576, %v2899
      %v2901 = vpop.f32.mrf.mxu0
      %2902 = vmatprep.mubr.f32.mxu0 0.0
      %2903 = vmatmul.mubr.f32.gmra.mxu0 %v2702
      %v2904 = vpop.f32.mrf.mxu0
      %v2905 = vadd.f32 %v2581, %v2904
      %v2906 = vpop.f32.mrf.mxu0
      %2907 = vmatprep.mubr.f32.mxu0 0.0
      %2908 = vmatmul.mubr.f32.gmra.mxu0 %v2705
      %v2909 = vpop.f32.mrf.mxu0
      %v2910 = vadd.f32 %v2586, %v2909
      %v2911 = vpop.f32.mrf.mxu0
      %2912 = vmatprep.mubr.f32.mxu0 0.0
      %2913 = vmatmul.mubr.f32.gmra.mxu0 %v2708
      %v2914 = vpop.f32.mrf.mxu0
      %v2915 = vadd.f32 %v2591, %v2914
      %v2916 = vpop.f32.mrf.mxu0
      %2917 = vmatprep.mubr.f32.mxu0 0.0
      %2918 = vmatmul.mubr.f32.gmra.mxu0 %v2711
      %v2919 = vpop.f32.mrf.mxu0
      %v2920 = vadd.f32 %v2596, %v2919
      %v2921 = vpop.f32.mrf.mxu0
      %2922 = vmatprep.mubr.f32.mxu0 0.0
      %2923 = vmatmul.mubr.f32.gmra.mxu0 %v2714
      %v2924 = vpop.f32.mrf.mxu0
      %v2925 = vadd.f32 %v2601, %v2924
      %v2926 = vpop.f32.mrf.mxu0
      %2927 = vmatprep.mubr.f32.mxu0 0.0
      %2928 = vmatmul.mubr.f32.gmra.mxu0 %v2717
      %v2929 = vpop.f32.mrf.mxu0
      %v2930 = vadd.f32 %v2606, %v2929
      %v2931 = vpop.f32.mrf.mxu0
      %2932 = vmatprep.mubr.f32.mxu0 0.0
      %2933 = vmatmul.mubr.f32.gmra.mxu0 %v2720
      %v2934 = vpop.f32.mrf.mxu0
      %v2935 = vadd.f32 %v2611, %v2934
      %v2936 = vpop.f32.mrf.mxu0
      %2937 = vmatprep.mubr.f32.mxu0 0.0
      %2938 = vmatmul.mubr.f32.gmra.mxu0 %v2723
      %v2939 = vpop.f32.mrf.mxu0
      %v2940 = vadd.f32 %v2616, %v2939
      %v2941 = vpop.f32.mrf.mxu0
      %2942 = vmatprep.mubr.f32.mxu0 0.0
      %2943 = vmatmul.mubr.f32.gmra.mxu0 %v2726
      %v2944 = vpop.f32.mrf.mxu0
      %v2945 = vadd.f32 %v2621, %v2944
      %v2946 = vpop.f32.mrf.mxu0
      %2947 = vmatprep.mubr.f32.mxu0 0.0
      %2948 = vmatmul.mubr.f32.gmra.mxu0 %v2729
      %v2949 = vpop.f32.mrf.mxu0
      %v2950 = vadd.f32 %v2626, %v2949
      %v2951 = vpop.f32.mrf.mxu0
      %2952 = vmatprep.mubr.f32.mxu0 0.0
      %2953 = vmatmul.mubr.f32.gmra.mxu0 %v2732
      %v2954 = vpop.f32.mrf.mxu0
      %v2955 = vadd.f32 %v2631, %v2954
      %v2956 = vpop.f32.mrf.mxu0
      %2957 = vmatprep.mubr.f32.mxu0 0.0
      %2958 = vmatmul.mubr.f32.gmra.mxu0 %v2735
      %v2959 = vpop.f32.mrf.mxu0
      %v2960 = vadd.f32 %v2636, %v2959
      %v2961 = vpop.f32.mrf.mxu0
      %2962 = vmatprep.mubr.f32.mxu0 0.0
      %2963 = vmatmul.mubr.f32.gmra.mxu0 %v2738
      %v2964 = vpop.f32.mrf.mxu0
      %v2965 = vadd.f32 %v2641, %v2964
      %v2966 = vpop.f32.mrf.mxu0
      %2967 = vdwg.mxu0
      %v2968 = vld [vmem:[%s731] sm:$0x1]
      %v2970 = vlaneseq
      %v2971 = vshrl.u32 %v2970, 7
      %v2972 = vsub.s32 0, %v2971
      %v2973 = vrot.slane %v2968, %v2972
      %v2975 = vmul.f32 %v1997, %v2973
      %v2976 = vmul.f32 %v2000, %v2973
      %v2977 = vmul.f32 %v2003, %v2973
      %v2978 = vmul.f32 %v2006, %v2973
      %v2979 = vmul.f32 %v2009, %v2973
      %v2980 = vmul.f32 %v2012, %v2973
      %v2981 = vmul.f32 %v2015, %v2973
      %v2982 = vmul.f32 %v2018, %v2973
      %v2983 = vmul.f32 %v2021, %v2973
      %v2984 = vmul.f32 %v2024, %v2973
      %v2985 = vmul.f32 %v2027, %v2973
      %v2986 = vmul.f32 %v2030, %v2973
      %v2987 = vmul.f32 %v2033, %v2973
      %v2988 = vmul.f32 %v2036, %v2973
      %v2989 = vmul.f32 %v2039, %v2973
      %v2990 = vmul.f32 %v2042, %v2973
      %v2991 = vmul.f32 %v2045, %v2973
      %v2992 = vmul.f32 %v2048, %v2973
      %v2993 = vmul.f32 %v2051, %v2973
      %v2994 = vmul.f32 %v2054, %v2973
      %v2995 = vmul.f32 %v2057, %v2973
      %v2996 = vmul.f32 %v2060, %v2973
      %v2997 = vmul.f32 %v2063, %v2973
      %v2998 = vmul.f32 %v2066, %v2973
      %v2999 = vmul.f32 %v2069, %v2973
      %v3000 = vmul.f32 %v2072, %v2973
      %v3001 = vmul.f32 %v2075, %v2973
      %v3002 = vmul.f32 %v2078, %v2973
      %v3003 = vmul.f32 %v2081, %v2973
      %v3004 = vmul.f32 %v2084, %v2973
      %v3005 = vmul.f32 %v2087, %v2973
      %v3006 = vmul.f32 %v2090, %v2973
      %v3007 = vadd.f32 %v2810, %v2975
      %v3008 = vadd.f32 %v2815, %v2976
      %v3009 = vadd.f32 %v2820, %v2977
      %v3010 = vadd.f32 %v2825, %v2978
      %v3011 = vadd.f32 %v2830, %v2979
      %v3012 = vadd.f32 %v2835, %v2980
      %v3013 = vadd.f32 %v2840, %v2981
      %v3014 = vadd.f32 %v2845, %v2982
      %v3015 = vadd.f32 %v2850, %v2983
      %v3016 = vadd.f32 %v2855, %v2984
      %v3017 = vadd.f32 %v2860, %v2985
      %v3018 = vadd.f32 %v2865, %v2986
      %v3019 = vadd.f32 %v2870, %v2987
      %v3020 = vadd.f32 %v2875, %v2988
      %v3021 = vadd.f32 %v2880, %v2989
      %v3022 = vadd.f32 %v2885, %v2990
      %v3023 = vadd.f32 %v2890, %v2991
      %v3024 = vadd.f32 %v2895, %v2992
      %v3025 = vadd.f32 %v2900, %v2993
      %v3026 = vadd.f32 %v2905, %v2994
      %v3027 = vadd.f32 %v2910, %v2995
      %v3028 = vadd.f32 %v2915, %v2996
      %v3029 = vadd.f32 %v2920, %v2997
      %v3030 = vadd.f32 %v2925, %v2998
      %v3031 = vadd.f32 %v2930, %v2999
      %v3032 = vadd.f32 %v2935, %v3000
      %v3033 = vadd.f32 %v2940, %v3001
      %v3034 = vadd.f32 %v2945, %v3002
      %v3035 = vadd.f32 %v2950, %v3003
      %v3036 = vadd.f32 %v2955, %v3004
      %v3037 = vadd.f32 %v2960, %v3005
      %v3038 = vadd.f32 %v2965, %v3006
      %v3039 = vld [vmem:[%s734] sm:$0x1]
      %v3041 = vlaneseq
      %v3042 = vshrl.u32 %v3041, 7
      %v3043 = vsub.s32 0, %v3042
      %v3044 = vrot.slane %v3039, %v3043
      %v3046 = vadd.f32 %v3007, %v3044
      %v3047 = vadd.f32 %v3008, %v3044
      %v3048 = vadd.f32 %v3009, %v3044
      %v3049 = vadd.f32 %v3010, %v3044
      %v3050 = vadd.f32 %v3011, %v3044
      %v3051 = vadd.f32 %v3012, %v3044
      %v3052 = vadd.f32 %v3013, %v3044
      %v3053 = vadd.f32 %v3014, %v3044
      %v3054 = vadd.f32 %v3015, %v3044
      %v3055 = vadd.f32 %v3016, %v3044
      %v3056 = vadd.f32 %v3017, %v3044
      %v3057 = vadd.f32 %v3018, %v3044
      %v3058 = vadd.f32 %v3019, %v3044
      %v3059 = vadd.f32 %v3020, %v3044
      %v3060 = vadd.f32 %v3021, %v3044
      %v3061 = vadd.f32 %v3022, %v3044
      %v3062 = vadd.f32 %v3023, %v3044
      %v3063 = vadd.f32 %v3024, %v3044
      %v3064 = vadd.f32 %v3025, %v3044
      %v3065 = vadd.f32 %v3026, %v3044
      %v3066 = vadd.f32 %v3027, %v3044
      %v3067 = vadd.f32 %v3028, %v3044
      %v3068 = vadd.f32 %v3029, %v3044
      %v3069 = vadd.f32 %v3030, %v3044
      %v3070 = vadd.f32 %v3031, %v3044
      %v3071 = vadd.f32 %v3032, %v3044
      %v3072 = vadd.f32 %v3033, %v3044
      %v3073 = vadd.f32 %v3034, %v3044
      %v3074 = vadd.f32 %v3035, %v3044
      %v3075 = vadd.f32 %v3036, %v3044
      %v3076 = vadd.f32 %v3037, %v3044
      %v3077 = vadd.f32 %v3038, %v3044
      %v3078 = vxor.u32 %v3046, 2147483648
      %v3079 = vxor.u32 %v3047, 2147483648
      %v3080 = vxor.u32 %v3048, 2147483648
      %v3081 = vxor.u32 %v3049, 2147483648
      %v3082 = vxor.u32 %v3050, 2147483648
      %v3083 = vxor.u32 %v3051, 2147483648
      %v3084 = vxor.u32 %v3052, 2147483648
      %v3085 = vxor.u32 %v3053, 2147483648
      %v3086 = vxor.u32 %v3054, 2147483648
      %v3087 = vxor.u32 %v3055, 2147483648
      %v3088 = vxor.u32 %v3056, 2147483648
      %v3089 = vxor.u32 %v3057, 2147483648
      %v3090 = vxor.u32 %v3058, 2147483648
      %v3091 = vxor.u32 %v3059, 2147483648
      %v3092 = vxor.u32 %v3060, 2147483648
      %v3093 = vxor.u32 %v3061, 2147483648
      %v3094 = vxor.u32 %v3062, 2147483648
      %v3095 = vxor.u32 %v3063, 2147483648
      %v3096 = vxor.u32 %v3064, 2147483648
      %v3097 = vxor.u32 %v3065, 2147483648
      %v3098 = vxor.u32 %v3066, 2147483648
      %v3099 = vxor.u32 %v3067, 2147483648
      %v3100 = vxor.u32 %v3068, 2147483648
      %v3101 = vxor.u32 %v3069, 2147483648
      %v3102 = vxor.u32 %v3070, 2147483648
      %v3103 = vxor.u32 %v3071, 2147483648
      %v3104 = vxor.u32 %v3072, 2147483648
      %v3105 = vxor.u32 %v3073, 2147483648
      %v3106 = vxor.u32 %v3074, 2147483648
      %v3107 = vxor.u32 %v3075, 2147483648
      %v3108 = vxor.u32 %v3076, 2147483648
      %v3109 = vxor.u32 %v3077, 2147483648
      %v3110 = vmul.f32 %v3078, 1.442695
      %v3111 = vpow.pop %v3110
      %v3112 = vmul.f32 %v3079, 1.442695
      %v3113 = vpow.pop %v3112
      %v3114 = vmul.f32 %v3080, 1.442695
      %v3115 = vpow.pop %v3114
      %v3116 = vmul.f32 %v3081, 1.442695
      %v3117 = vpow.pop %v3116
      %v3118 = vmul.f32 %v3082, 1.442695
      %v3119 = vpow.pop %v3118
      %v3120 = vmul.f32 %v3083, 1.442695
      %v3121 = vpow.pop %v3120
      %v3122 = vmul.f32 %v3084, 1.442695
      %v3123 = vpow.pop %v3122
      %v3124 = vmul.f32 %v3085, 1.442695
      %v3125 = vpow.pop %v3124
      %v3126 = vmul.f32 %v3086, 1.442695
      %v3127 = vpow.pop %v3126
      %v3128 = vmul.f32 %v3087, 1.442695
      %v3129 = vpow.pop %v3128
      %v3130 = vmul.f32 %v3088, 1.442695
      %v3131 = vpow.pop %v3130
      %v3132 = vmul.f32 %v3089, 1.442695
      %v3133 = vpow.pop %v3132
      %v3134 = vmul.f32 %v3090, 1.442695
      %v3135 = vpow.pop %v3134
      %v3136 = vmul.f32 %v3091, 1.442695
      %v3137 = vpow.pop %v3136
      %v3138 = vmul.f32 %v3092, 1.442695
      %v3139 = vpow.pop %v3138
      %v3140 = vmul.f32 %v3093, 1.442695
      %v3141 = vpow.pop %v3140
      %v3142 = vmul.f32 %v3094, 1.442695
      %v3143 = vpow.pop %v3142
      %v3144 = vmul.f32 %v3095, 1.442695
      %v3145 = vpow.pop %v3144
      %v3146 = vmul.f32 %v3096, 1.442695
      %v3147 = vpow.pop %v3146
      %v3148 = vmul.f32 %v3097, 1.442695
      %v3149 = vpow.pop %v3148
      %v3150 = vmul.f32 %v3098, 1.442695
      %v3151 = vpow.pop %v3150
      %v3152 = vmul.f32 %v3099, 1.442695
      %v3153 = vpow.pop %v3152
      %v3154 = vmul.f32 %v3100, 1.442695
      %v3155 = vpow.pop %v3154
      %v3156 = vmul.f32 %v3101, 1.442695
      %v3157 = vpow.pop %v3156
      %v3158 = vmul.f32 %v3102, 1.442695
      %v3159 = vpow.pop %v3158
      %v3160 = vmul.f32 %v3103, 1.442695
      %v3161 = vpow.pop %v3160
      %v3162 = vmul.f32 %v3104, 1.442695
      %v3163 = vpow.pop %v3162
      %v3164 = vmul.f32 %v3105, 1.442695
      %v3165 = vpow.pop %v3164
      %v3166 = vmul.f32 %v3106, 1.442695
      %v3167 = vpow.pop %v3166
      %v3168 = vmul.f32 %v3107, 1.442695
      %v3169 = vpow.pop %v3168
      %v3170 = vmul.f32 %v3108, 1.442695
      %v3171 = vpow.pop %v3170
      %v3172 = vmul.f32 %v3109, 1.442695
      %v3173 = vpow.pop %v3172
      %v3174 = vadd.f32 %v3111, 1.0
      %v3175 = vadd.f32 %v3113, 1.0
      %v3176 = vadd.f32 %v3115, 1.0
      %v3177 = vadd.f32 %v3117, 1.0
      %v3178 = vadd.f32 %v3119, 1.0
      %v3179 = vadd.f32 %v3121, 1.0
      %v3180 = vadd.f32 %v3123, 1.0
      %v3181 = vadd.f32 %v3125, 1.0
      %v3182 = vadd.f32 %v3127, 1.0
      %v3183 = vadd.f32 %v3129, 1.0
      %v3184 = vadd.f32 %v3131, 1.0
      %v3185 = vadd.f32 %v3133, 1.0
      %v3186 = vadd.f32 %v3135, 1.0
      %v3187 = vadd.f32 %v3137, 1.0
      %v3188 = vadd.f32 %v3139, 1.0
      %v3189 = vadd.f32 %v3141, 1.0
      %v3190 = vadd.f32 %v3143, 1.0
      %v3191 = vadd.f32 %v3145, 1.0
      %v3192 = vadd.f32 %v3147, 1.0
      %v3193 = vadd.f32 %v3149, 1.0
      %v3194 = vadd.f32 %v3151, 1.0
      %v3195 = vadd.f32 %v3153, 1.0
      %v3196 = vadd.f32 %v3155, 1.0
      %v3197 = vadd.f32 %v3157, 1.0
      %v3198 = vadd.f32 %v3159, 1.0
      %v3199 = vadd.f32 %v3161, 1.0
      %v3200 = vadd.f32 %v3163, 1.0
      %v3201 = vadd.f32 %v3165, 1.0
      %v3202 = vadd.f32 %v3167, 1.0
      %v3203 = vadd.f32 %v3169, 1.0
      %v3204 = vadd.f32 %v3171, 1.0
      %v3205 = vadd.f32 %v3173, 1.0
      %v3206 = vrcp.pop %v3174
      %v3207 = vmul.f32 1.0, %v3206
      %v3208 = vrcp.pop %v3175
      %v3209 = vmul.f32 1.0, %v3208
      %v3210 = vrcp.pop %v3176
      %v3211 = vmul.f32 1.0, %v3210
      %v3212 = vrcp.pop %v3177
      %v3213 = vmul.f32 1.0, %v3212
      %v3214 = vrcp.pop %v3178
      %v3215 = vmul.f32 1.0, %v3214
      %v3216 = vrcp.pop %v3179
      %v3217 = vmul.f32 1.0, %v3216
      %v3218 = vrcp.pop %v3180
      %v3219 = vmul.f32 1.0, %v3218
      %v3220 = vrcp.pop %v3181
      %v3221 = vmul.f32 1.0, %v3220
      %v3222 = vrcp.pop %v3182
      %v3223 = vmul.f32 1.0, %v3222
      %v3224 = vrcp.pop %v3183
      %v3225 = vmul.f32 1.0, %v3224
      %v3226 = vrcp.pop %v3184
      %v3227 = vmul.f32 1.0, %v3226
      %v3228 = vrcp.pop %v3185
      %v3229 = vmul.f32 1.0, %v3228
      %v3230 = vrcp.pop %v3186
      %v3231 = vmul.f32 1.0, %v3230
      %v3232 = vrcp.pop %v3187
      %v3233 = vmul.f32 1.0, %v3232
      %v3234 = vrcp.pop %v3188
      %v3235 = vmul.f32 1.0, %v3234
      %v3236 = vrcp.pop %v3189
      %v3237 = vmul.f32 1.0, %v3236
      %v3238 = vrcp.pop %v3190
      %v3239 = vmul.f32 1.0, %v3238
      %v3240 = vrcp.pop %v3191
      %v3241 = vmul.f32 1.0, %v3240
      %v3242 = vrcp.pop %v3192
      %v3243 = vmul.f32 1.0, %v3242
      %v3244 = vrcp.pop %v3193
      %v3245 = vmul.f32 1.0, %v3244
      %v3246 = vrcp.pop %v3194
      %v3247 = vmul.f32 1.0, %v3246
      %v3248 = vrcp.pop %v3195
      %v3249 = vmul.f32 1.0, %v3248
      %v3250 = vrcp.pop %v3196
      %v3251 = vmul.f32 1.0, %v3250
      %v3252 = vrcp.pop %v3197
      %v3253 = vmul.f32 1.0, %v3252
      %v3254 = vrcp.pop %v3198
      %v3255 = vmul.f32 1.0, %v3254
      %v3256 = vrcp.pop %v3199
      %v3257 = vmul.f32 1.0, %v3256
      %v3258 = vrcp.pop %v3200
      %v3259 = vmul.f32 1.0, %v3258
      %v3260 = vrcp.pop %v3201
      %v3261 = vmul.f32 1.0, %v3260
      %v3262 = vrcp.pop %v3202
      %v3263 = vmul.f32 1.0, %v3262
      %v3264 = vrcp.pop %v3203
      %v3265 = vmul.f32 1.0, %v3264
      %v3266 = vrcp.pop %v3204
      %v3267 = vmul.f32 1.0, %v3266
      %v3268 = vrcp.pop %v3205
      %v3269 = vmul.f32 1.0, %v3268
      %v3270 = vmul.f32 %v3046, %v3207
      %v3271 = vmul.f32 %v3047, %v3209
      %v3272 = vmul.f32 %v3048, %v3211
      %v3273 = vmul.f32 %v3049, %v3213
      %v3274 = vmul.f32 %v3050, %v3215
      %v3275 = vmul.f32 %v3051, %v3217
      %v3276 = vmul.f32 %v3052, %v3219
      %v3277 = vmul.f32 %v3053, %v3221
      %v3278 = vmul.f32 %v3054, %v3223
      %v3279 = vmul.f32 %v3055, %v3225
      %v3280 = vmul.f32 %v3056, %v3227
      %v3281 = vmul.f32 %v3057, %v3229
      %v3282 = vmul.f32 %v3058, %v3231
      %v3283 = vmul.f32 %v3059, %v3233
      %v3284 = vmul.f32 %v3060, %v3235
      %v3285 = vmul.f32 %v3061, %v3237
      %v3286 = vmul.f32 %v3062, %v3239
      %v3287 = vmul.f32 %v3063, %v3241
      %v3288 = vmul.f32 %v3064, %v3243
      %v3289 = vmul.f32 %v3065, %v3245
      %v3290 = vmul.f32 %v3066, %v3247
      %v3291 = vmul.f32 %v3067, %v3249
      %v3292 = vmul.f32 %v3068, %v3251
      %v3293 = vmul.f32 %v3069, %v3253
      %v3294 = vmul.f32 %v3070, %v3255
      %v3295 = vmul.f32 %v3071, %v3257
      %v3296 = vmul.f32 %v3072, %v3259
      %v3297 = vmul.f32 %v3073, %v3261
      %v3298 = vmul.f32 %v3074, %v3263
      %v3299 = vmul.f32 %v3075, %v3265
      %v3300 = vmul.f32 %v3076, %v3267
      %v3301 = vmul.f32 %v3077, %v3269
      %v3302 = vld [vmem:[%s739] sm:$0xff]
      %v3303 = vld [vmem:[%s739 + $0x8] sm:$0xff]
      %v3304 = vld [vmem:[%s739 + $0x10] sm:$0x3f]
      %v3305 = vld [vmem:[%s742] sm:$0x1]
      %v3307 = vlaneseq
      %v3308 = vshrl.u32 %v3307, 7
      %v3309 = vsub.s32 0, %v3308
      %v3310 = vrot.slane %v3305, %v3309
      %vm3312 = vcmask 179200
      %v3314 = vsel %vm3312, %v3270, 0
      %v3317 = vsel %vm3312, %v3271, 0
      %v3320 = vsel %vm3312, %v3272, 0
      %v3323 = vsel %vm3312, %v3273, 0
      %v3326 = vsel %vm3312, %v3274, 0
      %v3329 = vsel %vm3312, %v3275, 0
      %v3332 = vsel %vm3312, %v3276, 0
      %v3335 = vsel %vm3312, %v3277, 0
      %v3338 = vsel %vm3312, %v3278, 0
      %v3341 = vsel %vm3312, %v3279, 0
      %v3344 = vsel %vm3312, %v3280, 0
      %v3347 = vsel %vm3312, %v3281, 0
      %v3350 = vsel %vm3312, %v3282, 0
      %v3353 = vsel %vm3312, %v3283, 0
      %v3356 = vsel %vm3312, %v3284, 0
      %v3359 = vsel %vm3312, %v3285, 0
      %v3362 = vsel %vm3312, %v3286, 0
      %v3365 = vsel %vm3312, %v3287, 0
      %v3368 = vsel %vm3312, %v3288, 0
      %v3371 = vsel %vm3312, %v3289, 0
      %v3374 = vsel %vm3312, %v3290, 0
      %v3377 = vsel %vm3312, %v3291, 0
      %v3380 = vsel %vm3312, %v3292, 0
      %v3383 = vsel %vm3312, %v3293, 0
      %v3386 = vsel %vm3312, %v3294, 0
      %v3389 = vsel %vm3312, %v3295, 0
      %v3392 = vsel %vm3312, %v3296, 0
      %v3395 = vsel %vm3312, %v3297, 0
      %v3398 = vsel %vm3312, %v3298, 0
      %v3401 = vsel %vm3312, %v3299, 0
      %v3404 = vsel %vm3312, %v3300, 0
      %v3407 = vsel %vm3312, %v3301, 0
      %v3410 = vsel %vm2415, %v3304, 0
      %3412 = vmatprep.subr.mxu0 0.0
      %3413 = vmatpush1.msra.mxu0 0.0
      %3414 = vmatprep.subr.mxu0 0.0
      %3415 = vmatpush1.msra.mxu0 0.0
      %3416 = vmatprep.subr.mxu0 0.0
      %3417 = vmatpush1.msra.mxu0 0.0
      %3418 = vmatprep.subr.mxu0 0.0
      %3419 = vmatpush1.msra.mxu0 0.0
      %3420 = vmatprep.subr.mxu0 0.0
      %3421 = vmatpush1.msra.mxu0 0.0
      %3422 = vmatprep.subr.mxu0 0.0
      %3423 = vmatpush1.msra.mxu0 0.0
      %3424 = vmatprep.subr.mxu0 0.0
      %3425 = vmatpush1.msra.mxu0 0.0
      %3426 = vmatprep.subr.mxu0 0.0
      %3427 = vmatpush1.msra.mxu0 0.0
      %3428 = vmatprep.subr.mxu0 0.0
      %3429 = vmatpush1.msra.mxu0 0.0
      %3430 = vmatprep.subr.mxu0 0.0
      %3431 = vmatpush1.msra.mxu0 0.0
      %3432 = vmatprep.subr.mxu0 0.0
      %3433 = vmatpush1.msra.mxu0 0.0
      %3434 = vmatprep.subr.mxu0 0.0
      %3435 = vmatpush1.msra.mxu0 0.0
      %3436 = vmatprep.subr.mxu0 0.0
      %3437 = vmatpush1.msra.mxu0 0.0
      %3438 = vmatprep.subr.mxu0 0.0
      %3439 = vmatpush1.msra.mxu0 %v3410
      %3440 = vmatprep.subr.mxu0 0.0
      %3441 = vmatpush1.msra.mxu0 %v3303
      %3442 = vmatprep.subr.mxu0 0.0
      %3443 = vmatpush1.msra.mxu0 %v3302
      %3444 = vmatprep.subr.mxu0 0.0
      %3445 = vmatpush2.msra.mxu0 0.0
      %3446 = vmatprep.subr.mxu0 0.0
      %3447 = vmatpush2.msra.mxu0 0.0
      %3448 = vmatprep.subr.mxu0 0.0
      %3449 = vmatpush2.msra.mxu0 0.0
      %3450 = vmatprep.subr.mxu0 0.0
      %3451 = vmatpush2.msra.mxu0 0.0
      %3452 = vmatprep.subr.mxu0 0.0
      %3453 = vmatpush2.msra.mxu0 0.0
      %3454 = vmatprep.subr.mxu0 0.0
      %3455 = vmatpush2.msra.mxu0 0.0
      %3456 = vmatprep.subr.mxu0 0.0
      %3457 = vmatpush2.msra.mxu0 0.0
      %3458 = vmatprep.subr.mxu0 0.0
      %3459 = vmatpush2.msra.mxu0 0.0
      %3460 = vmatprep.subr.mxu0 0.0
      %3461 = vmatpush2.msra.mxu0 0.0
      %3462 = vmatprep.subr.mxu0 0.0
      %3463 = vmatpush2.msra.mxu0 0.0
      %3464 = vmatprep.subr.mxu0 0.0
      %3465 = vmatpush2.msra.mxu0 0.0
      %3466 = vmatprep.subr.mxu0 0.0
      %3467 = vmatpush2.msra.mxu0 0.0
      %3468 = vmatprep.subr.mxu0 0.0
      %3469 = vmatpush2.msra.mxu0 0.0
      %3470 = vmatprep.subr.mxu0 0.0
      %3471 = vmatpush2.msra.mxu0 0.0
      %3472 = vmatprep.subr.mxu0 0.0
      %3473 = vmatpush2.msra.mxu0 0.0
      %3474 = vmatprep.subr.mxu0 0.0
      %3475 = vmatpush2.msra.mxu0 0.0
      %3476 = vmatprep.mubr.f32.mxu0 0.0
      %3477 = vmatmul.mubr.f32.gmra.mxu0 %v3314
      %v3478 = vpop.f32.mrf.mxu0
      %v3479 = vadd.f32 %v3310, %v3478
      %v3480 = vpop.f32.mrf.mxu0
      %3481 = vmatprep.mubr.f32.mxu0 0.0
      %3482 = vmatmul.mubr.f32.gmra.mxu0 %v3317
      %v3483 = vpop.f32.mrf.mxu0
      %v3484 = vadd.f32 %v3310, %v3483
      %v3485 = vpop.f32.mrf.mxu0
      %3486 = vmatprep.mubr.f32.mxu0 0.0
      %3487 = vmatmul.mubr.f32.gmra.mxu0 %v3320
      %v3488 = vpop.f32.mrf.mxu0
      %v3489 = vadd.f32 %v3310, %v3488
      %v3490 = vpop.f32.mrf.mxu0
      %3491 = vmatprep.mubr.f32.mxu0 0.0
      %3492 = vmatmul.mubr.f32.gmra.mxu0 %v3323
      %v3493 = vpop.f32.mrf.mxu0
      %v3494 = vadd.f32 %v3310, %v3493
      %v3495 = vpop.f32.mrf.mxu0
      %3496 = vmatprep.mubr.f32.mxu0 0.0
      %3497 = vmatmul.mubr.f32.gmra.mxu0 %v3326
      %v3498 = vpop.f32.mrf.mxu0
      %v3499 = vadd.f32 %v3310, %v3498
      %v3500 = vpop.f32.mrf.mxu0
      %3501 = vmatprep.mubr.f32.mxu0 0.0
      %3502 = vmatmul.mubr.f32.gmra.mxu0 %v3329
      %v3503 = vpop.f32.mrf.mxu0
      %v3504 = vadd.f32 %v3310, %v3503
      %v3505 = vpop.f32.mrf.mxu0
      %3506 = vmatprep.mubr.f32.mxu0 0.0
      %3507 = vmatmul.mubr.f32.gmra.mxu0 %v3332
      %v3508 = vpop.f32.mrf.mxu0
      %v3509 = vadd.f32 %v3310, %v3508
      %v3510 = vpop.f32.mrf.mxu0
      %3511 = vmatprep.mubr.f32.mxu0 0.0
      %3512 = vmatmul.mubr.f32.gmra.mxu0 %v3335
      %v3513 = vpop.f32.mrf.mxu0
      %v3514 = vadd.f32 %v3310, %v3513
      %v3515 = vpop.f32.mrf.mxu0
      %3516 = vmatprep.mubr.f32.mxu0 0.0
      %3517 = vmatmul.mubr.f32.gmra.mxu0 %v3338
      %v3518 = vpop.f32.mrf.mxu0
      %v3519 = vadd.f32 %v3310, %v3518
      %v3520 = vpop.f32.mrf.mxu0
      %3521 = vmatprep.mubr.f32.mxu0 0.0
      %3522 = vmatmul.mubr.f32.gmra.mxu0 %v3341
      %v3523 = vpop.f32.mrf.mxu0
      %v3524 = vadd.f32 %v3310, %v3523
      %v3525 = vpop.f32.mrf.mxu0
      %3526 = vmatprep.mubr.f32.mxu0 0.0
      %3527 = vmatmul.mubr.f32.gmra.mxu0 %v3344
      %v3528 = vpop.f32.mrf.mxu0
      %v3529 = vadd.f32 %v3310, %v3528
      %v3530 = vpop.f32.mrf.mxu0
      %3531 = vmatprep.mubr.f32.mxu0 0.0
      %3532 = vmatmul.mubr.f32.gmra.mxu0 %v3347
      %v3533 = vpop.f32.mrf.mxu0
      %v3534 = vadd.f32 %v3310, %v3533
      %v3535 = vpop.f32.mrf.mxu0
      %3536 = vmatprep.mubr.f32.mxu0 0.0
      %3537 = vmatmul.mubr.f32.gmra.mxu0 %v3350
      %v3538 = vpop.f32.mrf.mxu0
      %v3539 = vadd.f32 %v3310, %v3538
      %v3540 = vpop.f32.mrf.mxu0
      %3541 = vmatprep.mubr.f32.mxu0 0.0
      %3542 = vmatmul.mubr.f32.gmra.mxu0 %v3353
      %v3543 = vpop.f32.mrf.mxu0
      %v3544 = vadd.f32 %v3310, %v3543
      %v3545 = vpop.f32.mrf.mxu0
      %3546 = vmatprep.mubr.f32.mxu0 0.0
      %3547 = vmatmul.mubr.f32.gmra.mxu0 %v3356
      %v3548 = vpop.f32.mrf.mxu0
      %v3549 = vadd.f32 %v3310, %v3548
      %v3550 = vpop.f32.mrf.mxu0
      %3551 = vmatprep.mubr.f32.mxu0 0.0
      %3552 = vmatmul.mubr.f32.gmra.mxu0 %v3359
      %v3553 = vpop.f32.mrf.mxu0
      %v3554 = vadd.f32 %v3310, %v3553
      %v3555 = vpop.f32.mrf.mxu0
      %3556 = vmatprep.mubr.f32.mxu0 0.0
      %3557 = vmatmul.mubr.f32.gmra.mxu0 %v3362
      %v3558 = vpop.f32.mrf.mxu0
      %v3559 = vadd.f32 %v3310, %v3558
      %v3560 = vpop.f32.mrf.mxu0
      %3561 = vmatprep.mubr.f32.mxu0 0.0
      %3562 = vmatmul.mubr.f32.gmra.mxu0 %v3365
      %v3563 = vpop.f32.mrf.mxu0
      %v3564 = vadd.f32 %v3310, %v3563
      %v3565 = vpop.f32.mrf.mxu0
      %3566 = vmatprep.mubr.f32.mxu0 0.0
      %3567 = vmatmul.mubr.f32.gmra.mxu0 %v3368
      %v3568 = vpop.f32.mrf.mxu0
      %v3569 = vadd.f32 %v3310, %v3568
      %v3570 = vpop.f32.mrf.mxu0
      %3571 = vmatprep.mubr.f32.mxu0 0.0
      %3572 = vmatmul.mubr.f32.gmra.mxu0 %v3371
      %v3573 = vpop.f32.mrf.mxu0
      %v3574 = vadd.f32 %v3310, %v3573
      %v3575 = vpop.f32.mrf.mxu0
      %3576 = vmatprep.mubr.f32.mxu0 0.0
      %3577 = vmatmul.mubr.f32.gmra.mxu0 %v3374
      %v3578 = vpop.f32.mrf.mxu0
      %v3579 = vadd.f32 %v3310, %v3578
      %v3580 = vpop.f32.mrf.mxu0
      %3581 = vmatprep.mubr.f32.mxu0 0.0
      %3582 = vmatmul.mubr.f32.gmra.mxu0 %v3377
      %v3583 = vpop.f32.mrf.mxu0
      %v3584 = vadd.f32 %v3310, %v3583
      %v3585 = vpop.f32.mrf.mxu0
      %3586 = vmatprep.mubr.f32.mxu0 0.0
      %3587 = vmatmul.mubr.f32.gmra.mxu0 %v3380
      %v3588 = vpop.f32.mrf.mxu0
      %v3589 = vadd.f32 %v3310, %v3588
      %v3590 = vpop.f32.mrf.mxu0
      %3591 = vmatprep.mubr.f32.mxu0 0.0
      %3592 = vmatmul.mubr.f32.gmra.mxu0 %v3383
      %v3593 = vpop.f32.mrf.mxu0
      %v3594 = vadd.f32 %v3310, %v3593
      %v3595 = vpop.f32.mrf.mxu0
      %3596 = vmatprep.mubr.f32.mxu0 0.0
      %3597 = vmatmul.mubr.f32.gmra.mxu0 %v3386
      %v3598 = vpop.f32.mrf.mxu0
      %v3599 = vadd.f32 %v3310, %v3598
      %v3600 = vpop.f32.mrf.mxu0
      %3601 = vmatprep.mubr.f32.mxu0 0.0
      %3602 = vmatmul.mubr.f32.gmra.mxu0 %v3389
      %v3603 = vpop.f32.mrf.mxu0
      %v3604 = vadd.f32 %v3310, %v3603
      %v3605 = vpop.f32.mrf.mxu0
      %3606 = vmatprep.mubr.f32.mxu0 0.0
      %3607 = vmatmul.mubr.f32.gmra.mxu0 %v3392
      %v3608 = vpop.f32.mrf.mxu0
      %v3609 = vadd.f32 %v3310, %v3608
      %v3610 = vpop.f32.mrf.mxu0
      %3611 = vmatprep.mubr.f32.mxu0 0.0
      %3612 = vmatmul.mubr.f32.gmra.mxu0 %v3395
      %v3613 = vpop.f32.mrf.mxu0
      %v3614 = vadd.f32 %v3310, %v3613
      %v3615 = vpop.f32.mrf.mxu0
      %3616 = vmatprep.mubr.f32.mxu0 0.0
      %3617 = vmatmul.mubr.f32.gmra.mxu0 %v3398
      %v3618 = vpop.f32.mrf.mxu0
      %v3619 = vadd.f32 %v3310, %v3618
      %v3620 = vpop.f32.mrf.mxu0
      %3621 = vmatprep.mubr.f32.mxu0 0.0
      %3622 = vmatmul.mubr.f32.gmra.mxu0 %v3401
      %v3623 = vpop.f32.mrf.mxu0
      %v3624 = vadd.f32 %v3310, %v3623
      %v3625 = vpop.f32.mrf.mxu0
      %3626 = vmatprep.mubr.f32.mxu0 0.0
      %3627 = vmatmul.mubr.f32.gmra.mxu0 %v3404
      %v3628 = vpop.f32.mrf.mxu0
      %v3629 = vadd.f32 %v3310, %v3628
      %v3630 = vpop.f32.mrf.mxu0
      %3631 = vmatprep.mubr.f32.mxu0 0.0
      %3632 = vmatmul.mubr.f32.gmra.mxu0 %v3407
      %v3633 = vpop.f32.mrf.mxu0
      %v3634 = vadd.f32 %v3310, %v3633
      %v3635 = vpop.f32.mrf.mxu0
      %3636 = vdwg.mxu0
      %v3637 = vxor.u32 %v3479, 2147483648
      %v3638 = vxor.u32 %v3484, 2147483648
      %v3639 = vxor.u32 %v3489, 2147483648
      %v3640 = vxor.u32 %v3494, 2147483648
      %v3641 = vxor.u32 %v3499, 2147483648
      %v3642 = vxor.u32 %v3504, 2147483648
      %v3643 = vxor.u32 %v3509, 2147483648
      %v3644 = vxor.u32 %v3514, 2147483648
      %v3645 = vxor.u32 %v3519, 2147483648
      %v3646 = vxor.u32 %v3524, 2147483648
      %v3647 = vxor.u32 %v3529, 2147483648
      %v3648 = vxor.u32 %v3534, 2147483648
      %v3649 = vxor.u32 %v3539, 2147483648
      %v3650 = vxor.u32 %v3544, 2147483648
      %v3651 = vxor.u32 %v3549, 2147483648
      %v3652 = vxor.u32 %v3554, 2147483648
      %v3653 = vxor.u32 %v3559, 2147483648
      %v3654 = vxor.u32 %v3564, 2147483648
      %v3655 = vxor.u32 %v3569, 2147483648
      %v3656 = vxor.u32 %v3574, 2147483648
      %v3657 = vxor.u32 %v3579, 2147483648
      %v3658 = vxor.u32 %v3584, 2147483648
      %v3659 = vxor.u32 %v3589, 2147483648
      %v3660 = vxor.u32 %v3594, 2147483648
      %v3661 = vxor.u32 %v3599, 2147483648
      %v3662 = vxor.u32 %v3604, 2147483648
      %v3663 = vxor.u32 %v3609, 2147483648
      %v3664 = vxor.u32 %v3614, 2147483648
      %v3665 = vxor.u32 %v3619, 2147483648
      %v3666 = vxor.u32 %v3624, 2147483648
      %v3667 = vxor.u32 %v3629, 2147483648
      %v3668 = vxor.u32 %v3634, 2147483648
      %v3669 = vmul.f32 %v3637, 1.442695
      %v3670 = vpow.pop %v3669
      %v3671 = vmul.f32 %v3638, 1.442695
      %v3672 = vpow.pop %v3671
      %v3673 = vmul.f32 %v3639, 1.442695
      %v3674 = vpow.pop %v3673
      %v3675 = vmul.f32 %v3640, 1.442695
      %v3676 = vpow.pop %v3675
      %v3677 = vmul.f32 %v3641, 1.442695
      %v3678 = vpow.pop %v3677
      %v3679 = vmul.f32 %v3642, 1.442695
      %v3680 = vpow.pop %v3679
      %v3681 = vmul.f32 %v3643, 1.442695
      %v3682 = vpow.pop %v3681
      %v3683 = vmul.f32 %v3644, 1.442695
      %v3684 = vpow.pop %v3683
      %v3685 = vmul.f32 %v3645, 1.442695
      %v3686 = vpow.pop %v3685
      %v3687 = vmul.f32 %v3646, 1.442695
      %v3688 = vpow.pop %v3687
      %v3689 = vmul.f32 %v3647, 1.442695
      %v3690 = vpow.pop %v3689
      %v3691 = vmul.f32 %v3648, 1.442695
      %v3692 = vpow.pop %v3691
      %v3693 = vmul.f32 %v3649, 1.442695
      %v3694 = vpow.pop %v3693
      %v3695 = vmul.f32 %v3650, 1.442695
      %v3696 = vpow.pop %v3695
      %v3697 = vmul.f32 %v3651, 1.442695
      %v3698 = vpow.pop %v3697
      %v3699 = vmul.f32 %v3652, 1.442695
      %v3700 = vpow.pop %v3699
      %v3701 = vmul.f32 %v3653, 1.442695
      %v3702 = vpow.pop %v3701
      %v3703 = vmul.f32 %v3654, 1.442695
      %v3704 = vpow.pop %v3703
      %v3705 = vmul.f32 %v3655, 1.442695
      %v3706 = vpow.pop %v3705
      %v3707 = vmul.f32 %v3656, 1.442695
      %v3708 = vpow.pop %v3707
      %v3709 = vmul.f32 %v3657, 1.442695
      %v3710 = vpow.pop %v3709
      %v3711 = vmul.f32 %v3658, 1.442695
      %v3712 = vpow.pop %v3711
      %v3713 = vmul.f32 %v3659, 1.442695
      %v3714 = vpow.pop %v3713
      %v3715 = vmul.f32 %v3660, 1.442695
      %v3716 = vpow.pop %v3715
      %v3717 = vmul.f32 %v3661, 1.442695
      %v3718 = vpow.pop %v3717
      %v3719 = vmul.f32 %v3662, 1.442695
      %v3720 = vpow.pop %v3719
      %v3721 = vmul.f32 %v3663, 1.442695
      %v3722 = vpow.pop %v3721
      %v3723 = vmul.f32 %v3664, 1.442695
      %v3724 = vpow.pop %v3723
      %v3725 = vmul.f32 %v3665, 1.442695
      %v3726 = vpow.pop %v3725
      %v3727 = vmul.f32 %v3666, 1.442695
      %v3728 = vpow.pop %v3727
      %v3729 = vmul.f32 %v3667, 1.442695
      %v3730 = vpow.pop %v3729
      %v3731 = vmul.f32 %v3668, 1.442695
      %v3732 = vpow.pop %v3731
      %v3733 = vadd.f32 %v3670, 1.0
      %v3734 = vadd.f32 %v3672, 1.0
      %v3735 = vadd.f32 %v3674, 1.0
      %v3736 = vadd.f32 %v3676, 1.0
      %v3737 = vadd.f32 %v3678, 1.0
      %v3738 = vadd.f32 %v3680, 1.0
      %v3739 = vadd.f32 %v3682, 1.0
      %v3740 = vadd.f32 %v3684, 1.0
      %v3741 = vadd.f32 %v3686, 1.0
      %v3742 = vadd.f32 %v3688, 1.0
      %v3743 = vadd.f32 %v3690, 1.0
      %v3744 = vadd.f32 %v3692, 1.0
      %v3745 = vadd.f32 %v3694, 1.0
      %v3746 = vadd.f32 %v3696, 1.0
      %v3747 = vadd.f32 %v3698, 1.0
      %v3748 = vadd.f32 %v3700, 1.0
      %v3749 = vadd.f32 %v3702, 1.0
      %v3750 = vadd.f32 %v3704, 1.0
      %v3751 = vadd.f32 %v3706, 1.0
      %v3752 = vadd.f32 %v3708, 1.0
      %v3753 = vadd.f32 %v3710, 1.0
      %v3754 = vadd.f32 %v3712, 1.0
      %v3755 = vadd.f32 %v3714, 1.0
      %v3756 = vadd.f32 %v3716, 1.0
      %v3757 = vadd.f32 %v3718, 1.0
      %v3758 = vadd.f32 %v3720, 1.0
      %v3759 = vadd.f32 %v3722, 1.0
      %v3760 = vadd.f32 %v3724, 1.0
      %v3761 = vadd.f32 %v3726, 1.0
      %v3762 = vadd.f32 %v3728, 1.0
      %v3763 = vadd.f32 %v3730, 1.0
      %v3764 = vadd.f32 %v3732, 1.0
      %v3765 = vrcp.pop %v3733
      %v3766 = vmul.f32 1.0, %v3765
      %v3767 = vrcp.pop %v3734
      %v3768 = vmul.f32 1.0, %v3767
      %v3769 = vrcp.pop %v3735
      %v3770 = vmul.f32 1.0, %v3769
      %v3771 = vrcp.pop %v3736
      %v3772 = vmul.f32 1.0, %v3771
      %v3773 = vrcp.pop %v3737
      %v3774 = vmul.f32 1.0, %v3773
      %v3775 = vrcp.pop %v3738
      %v3776 = vmul.f32 1.0, %v3775
      %v3777 = vrcp.pop %v3739
      %v3778 = vmul.f32 1.0, %v3777
      %v3779 = vrcp.pop %v3740
      %v3780 = vmul.f32 1.0, %v3779
      %v3781 = vrcp.pop %v3741
      %v3782 = vmul.f32 1.0, %v3781
      %v3783 = vrcp.pop %v3742
      %v3784 = vmul.f32 1.0, %v3783
      %v3785 = vrcp.pop %v3743
      %v3786 = vmul.f32 1.0, %v3785
      %v3787 = vrcp.pop %v3744
      %v3788 = vmul.f32 1.0, %v3787
      %v3789 = vrcp.pop %v3745
      %v3790 = vmul.f32 1.0, %v3789
      %v3791 = vrcp.pop %v3746
      %v3792 = vmul.f32 1.0, %v3791
      %v3793 = vrcp.pop %v3747
      %v3794 = vmul.f32 1.0, %v3793
      %v3795 = vrcp.pop %v3748
      %v3796 = vmul.f32 1.0, %v3795
      %v3797 = vrcp.pop %v3749
      %v3798 = vmul.f32 1.0, %v3797
      %v3799 = vrcp.pop %v3750
      %v3800 = vmul.f32 1.0, %v3799
      %v3801 = vrcp.pop %v3751
      %v3802 = vmul.f32 1.0, %v3801
      %v3803 = vrcp.pop %v3752
      %v3804 = vmul.f32 1.0, %v3803
      %v3805 = vrcp.pop %v3753
      %v3806 = vmul.f32 1.0, %v3805
      %v3807 = vrcp.pop %v3754
      %v3808 = vmul.f32 1.0, %v3807
      %v3809 = vrcp.pop %v3755
      %v3810 = vmul.f32 1.0, %v3809
      %v3811 = vrcp.pop %v3756
      %v3812 = vmul.f32 1.0, %v3811
      %v3813 = vrcp.pop %v3757
      %v3814 = vmul.f32 1.0, %v3813
      %v3815 = vrcp.pop %v3758
      %v3816 = vmul.f32 1.0, %v3815
      %v3817 = vrcp.pop %v3759
      %v3818 = vmul.f32 1.0, %v3817
      %v3819 = vrcp.pop %v3760
      %v3820 = vmul.f32 1.0, %v3819
      %v3821 = vrcp.pop %v3761
      %v3822 = vmul.f32 1.0, %v3821
      %v3823 = vrcp.pop %v3762
      %v3824 = vmul.f32 1.0, %v3823
      %v3825 = vrcp.pop %v3763
      %v3826 = vmul.f32 1.0, %v3825
      %v3827 = vrcp.pop %v3764
      %v3828 = vmul.f32 1.0, %v3827
      %v3829 = vmul.f32 %v3479, %v3766
      %v3830 = vmul.f32 %v3484, %v3768
      %v3831 = vmul.f32 %v3489, %v3770
      %v3832 = vmul.f32 %v3494, %v3772
      %v3833 = vmul.f32 %v3499, %v3774
      %v3834 = vmul.f32 %v3504, %v3776
      %v3835 = vmul.f32 %v3509, %v3778
      %v3836 = vmul.f32 %v3514, %v3780
      %v3837 = vmul.f32 %v3519, %v3782
      %v3838 = vmul.f32 %v3524, %v3784
      %v3839 = vmul.f32 %v3529, %v3786
      %v3840 = vmul.f32 %v3534, %v3788
      %v3841 = vmul.f32 %v3539, %v3790
      %v3842 = vmul.f32 %v3544, %v3792
      %v3843 = vmul.f32 %v3549, %v3794
      %v3844 = vmul.f32 %v3554, %v3796
      %v3845 = vmul.f32 %v3559, %v3798
      %v3846 = vmul.f32 %v3564, %v3800
      %v3847 = vmul.f32 %v3569, %v3802
      %v3848 = vmul.f32 %v3574, %v3804
      %v3849 = vmul.f32 %v3579, %v3806
      %v3850 = vmul.f32 %v3584, %v3808
      %v3851 = vmul.f32 %v3589, %v3810
      %v3852 = vmul.f32 %v3594, %v3812
      %v3853 = vmul.f32 %v3599, %v3814
      %v3854 = vmul.f32 %v3604, %v3816
      %v3855 = vmul.f32 %v3609, %v3818
      %v3856 = vmul.f32 %v3614, %v3820
      %v3857 = vmul.f32 %v3619, %v3822
      %v3858 = vmul.f32 %v3624, %v3824
      %v3859 = vmul.f32 %v3629, %v3826
      %v3860 = vmul.f32 %v3634, %v3828
      %v3861 = vld [vmem:[%s747] sm:$0xff]
      %v3862 = vld [vmem:[%s747 + $0x8] sm:$0xff]
      %v3863 = vld [vmem:[%s747 + $0x10] sm:$0x3f]
      %v3864 = vld [vmem:[%s750] sm:$0x1]
      %v3866 = vlaneseq
      %v3867 = vshrl.u32 %v3866, 7
      %v3868 = vsub.s32 0, %v3867
      %v3869 = vrot.slane %v3864, %v3868
      %v3872 = vsel %vm3312, %v3829, 0
      %v3875 = vsel %vm3312, %v3830, 0
      %v3878 = vsel %vm3312, %v3831, 0
      %v3881 = vsel %vm3312, %v3832, 0
      %v3884 = vsel %vm3312, %v3833, 0
      %v3887 = vsel %vm3312, %v3834, 0
      %v3890 = vsel %vm3312, %v3835, 0
      %v3893 = vsel %vm3312, %v3836, 0
      %v3896 = vsel %vm3312, %v3837, 0
      %v3899 = vsel %vm3312, %v3838, 0
      %v3902 = vsel %vm3312, %v3839, 0
      %v3905 = vsel %vm3312, %v3840, 0
      %v3908 = vsel %vm3312, %v3841, 0
      %v3911 = vsel %vm3312, %v3842, 0
      %v3914 = vsel %vm3312, %v3843, 0
      %v3917 = vsel %vm3312, %v3844, 0
      %v3920 = vsel %vm3312, %v3845, 0
      %v3923 = vsel %vm3312, %v3846, 0
      %v3926 = vsel %vm3312, %v3847, 0
      %v3929 = vsel %vm3312, %v3848, 0
      %v3932 = vsel %vm3312, %v3849, 0
      %v3935 = vsel %vm3312, %v3850, 0
      %v3938 = vsel %vm3312, %v3851, 0
      %v3941 = vsel %vm3312, %v3852, 0
      %v3944 = vsel %vm3312, %v3853, 0
      %v3947 = vsel %vm3312, %v3854, 0
      %v3950 = vsel %vm3312, %v3855, 0
      %v3953 = vsel %vm3312, %v3856, 0
      %v3956 = vsel %vm3312, %v3857, 0
      %v3959 = vsel %vm3312, %v3858, 0
      %v3962 = vsel %vm3312, %v3859, 0
      %v3965 = vsel %vm3312, %v3860, 0
      %v3968 = vsel %vm2415, %v3863, 0
      %3970 = vmatprep.subr.mxu0 0.0
      %3971 = vmatpush1.msra.mxu0 0.0
      %3972 = vmatprep.subr.mxu0 0.0
      %3973 = vmatpush1.msra.mxu0 0.0
      %3974 = vmatprep.subr.mxu0 0.0
      %3975 = vmatpush1.msra.mxu0 0.0
      %3976 = vmatprep.subr.mxu0 0.0
      %3977 = vmatpush1.msra.mxu0 0.0
      %3978 = vmatprep.subr.mxu0 0.0
      %3979 = vmatpush1.msra.mxu0 0.0
      %3980 = vmatprep.subr.mxu0 0.0
      %3981 = vmatpush1.msra.mxu0 0.0
      %3982 = vmatprep.subr.mxu0 0.0
      %3983 = vmatpush1.msra.mxu0 0.0
      %3984 = vmatprep.subr.mxu0 0.0
      %3985 = vmatpush1.msra.mxu0 0.0
      %3986 = vmatprep.subr.mxu0 0.0
      %3987 = vmatpush1.msra.mxu0 0.0
      %3988 = vmatprep.subr.mxu0 0.0
      %3989 = vmatpush1.msra.mxu0 0.0
      %3990 = vmatprep.subr.mxu0 0.0
      %3991 = vmatpush1.msra.mxu0 0.0
      %3992 = vmatprep.subr.mxu0 0.0
      %3993 = vmatpush1.msra.mxu0 0.0
      %3994 = vmatprep.subr.mxu0 0.0
      %3995 = vmatpush1.msra.mxu0 0.0
      %3996 = vmatprep.subr.mxu0 0.0
      %3997 = vmatpush1.msra.mxu0 %v3968
      %3998 = vmatprep.subr.mxu0 0.0
      %3999 = vmatpush1.msra.mxu0 %v3862
      %4000 = vmatprep.subr.mxu0 0.0
      %4001 = vmatpush1.msra.mxu0 %v3861
      %4002 = vmatprep.subr.mxu0 0.0
      %4003 = vmatpush2.msra.mxu0 0.0
      %4004 = vmatprep.subr.mxu0 0.0
      %4005 = vmatpush2.msra.mxu0 0.0
      %4006 = vmatprep.subr.mxu0 0.0
      %4007 = vmatpush2.msra.mxu0 0.0
      %4008 = vmatprep.subr.mxu0 0.0
      %4009 = vmatpush2.msra.mxu0 0.0
      %4010 = vmatprep.subr.mxu0 0.0
      %4011 = vmatpush2.msra.mxu0 0.0
      %4012 = vmatprep.subr.mxu0 0.0
      %4013 = vmatpush2.msra.mxu0 0.0
      %4014 = vmatprep.subr.mxu0 0.0
      %4015 = vmatpush2.msra.mxu0 0.0
      %4016 = vmatprep.subr.mxu0 0.0
      %4017 = vmatpush2.msra.mxu0 0.0
      %4018 = vmatprep.subr.mxu0 0.0
      %4019 = vmatpush2.msra.mxu0 0.0
      %4020 = vmatprep.subr.mxu0 0.0
      %4021 = vmatpush2.msra.mxu0 0.0
      %4022 = vmatprep.subr.mxu0 0.0
      %4023 = vmatpush2.msra.mxu0 0.0
      %4024 = vmatprep.subr.mxu0 0.0
      %4025 = vmatpush2.msra.mxu0 0.0
      %4026 = vmatprep.subr.mxu0 0.0
      %4027 = vmatpush2.msra.mxu0 0.0
      %4028 = vmatprep.subr.mxu0 0.0
      %4029 = vmatpush2.msra.mxu0 0.0
      %4030 = vmatprep.subr.mxu0 0.0
      %4031 = vmatpush2.msra.mxu0 0.0
      %4032 = vmatprep.subr.mxu0 0.0
      %4033 = vmatpush2.msra.mxu0 0.0
      %4034 = vmatprep.mubr.f32.mxu0 0.0
      %4035 = vmatmul.mubr.f32.gmra.mxu0 %v3872
      %v4036 = vpop.f32.mrf.mxu0
      %v4037 = vadd.f32 %v3869, %v4036
      %v4038 = vpop.f32.mrf.mxu0
      %4039 = vmatprep.mubr.f32.mxu0 0.0
      %4040 = vmatmul.mubr.f32.gmra.mxu0 %v3875
      %v4041 = vpop.f32.mrf.mxu0
      %v4042 = vadd.f32 %v3869, %v4041
      %v4043 = vpop.f32.mrf.mxu0
      %4044 = vmatprep.mubr.f32.mxu0 0.0
      %4045 = vmatmul.mubr.f32.gmra.mxu0 %v3878
      %v4046 = vpop.f32.mrf.mxu0
      %v4047 = vadd.f32 %v3869, %v4046
      %v4048 = vpop.f32.mrf.mxu0
      %4049 = vmatprep.mubr.f32.mxu0 0.0
      %4050 = vmatmul.mubr.f32.gmra.mxu0 %v3881
      %v4051 = vpop.f32.mrf.mxu0
      %v4052 = vadd.f32 %v3869, %v4051
      %v4053 = vpop.f32.mrf.mxu0
      %4054 = vmatprep.mubr.f32.mxu0 0.0
      %4055 = vmatmul.mubr.f32.gmra.mxu0 %v3884
      %v4056 = vpop.f32.mrf.mxu0
      %v4057 = vadd.f32 %v3869, %v4056
      %v4058 = vpop.f32.mrf.mxu0
      %4059 = vmatprep.mubr.f32.mxu0 0.0
      %4060 = vmatmul.mubr.f32.gmra.mxu0 %v3887
      %v4061 = vpop.f32.mrf.mxu0
      %v4062 = vadd.f32 %v3869, %v4061
      %v4063 = vpop.f32.mrf.mxu0
      %4064 = vmatprep.mubr.f32.mxu0 0.0
      %4065 = vmatmul.mubr.f32.gmra.mxu0 %v3890
      %v4066 = vpop.f32.mrf.mxu0
      %v4067 = vadd.f32 %v3869, %v4066
      %v4068 = vpop.f32.mrf.mxu0
      %4069 = vmatprep.mubr.f32.mxu0 0.0
      %4070 = vmatmul.mubr.f32.gmra.mxu0 %v3893
      %v4071 = vpop.f32.mrf.mxu0
      %v4072 = vadd.f32 %v3869, %v4071
      %v4073 = vpop.f32.mrf.mxu0
      %4074 = vmatprep.mubr.f32.mxu0 0.0
      %4075 = vmatmul.mubr.f32.gmra.mxu0 %v3896
      %v4076 = vpop.f32.mrf.mxu0
      %v4077 = vadd.f32 %v3869, %v4076
      %v4078 = vpop.f32.mrf.mxu0
      %4079 = vmatprep.mubr.f32.mxu0 0.0
      %4080 = vmatmul.mubr.f32.gmra.mxu0 %v3899
      %v4081 = vpop.f32.mrf.mxu0
      %v4082 = vadd.f32 %v3869, %v4081
      %v4083 = vpop.f32.mrf.mxu0
      %4084 = vmatprep.mubr.f32.mxu0 0.0
      %4085 = vmatmul.mubr.f32.gmra.mxu0 %v3902
      %v4086 = vpop.f32.mrf.mxu0
      %v4087 = vadd.f32 %v3869, %v4086
      %v4088 = vpop.f32.mrf.mxu0
      %4089 = vmatprep.mubr.f32.mxu0 0.0
      %4090 = vmatmul.mubr.f32.gmra.mxu0 %v3905
      %v4091 = vpop.f32.mrf.mxu0
      %v4092 = vadd.f32 %v3869, %v4091
      %v4093 = vpop.f32.mrf.mxu0
      %4094 = vmatprep.mubr.f32.mxu0 0.0
      %4095 = vmatmul.mubr.f32.gmra.mxu0 %v3908
      %v4096 = vpop.f32.mrf.mxu0
      %v4097 = vadd.f32 %v3869, %v4096
      %v4098 = vpop.f32.mrf.mxu0
      %4099 = vmatprep.mubr.f32.mxu0 0.0
      %4100 = vmatmul.mubr.f32.gmra.mxu0 %v3911
      %v4101 = vpop.f32.mrf.mxu0
      %v4102 = vadd.f32 %v3869, %v4101
      %v4103 = vpop.f32.mrf.mxu0
      %4104 = vmatprep.mubr.f32.mxu0 0.0
      %4105 = vmatmul.mubr.f32.gmra.mxu0 %v3914
      %v4106 = vpop.f32.mrf.mxu0
      %v4107 = vadd.f32 %v3869, %v4106
      %v4108 = vpop.f32.mrf.mxu0
      %4109 = vmatprep.mubr.f32.mxu0 0.0
      %4110 = vmatmul.mubr.f32.gmra.mxu0 %v3917
      %v4111 = vpop.f32.mrf.mxu0
      %v4112 = vadd.f32 %v3869, %v4111
      %v4113 = vpop.f32.mrf.mxu0
      %4114 = vmatprep.mubr.f32.mxu0 0.0
      %4115 = vmatmul.mubr.f32.gmra.mxu0 %v3920
      %v4116 = vpop.f32.mrf.mxu0
      %v4117 = vadd.f32 %v3869, %v4116
      %v4118 = vpop.f32.mrf.mxu0
      %4119 = vmatprep.mubr.f32.mxu0 0.0
      %4120 = vmatmul.mubr.f32.gmra.mxu0 %v3923
      %v4121 = vpop.f32.mrf.mxu0
      %v4122 = vadd.f32 %v3869, %v4121
      %v4123 = vpop.f32.mrf.mxu0
      %4124 = vmatprep.mubr.f32.mxu0 0.0
      %4125 = vmatmul.mubr.f32.gmra.mxu0 %v3926
      %v4126 = vpop.f32.mrf.mxu0
      %v4127 = vadd.f32 %v3869, %v4126
      %v4128 = vpop.f32.mrf.mxu0
      %4129 = vmatprep.mubr.f32.mxu0 0.0
      %4130 = vmatmul.mubr.f32.gmra.mxu0 %v3929
      %v4131 = vpop.f32.mrf.mxu0
      %v4132 = vadd.f32 %v3869, %v4131
      %v4133 = vpop.f32.mrf.mxu0
      %4134 = vmatprep.mubr.f32.mxu0 0.0
      %4135 = vmatmul.mubr.f32.gmra.mxu0 %v3932
      %v4136 = vpop.f32.mrf.mxu0
      %v4137 = vadd.f32 %v3869, %v4136
      %v4138 = vpop.f32.mrf.mxu0
      %4139 = vmatprep.mubr.f32.mxu0 0.0
      %4140 = vmatmul.mubr.f32.gmra.mxu0 %v3935
      %v4141 = vpop.f32.mrf.mxu0
      %v4142 = vadd.f32 %v3869, %v4141
      %v4143 = vpop.f32.mrf.mxu0
      %4144 = vmatprep.mubr.f32.mxu0 0.0
      %4145 = vmatmul.mubr.f32.gmra.mxu0 %v3938
      %v4146 = vpop.f32.mrf.mxu0
      %v4147 = vadd.f32 %v3869, %v4146
      %v4148 = vpop.f32.mrf.mxu0
      %4149 = vmatprep.mubr.f32.mxu0 0.0
      %4150 = vmatmul.mubr.f32.gmra.mxu0 %v3941
      %v4151 = vpop.f32.mrf.mxu0
      %v4152 = vadd.f32 %v3869, %v4151
      %v4153 = vpop.f32.mrf.mxu0
      %4154 = vmatprep.mubr.f32.mxu0 0.0
      %4155 = vmatmul.mubr.f32.gmra.mxu0 %v3944
      %v4156 = vpop.f32.mrf.mxu0
      %v4157 = vadd.f32 %v3869, %v4156
      %v4158 = vpop.f32.mrf.mxu0
      %4159 = vmatprep.mubr.f32.mxu0 0.0
      %4160 = vmatmul.mubr.f32.gmra.mxu0 %v3947
      %v4161 = vpop.f32.mrf.mxu0
      %v4162 = vadd.f32 %v3869, %v4161
      %v4163 = vpop.f32.mrf.mxu0
      %4164 = vmatprep.mubr.f32.mxu0 0.0
      %4165 = vmatmul.mubr.f32.gmra.mxu0 %v3950
      %v4166 = vpop.f32.mrf.mxu0
      %v4167 = vadd.f32 %v3869, %v4166
      %v4168 = vpop.f32.mrf.mxu0
      %4169 = vmatprep.mubr.f32.mxu0 0.0
      %4170 = vmatmul.mubr.f32.gmra.mxu0 %v3953
      %v4171 = vpop.f32.mrf.mxu0
      %v4172 = vadd.f32 %v3869, %v4171
      %v4173 = vpop.f32.mrf.mxu0
      %4174 = vmatprep.mubr.f32.mxu0 0.0
      %4175 = vmatmul.mubr.f32.gmra.mxu0 %v3956
      %v4176 = vpop.f32.mrf.mxu0
      %v4177 = vadd.f32 %v3869, %v4176
      %v4178 = vpop.f32.mrf.mxu0
      %4179 = vmatprep.mubr.f32.mxu0 0.0
      %4180 = vmatmul.mubr.f32.gmra.mxu0 %v3959
      %v4181 = vpop.f32.mrf.mxu0
      %v4182 = vadd.f32 %v3869, %v4181
      %v4183 = vpop.f32.mrf.mxu0
      %4184 = vmatprep.mubr.f32.mxu0 0.0
      %4185 = vmatmul.mubr.f32.gmra.mxu0 %v3962
      %v4186 = vpop.f32.mrf.mxu0
      %v4187 = vadd.f32 %v3869, %v4186
      %v4188 = vpop.f32.mrf.mxu0
      %4189 = vmatprep.mubr.f32.mxu0 0.0
      %4190 = vmatmul.mubr.f32.gmra.mxu0 %v3965
      %v4191 = vpop.f32.mrf.mxu0
      %v4192 = vadd.f32 %v3869, %v4191
      %v4193 = vpop.f32.mrf.mxu0
      %4194 = vdwg.mxu0
      %v4195 = vxor.u32 %v4037, 2147483648
      %v4196 = vxor.u32 %v4042, 2147483648
      %v4197 = vxor.u32 %v4047, 2147483648
      %v4198 = vxor.u32 %v4052, 2147483648
      %v4199 = vxor.u32 %v4057, 2147483648
      %v4200 = vxor.u32 %v4062, 2147483648
      %v4201 = vxor.u32 %v4067, 2147483648
      %v4202 = vxor.u32 %v4072, 2147483648
      %v4203 = vxor.u32 %v4077, 2147483648
      %v4204 = vxor.u32 %v4082, 2147483648
      %v4205 = vxor.u32 %v4087, 2147483648
      %v4206 = vxor.u32 %v4092, 2147483648
      %v4207 = vxor.u32 %v4097, 2147483648
      %v4208 = vxor.u32 %v4102, 2147483648
      %v4209 = vxor.u32 %v4107, 2147483648
      %v4210 = vxor.u32 %v4112, 2147483648
      %v4211 = vxor.u32 %v4117, 2147483648
      %v4212 = vxor.u32 %v4122, 2147483648
      %v4213 = vxor.u32 %v4127, 2147483648
      %v4214 = vxor.u32 %v4132, 2147483648
      %v4215 = vxor.u32 %v4137, 2147483648
      %v4216 = vxor.u32 %v4142, 2147483648
      %v4217 = vxor.u32 %v4147, 2147483648
      %v4218 = vxor.u32 %v4152, 2147483648
      %v4219 = vxor.u32 %v4157, 2147483648
      %v4220 = vxor.u32 %v4162, 2147483648
      %v4221 = vxor.u32 %v4167, 2147483648
      %v4222 = vxor.u32 %v4172, 2147483648
      %v4223 = vxor.u32 %v4177, 2147483648
      %v4224 = vxor.u32 %v4182, 2147483648
      %v4225 = vxor.u32 %v4187, 2147483648
      %v4226 = vxor.u32 %v4192, 2147483648
      %v4227 = vmul.f32 %v4195, 1.442695
      %v4228 = vpow.pop %v4227
      %v4229 = vmul.f32 %v4196, 1.442695
      %v4230 = vpow.pop %v4229
      %v4231 = vmul.f32 %v4197, 1.442695
      %v4232 = vpow.pop %v4231
      %v4233 = vmul.f32 %v4198, 1.442695
      %v4234 = vpow.pop %v4233
      %v4235 = vmul.f32 %v4199, 1.442695
      %v4236 = vpow.pop %v4235
      %v4237 = vmul.f32 %v4200, 1.442695
      %v4238 = vpow.pop %v4237
      %v4239 = vmul.f32 %v4201, 1.442695
      %v4240 = vpow.pop %v4239
      %v4241 = vmul.f32 %v4202, 1.442695
      %v4242 = vpow.pop %v4241
      %v4243 = vmul.f32 %v4203, 1.442695
      %v4244 = vpow.pop %v4243
      %v4245 = vmul.f32 %v4204, 1.442695
      %v4246 = vpow.pop %v4245
      %v4247 = vmul.f32 %v4205, 1.442695
      %v4248 = vpow.pop %v4247
      %v4249 = vmul.f32 %v4206, 1.442695
      %v4250 = vpow.pop %v4249
      %v4251 = vmul.f32 %v4207, 1.442695
      %v4252 = vpow.pop %v4251
      %v4253 = vmul.f32 %v4208, 1.442695
      %v4254 = vpow.pop %v4253
      %v4255 = vmul.f32 %v4209, 1.442695
      %v4256 = vpow.pop %v4255
      %v4257 = vmul.f32 %v4210, 1.442695
      %v4258 = vpow.pop %v4257
      %v4259 = vmul.f32 %v4211, 1.442695
      %v4260 = vpow.pop %v4259
      %v4261 = vmul.f32 %v4212, 1.442695
      %v4262 = vpow.pop %v4261
      %v4263 = vmul.f32 %v4213, 1.442695
      %v4264 = vpow.pop %v4263
      %v4265 = vmul.f32 %v4214, 1.442695
      %v4266 = vpow.pop %v4265
      %v4267 = vmul.f32 %v4215, 1.442695
      %v4268 = vpow.pop %v4267
      %v4269 = vmul.f32 %v4216, 1.442695
      %v4270 = vpow.pop %v4269
      %v4271 = vmul.f32 %v4217, 1.442695
      %v4272 = vpow.pop %v4271
      %v4273 = vmul.f32 %v4218, 1.442695
      %v4274 = vpow.pop %v4273
      %v4275 = vmul.f32 %v4219, 1.442695
      %v4276 = vpow.pop %v4275
      %v4277 = vmul.f32 %v4220, 1.442695
      %v4278 = vpow.pop %v4277
      %v4279 = vmul.f32 %v4221, 1.442695
      %v4280 = vpow.pop %v4279
      %v4281 = vmul.f32 %v4222, 1.442695
      %v4282 = vpow.pop %v4281
      %v4283 = vmul.f32 %v4223, 1.442695
      %v4284 = vpow.pop %v4283
      %v4285 = vmul.f32 %v4224, 1.442695
      %v4286 = vpow.pop %v4285
      %v4287 = vmul.f32 %v4225, 1.442695
      %v4288 = vpow.pop %v4287
      %v4289 = vmul.f32 %v4226, 1.442695
      %v4290 = vpow.pop %v4289
      %v4291 = vadd.f32 %v4228, 1.0
      %v4292 = vadd.f32 %v4230, 1.0
      %v4293 = vadd.f32 %v4232, 1.0
      %v4294 = vadd.f32 %v4234, 1.0
      %v4295 = vadd.f32 %v4236, 1.0
      %v4296 = vadd.f32 %v4238, 1.0
      %v4297 = vadd.f32 %v4240, 1.0
      %v4298 = vadd.f32 %v4242, 1.0
      %v4299 = vadd.f32 %v4244, 1.0
      %v4300 = vadd.f32 %v4246, 1.0
      %v4301 = vadd.f32 %v4248, 1.0
      %v4302 = vadd.f32 %v4250, 1.0
      %v4303 = vadd.f32 %v4252, 1.0
      %v4304 = vadd.f32 %v4254, 1.0
      %v4305 = vadd.f32 %v4256, 1.0
      %v4306 = vadd.f32 %v4258, 1.0
      %v4307 = vadd.f32 %v4260, 1.0
      %v4308 = vadd.f32 %v4262, 1.0
      %v4309 = vadd.f32 %v4264, 1.0
      %v4310 = vadd.f32 %v4266, 1.0
      %v4311 = vadd.f32 %v4268, 1.0
      %v4312 = vadd.f32 %v4270, 1.0
      %v4313 = vadd.f32 %v4272, 1.0
      %v4314 = vadd.f32 %v4274, 1.0
      %v4315 = vadd.f32 %v4276, 1.0
      %v4316 = vadd.f32 %v4278, 1.0
      %v4317 = vadd.f32 %v4280, 1.0
      %v4318 = vadd.f32 %v4282, 1.0
      %v4319 = vadd.f32 %v4284, 1.0
      %v4320 = vadd.f32 %v4286, 1.0
      %v4321 = vadd.f32 %v4288, 1.0
      %v4322 = vadd.f32 %v4290, 1.0
      %v4323 = vrcp.pop %v4291
      %v4324 = vmul.f32 1.0, %v4323
      %v4325 = vrcp.pop %v4292
      %v4326 = vmul.f32 1.0, %v4325
      %v4327 = vrcp.pop %v4293
      %v4328 = vmul.f32 1.0, %v4327
      %v4329 = vrcp.pop %v4294
      %v4330 = vmul.f32 1.0, %v4329
      %v4331 = vrcp.pop %v4295
      %v4332 = vmul.f32 1.0, %v4331
      %v4333 = vrcp.pop %v4296
      %v4334 = vmul.f32 1.0, %v4333
      %v4335 = vrcp.pop %v4297
      %v4336 = vmul.f32 1.0, %v4335
      %v4337 = vrcp.pop %v4298
      %v4338 = vmul.f32 1.0, %v4337
      %v4339 = vrcp.pop %v4299
      %v4340 = vmul.f32 1.0, %v4339
      %v4341 = vrcp.pop %v4300
      %v4342 = vmul.f32 1.0, %v4341
      %v4343 = vrcp.pop %v4301
      %v4344 = vmul.f32 1.0, %v4343
      %v4345 = vrcp.pop %v4302
      %v4346 = vmul.f32 1.0, %v4345
      %v4347 = vrcp.pop %v4303
      %v4348 = vmul.f32 1.0, %v4347
      %v4349 = vrcp.pop %v4304
      %v4350 = vmul.f32 1.0, %v4349
      %v4351 = vrcp.pop %v4305
      %v4352 = vmul.f32 1.0, %v4351
      %v4353 = vrcp.pop %v4306
      %v4354 = vmul.f32 1.0, %v4353
      %v4355 = vrcp.pop %v4307
      %v4356 = vmul.f32 1.0, %v4355
      %v4357 = vrcp.pop %v4308
      %v4358 = vmul.f32 1.0, %v4357
      %v4359 = vrcp.pop %v4309
      %v4360 = vmul.f32 1.0, %v4359
      %v4361 = vrcp.pop %v4310
      %v4362 = vmul.f32 1.0, %v4361
      %v4363 = vrcp.pop %v4311
      %v4364 = vmul.f32 1.0, %v4363
      %v4365 = vrcp.pop %v4312
      %v4366 = vmul.f32 1.0, %v4365
      %v4367 = vrcp.pop %v4313
      %v4368 = vmul.f32 1.0, %v4367
      %v4369 = vrcp.pop %v4314
      %v4370 = vmul.f32 1.0, %v4369
      %v4371 = vrcp.pop %v4315
      %v4372 = vmul.f32 1.0, %v4371
      %v4373 = vrcp.pop %v4316
      %v4374 = vmul.f32 1.0, %v4373
      %v4375 = vrcp.pop %v4317
      %v4376 = vmul.f32 1.0, %v4375
      %v4377 = vrcp.pop %v4318
      %v4378 = vmul.f32 1.0, %v4377
      %v4379 = vrcp.pop %v4319
      %v4380 = vmul.f32 1.0, %v4379
      %v4381 = vrcp.pop %v4320
      %v4382 = vmul.f32 1.0, %v4381
      %v4383 = vrcp.pop %v4321
      %v4384 = vmul.f32 1.0, %v4383
      %v4385 = vrcp.pop %v4322
      %v4386 = vmul.f32 1.0, %v4385
      %v4387 = vld [vmem:[%s755] sm:$0xff]
      %v4388 = vld [vmem:[%s755 + $0x8] sm:$0xff]
      %v4389 = vld [vmem:[%s755 + $0x10] sm:$0x3f]
      %v4390 = vld [vmem:[%s758] sm:$0x1]
      %v4392 = vlaneseq
      %v4393 = vshrl.u32 %v4392, 7
      %v4394 = vsub.s32 0, %v4393
      %v4395 = vrot.slane %v4390, %v4394
      %v4398 = vsel %vm2415, %v4389, 0
      %4400 = vmatprep.subr.mxu0 0.0
      %4401 = vmatpush1.msra.mxu0 0.0
      %4402 = vmatprep.subr.mxu0 0.0
      %4403 = vmatpush1.msra.mxu0 0.0
      %4404 = vmatprep.subr.mxu0 0.0
      %4405 = vmatpush1.msra.mxu0 0.0
      %4406 = vmatprep.subr.mxu0 0.0
      %4407 = vmatpush1.msra.mxu0 0.0
      %4408 = vmatprep.subr.mxu0 0.0
      %4409 = vmatpush1.msra.mxu0 0.0
      %4410 = vmatprep.subr.mxu0 0.0
      %4411 = vmatpush1.msra.mxu0 0.0
      %4412 = vmatprep.subr.mxu0 0.0
      %4413 = vmatpush1.msra.mxu0 0.0
      %4414 = vmatprep.subr.mxu0 0.0
      %4415 = vmatpush1.msra.mxu0 0.0
      %4416 = vmatprep.subr.mxu0 0.0
      %4417 = vmatpush1.msra.mxu0 0.0
      %4418 = vmatprep.subr.mxu0 0.0
      %4419 = vmatpush1.msra.mxu0 0.0
      %4420 = vmatprep.subr.mxu0 0.0
      %4421 = vmatpush1.msra.mxu0 0.0
      %4422 = vmatprep.subr.mxu0 0.0
      %4423 = vmatpush1.msra.mxu0 0.0
      %4424 = vmatprep.subr.mxu0 0.0
      %4425 = vmatpush1.msra.mxu0 0.0
      %4426 = vmatprep.subr.mxu0 0.0
      %4427 = vmatpush1.msra.mxu0 %v4398
      %4428 = vmatprep.subr.mxu0 0.0
      %4429 = vmatpush1.msra.mxu0 %v4388
      %4430 = vmatprep.subr.mxu0 0.0
      %4431 = vmatpush1.msra.mxu0 %v4387
      %4432 = vmatprep.subr.mxu0 0.0
      %4433 = vmatpush2.msra.mxu0 0.0
      %4434 = vmatprep.subr.mxu0 0.0
      %4435 = vmatpush2.msra.mxu0 0.0
      %4436 = vmatprep.subr.mxu0 0.0
      %4437 = vmatpush2.msra.mxu0 0.0
      %4438 = vmatprep.subr.mxu0 0.0
      %4439 = vmatpush2.msra.mxu0 0.0
      %4440 = vmatprep.subr.mxu0 0.0
      %4441 = vmatpush2.msra.mxu0 0.0
      %4442 = vmatprep.subr.mxu0 0.0
      %4443 = vmatpush2.msra.mxu0 0.0
      %4444 = vmatprep.subr.mxu0 0.0
      %4445 = vmatpush2.msra.mxu0 0.0
      %4446 = vmatprep.subr.mxu0 0.0
      %4447 = vmatpush2.msra.mxu0 0.0
      %4448 = vmatprep.subr.mxu0 0.0
      %4449 = vmatpush2.msra.mxu0 0.0
      %4450 = vmatprep.subr.mxu0 0.0
      %4451 = vmatpush2.msra.mxu0 0.0
      %4452 = vmatprep.subr.mxu0 0.0
      %4453 = vmatpush2.msra.mxu0 0.0
      %4454 = vmatprep.subr.mxu0 0.0
      %4455 = vmatpush2.msra.mxu0 0.0
      %4456 = vmatprep.subr.mxu0 0.0
      %4457 = vmatpush2.msra.mxu0 0.0
      %4458 = vmatprep.subr.mxu0 0.0
      %4459 = vmatpush2.msra.mxu0 0.0
      %4460 = vmatprep.subr.mxu0 0.0
      %4461 = vmatpush2.msra.mxu0 0.0
      %4462 = vmatprep.subr.mxu0 0.0
      %4463 = vmatpush2.msra.mxu0 0.0
      %4464 = vmatprep.mubr.f32.mxu0 0.0
      %4465 = vmatmul.mubr.f32.gmra.mxu0 %v3872
      %v4466 = vpop.f32.mrf.mxu0
      %v4467 = vadd.f32 %v4395, %v4466
      %v4468 = vpop.f32.mrf.mxu0
      %4469 = vmatprep.mubr.f32.mxu0 0.0
      %4470 = vmatmul.mubr.f32.gmra.mxu0 %v3875
      %v4471 = vpop.f32.mrf.mxu0
      %v4472 = vadd.f32 %v4395, %v4471
      %v4473 = vpop.f32.mrf.mxu0
      %4474 = vmatprep.mubr.f32.mxu0 0.0
      %4475 = vmatmul.mubr.f32.gmra.mxu0 %v3878
      %v4476 = vpop.f32.mrf.mxu0
      %v4477 = vadd.f32 %v4395, %v4476
      %v4478 = vpop.f32.mrf.mxu0
      %4479 = vmatprep.mubr.f32.mxu0 0.0
      %4480 = vmatmul.mubr.f32.gmra.mxu0 %v3881
      %v4481 = vpop.f32.mrf.mxu0
      %v4482 = vadd.f32 %v4395, %v4481
      %v4483 = vpop.f32.mrf.mxu0
      %4484 = vmatprep.mubr.f32.mxu0 0.0
      %4485 = vmatmul.mubr.f32.gmra.mxu0 %v3884
      %v4486 = vpop.f32.mrf.mxu0
      %v4487 = vadd.f32 %v4395, %v4486
      %v4488 = vpop.f32.mrf.mxu0
      %4489 = vmatprep.mubr.f32.mxu0 0.0
      %4490 = vmatmul.mubr.f32.gmra.mxu0 %v3887
      %v4491 = vpop.f32.mrf.mxu0
      %v4492 = vadd.f32 %v4395, %v4491
      %v4493 = vpop.f32.mrf.mxu0
      %4494 = vmatprep.mubr.f32.mxu0 0.0
      %4495 = vmatmul.mubr.f32.gmra.mxu0 %v3890
      %v4496 = vpop.f32.mrf.mxu0
      %v4497 = vadd.f32 %v4395, %v4496
      %v4498 = vpop.f32.mrf.mxu0
      %4499 = vmatprep.mubr.f32.mxu0 0.0
      %4500 = vmatmul.mubr.f32.gmra.mxu0 %v3893
      %v4501 = vpop.f32.mrf.mxu0
      %v4502 = vadd.f32 %v4395, %v4501
      %v4503 = vpop.f32.mrf.mxu0
      %4504 = vmatprep.mubr.f32.mxu0 0.0
      %4505 = vmatmul.mubr.f32.gmra.mxu0 %v3896
      %v4506 = vpop.f32.mrf.mxu0
      %v4507 = vadd.f32 %v4395, %v4506
      %v4508 = vpop.f32.mrf.mxu0
      %4509 = vmatprep.mubr.f32.mxu0 0.0
      %4510 = vmatmul.mubr.f32.gmra.mxu0 %v3899
      %v4511 = vpop.f32.mrf.mxu0
      %v4512 = vadd.f32 %v4395, %v4511
      %v4513 = vpop.f32.mrf.mxu0
      %4514 = vmatprep.mubr.f32.mxu0 0.0
      %4515 = vmatmul.mubr.f32.gmra.mxu0 %v3902
      %v4516 = vpop.f32.mrf.mxu0
      %v4517 = vadd.f32 %v4395, %v4516
      %v4518 = vpop.f32.mrf.mxu0
      %4519 = vmatprep.mubr.f32.mxu0 0.0
      %4520 = vmatmul.mubr.f32.gmra.mxu0 %v3905
      %v4521 = vpop.f32.mrf.mxu0
      %v4522 = vadd.f32 %v4395, %v4521
      %v4523 = vpop.f32.mrf.mxu0
      %4524 = vmatprep.mubr.f32.mxu0 0.0
      %4525 = vmatmul.mubr.f32.gmra.mxu0 %v3908
      %v4526 = vpop.f32.mrf.mxu0
      %v4527 = vadd.f32 %v4395, %v4526
      %v4528 = vpop.f32.mrf.mxu0
      %4529 = vmatprep.mubr.f32.mxu0 0.0
      %4530 = vmatmul.mubr.f32.gmra.mxu0 %v3911
      %v4531 = vpop.f32.mrf.mxu0
      %v4532 = vadd.f32 %v4395, %v4531
      %v4533 = vpop.f32.mrf.mxu0
      %4534 = vmatprep.mubr.f32.mxu0 0.0
      %4535 = vmatmul.mubr.f32.gmra.mxu0 %v3914
      %v4536 = vpop.f32.mrf.mxu0
      %v4537 = vadd.f32 %v4395, %v4536
      %v4538 = vpop.f32.mrf.mxu0
      %4539 = vmatprep.mubr.f32.mxu0 0.0
      %4540 = vmatmul.mubr.f32.gmra.mxu0 %v3917
      %v4541 = vpop.f32.mrf.mxu0
      %v4542 = vadd.f32 %v4395, %v4541
      %v4543 = vpop.f32.mrf.mxu0
      %4544 = vmatprep.mubr.f32.mxu0 0.0
      %4545 = vmatmul.mubr.f32.gmra.mxu0 %v3920
      %v4546 = vpop.f32.mrf.mxu0
      %v4547 = vadd.f32 %v4395, %v4546
      %v4548 = vpop.f32.mrf.mxu0
      %4549 = vmatprep.mubr.f32.mxu0 0.0
      %4550 = vmatmul.mubr.f32.gmra.mxu0 %v3923
      %v4551 = vpop.f32.mrf.mxu0
      %v4552 = vadd.f32 %v4395, %v4551
      %v4553 = vpop.f32.mrf.mxu0
      %4554 = vmatprep.mubr.f32.mxu0 0.0
      %4555 = vmatmul.mubr.f32.gmra.mxu0 %v3926
      %v4556 = vpop.f32.mrf.mxu0
      %v4557 = vadd.f32 %v4395, %v4556
      %v4558 = vpop.f32.mrf.mxu0
      %4559 = vmatprep.mubr.f32.mxu0 0.0
      %4560 = vmatmul.mubr.f32.gmra.mxu0 %v3929
      %v4561 = vpop.f32.mrf.mxu0
      %v4562 = vadd.f32 %v4395, %v4561
      %v4563 = vpop.f32.mrf.mxu0
      %4564 = vmatprep.mubr.f32.mxu0 0.0
      %4565 = vmatmul.mubr.f32.gmra.mxu0 %v3932
      %v4566 = vpop.f32.mrf.mxu0
      %v4567 = vadd.f32 %v4395, %v4566
      %v4568 = vpop.f32.mrf.mxu0
      %4569 = vmatprep.mubr.f32.mxu0 0.0
      %4570 = vmatmul.mubr.f32.gmra.mxu0 %v3935
      %v4571 = vpop.f32.mrf.mxu0
      %v4572 = vadd.f32 %v4395, %v4571
      %v4573 = vpop.f32.mrf.mxu0
      %4574 = vmatprep.mubr.f32.mxu0 0.0
      %4575 = vmatmul.mubr.f32.gmra.mxu0 %v3938
      %v4576 = vpop.f32.mrf.mxu0
      %v4577 = vadd.f32 %v4395, %v4576
      %v4578 = vpop.f32.mrf.mxu0
      %4579 = vmatprep.mubr.f32.mxu0 0.0
      %4580 = vmatmul.mubr.f32.gmra.mxu0 %v3941
      %v4581 = vpop.f32.mrf.mxu0
      %v4582 = vadd.f32 %v4395, %v4581
      %v4583 = vpop.f32.mrf.mxu0
      %4584 = vmatprep.mubr.f32.mxu0 0.0
      %4585 = vmatmul.mubr.f32.gmra.mxu0 %v3944
      %v4586 = vpop.f32.mrf.mxu0
      %v4587 = vadd.f32 %v4395, %v4586
      %v4588 = vpop.f32.mrf.mxu0
      %4589 = vmatprep.mubr.f32.mxu0 0.0
      %4590 = vmatmul.mubr.f32.gmra.mxu0 %v3947
      %v4591 = vpop.f32.mrf.mxu0
      %v4592 = vadd.f32 %v4395, %v4591
      %v4593 = vpop.f32.mrf.mxu0
      %4594 = vmatprep.mubr.f32.mxu0 0.0
      %4595 = vmatmul.mubr.f32.gmra.mxu0 %v3950
      %v4596 = vpop.f32.mrf.mxu0
      %v4597 = vadd.f32 %v4395, %v4596
      %v4598 = vpop.f32.mrf.mxu0
      %4599 = vmatprep.mubr.f32.mxu0 0.0
      %4600 = vmatmul.mubr.f32.gmra.mxu0 %v3953
      %v4601 = vpop.f32.mrf.mxu0
      %v4602 = vadd.f32 %v4395, %v4601
      %v4603 = vpop.f32.mrf.mxu0
      %4604 = vmatprep.mubr.f32.mxu0 0.0
      %4605 = vmatmul.mubr.f32.gmra.mxu0 %v3956
      %v4606 = vpop.f32.mrf.mxu0
      %v4607 = vadd.f32 %v4395, %v4606
      %v4608 = vpop.f32.mrf.mxu0
      %4609 = vmatprep.mubr.f32.mxu0 0.0
      %4610 = vmatmul.mubr.f32.gmra.mxu0 %v3959
      %v4611 = vpop.f32.mrf.mxu0
      %v4612 = vadd.f32 %v4395, %v4611
      %v4613 = vpop.f32.mrf.mxu0
      %4614 = vmatprep.mubr.f32.mxu0 0.0
      %4615 = vmatmul.mubr.f32.gmra.mxu0 %v3962
      %v4616 = vpop.f32.mrf.mxu0
      %v4617 = vadd.f32 %v4395, %v4616
      %v4618 = vpop.f32.mrf.mxu0
      %4619 = vmatprep.mubr.f32.mxu0 0.0
      %4620 = vmatmul.mubr.f32.gmra.mxu0 %v3965
      %v4621 = vpop.f32.mrf.mxu0
      %v4622 = vadd.f32 %v4395, %v4621
      %v4623 = vpop.f32.mrf.mxu0
      %4624 = vdwg.mxu0
      %4626 = vset.pattern.permute.xlu0 0
      %4627 = vperm.xlu0 %4626, %v4324
      %v4628 = vpop.permute.xlu0 %4627
      %4631 = vset.pattern.permute.xlu0 0
      %4632 = vperm.xlu0 %4631, %v4326
      %v4633 = vpop.permute.xlu0 %4632
      %4636 = vset.pattern.permute.xlu0 0
      %4637 = vperm.xlu0 %4636, %v4328
      %v4638 = vpop.permute.xlu0 %4637
      %4641 = vset.pattern.permute.xlu0 0
      %4642 = vperm.xlu0 %4641, %v4330
      %v4643 = vpop.permute.xlu0 %4642
      %4646 = vset.pattern.permute.xlu0 0
      %4647 = vperm.xlu0 %4646, %v4332
      %v4648 = vpop.permute.xlu0 %4647
      %4651 = vset.pattern.permute.xlu0 0
      %4652 = vperm.xlu0 %4651, %v4334
      %v4653 = vpop.permute.xlu0 %4652
      %4656 = vset.pattern.permute.xlu0 0
      %4657 = vperm.xlu0 %4656, %v4336
      %v4658 = vpop.permute.xlu0 %4657
      %4661 = vset.pattern.permute.xlu0 0
      %4662 = vperm.xlu0 %4661, %v4338
      %v4663 = vpop.permute.xlu0 %4662
      %4666 = vset.pattern.permute.xlu0 0
      %4667 = vperm.xlu0 %4666, %v4340
      %v4668 = vpop.permute.xlu0 %4667
      %4671 = vset.pattern.permute.xlu0 0
      %4672 = vperm.xlu0 %4671, %v4342
      %v4673 = vpop.permute.xlu0 %4672
      %4676 = vset.pattern.permute.xlu0 0
      %4677 = vperm.xlu0 %4676, %v4344
      %v4678 = vpop.permute.xlu0 %4677
      %4681 = vset.pattern.permute.xlu0 0
      %4682 = vperm.xlu0 %4681, %v4346
      %v4683 = vpop.permute.xlu0 %4682
      %4686 = vset.pattern.permute.xlu0 0
      %4687 = vperm.xlu0 %4686, %v4348
      %v4688 = vpop.permute.xlu0 %4687
      %4691 = vset.pattern.permute.xlu0 0
      %4692 = vperm.xlu0 %4691, %v4350
      %v4693 = vpop.permute.xlu0 %4692
      %4696 = vset.pattern.permute.xlu0 0
      %4697 = vperm.xlu0 %4696, %v4352
      %v4698 = vpop.permute.xlu0 %4697
      %4701 = vset.pattern.permute.xlu0 0
      %4702 = vperm.xlu0 %4701, %v4354
      %v4703 = vpop.permute.xlu0 %4702
      %4706 = vset.pattern.permute.xlu0 0
      %4707 = vperm.xlu0 %4706, %v4356
      %v4708 = vpop.permute.xlu0 %4707
      %4711 = vset.pattern.permute.xlu0 0
      %4712 = vperm.xlu0 %4711, %v4358
      %v4713 = vpop.permute.xlu0 %4712
      %4716 = vset.pattern.permute.xlu0 0
      %4717 = vperm.xlu0 %4716, %v4360
      %v4718 = vpop.permute.xlu0 %4717
      %4721 = vset.pattern.permute.xlu0 0
      %4722 = vperm.xlu0 %4721, %v4362
      %v4723 = vpop.permute.xlu0 %4722
      %4726 = vset.pattern.permute.xlu0 0
      %4727 = vperm.xlu0 %4726, %v4364
      %v4728 = vpop.permute.xlu0 %4727
      %4731 = vset.pattern.permute.xlu0 0
      %4732 = vperm.xlu0 %4731, %v4366
      %v4733 = vpop.permute.xlu0 %4732
      %4736 = vset.pattern.permute.xlu0 0
      %4737 = vperm.xlu0 %4736, %v4368
      %v4738 = vpop.permute.xlu0 %4737
      %4741 = vset.pattern.permute.xlu0 0
      %4742 = vperm.xlu0 %4741, %v4370
      %v4743 = vpop.permute.xlu0 %4742
      %4746 = vset.pattern.permute.xlu0 0
      %4747 = vperm.xlu0 %4746, %v4372
      %v4748 = vpop.permute.xlu0 %4747
      %4751 = vset.pattern.permute.xlu0 0
      %4752 = vperm.xlu0 %4751, %v4374
      %v4753 = vpop.permute.xlu0 %4752
      %4756 = vset.pattern.permute.xlu0 0
      %4757 = vperm.xlu0 %4756, %v4376
      %v4758 = vpop.permute.xlu0 %4757
      %4761 = vset.pattern.permute.xlu0 0
      %4762 = vperm.xlu0 %4761, %v4378
      %v4763 = vpop.permute.xlu0 %4762
      %4766 = vset.pattern.permute.xlu0 0
      %4767 = vperm.xlu0 %4766, %v4380
      %v4768 = vpop.permute.xlu0 %4767
      %4771 = vset.pattern.permute.xlu0 0
      %4772 = vperm.xlu0 %4771, %v4382
      %v4773 = vpop.permute.xlu0 %4772
      %4776 = vset.pattern.permute.xlu0 0
      %4777 = vperm.xlu0 %4776, %v4384
      %v4778 = vpop.permute.xlu0 %4777
      %4781 = vset.pattern.permute.xlu0 0
      %4782 = vperm.xlu0 %4781, %v4386
      %v4783 = vpop.permute.xlu0 %4782
      %v4785 = vmul.f32 %v4628, %v3829
      %v4786 = vmul.f32 %v4633, %v3830
      %v4787 = vmul.f32 %v4638, %v3831
      %v4788 = vmul.f32 %v4643, %v3832
      %v4789 = vmul.f32 %v4648, %v3833
      %v4790 = vmul.f32 %v4653, %v3834
      %v4791 = vmul.f32 %v4658, %v3835
      %v4792 = vmul.f32 %v4663, %v3836
      %v4793 = vmul.f32 %v4668, %v3837
      %v4794 = vmul.f32 %v4673, %v3838
      %v4795 = vmul.f32 %v4678, %v3839
      %v4796 = vmul.f32 %v4683, %v3840
      %v4797 = vmul.f32 %v4688, %v3841
      %v4798 = vmul.f32 %v4693, %v3842
      %v4799 = vmul.f32 %v4698, %v3843
      %v4800 = vmul.f32 %v4703, %v3844
      %v4801 = vmul.f32 %v4708, %v3845
      %v4802 = vmul.f32 %v4713, %v3846
      %v4803 = vmul.f32 %v4718, %v3847
      %v4804 = vmul.f32 %v4723, %v3848
      %v4805 = vmul.f32 %v4728, %v3849
      %v4806 = vmul.f32 %v4733, %v3850
      %v4807 = vmul.f32 %v4738, %v3851
      %v4808 = vmul.f32 %v4743, %v3852
      %v4809 = vmul.f32 %v4748, %v3853
      %v4810 = vmul.f32 %v4753, %v3854
      %v4811 = vmul.f32 %v4758, %v3855
      %v4812 = vmul.f32 %v4763, %v3856
      %v4813 = vmul.f32 %v4768, %v3857
      %v4814 = vmul.f32 %v4773, %v3858
      %v4815 = vmul.f32 %v4778, %v3859
      %v4816 = vmul.f32 %v4783, %v3860
      %v4817 = vmul.f32 %v4785, %v863
      %v4818 = vmul.f32 %v4786, %v863
      %v4819 = vmul.f32 %v4787, %v863
      %v4820 = vmul.f32 %v4788, %v863
      %v4821 = vmul.f32 %v4789, %v863
      %v4822 = vmul.f32 %v4790, %v863
      %v4823 = vmul.f32 %v4791, %v863
      %v4824 = vmul.f32 %v4792, %v863
      %v4825 = vmul.f32 %v4793, %v863
      %v4826 = vmul.f32 %v4794, %v863
      %v4827 = vmul.f32 %v4795, %v863
      %v4828 = vmul.f32 %v4796, %v863
      %v4829 = vmul.f32 %v4797, %v863
      %v4830 = vmul.f32 %v4798, %v863
      %v4831 = vmul.f32 %v4799, %v863
      %v4832 = vmul.f32 %v4800, %v863
      %v4833 = vmul.f32 %v4801, %v863
      %v4834 = vmul.f32 %v4802, %v863
      %v4835 = vmul.f32 %v4803, %v863
      %v4836 = vmul.f32 %v4804, %v863
      %v4837 = vmul.f32 %v4805, %v863
      %v4838 = vmul.f32 %v4806, %v863
      %v4839 = vmul.f32 %v4807, %v863
      %v4840 = vmul.f32 %v4808, %v863
      %v4841 = vmul.f32 %v4809, %v863
      %v4842 = vmul.f32 %v4810, %v863
      %v4843 = vmul.f32 %v4811, %v863
      %v4844 = vmul.f32 %v4812, %v863
      %v4845 = vmul.f32 %v4813, %v863
      %v4846 = vmul.f32 %v4814, %v863
      %v4847 = vmul.f32 %v4815, %v863
      %v4848 = vmul.f32 %v4816, %v863
      %v4849 = vadd.f32 %v2097, 1.0
      %v4850 = vadd.f32 %v2104, 1.0
      %v4851 = vadd.f32 %v2111, 1.0
      %v4852 = vadd.f32 %v2118, 1.0
      %v4853 = vadd.f32 %v2125, 1.0
      %v4854 = vadd.f32 %v2132, 1.0
      %v4855 = vadd.f32 %v2139, 1.0
      %v4856 = vadd.f32 %v2146, 1.0
      %v4857 = vadd.f32 %v2153, 1.0
      %v4858 = vadd.f32 %v2160, 1.0
      %v4859 = vadd.f32 %v2167, 1.0
      %v4860 = vadd.f32 %v2174, 1.0
      %v4861 = vadd.f32 %v2181, 1.0
      %v4862 = vadd.f32 %v2188, 1.0
      %v4863 = vadd.f32 %v2195, 1.0
      %v4864 = vadd.f32 %v2202, 1.0
      %v4865 = vadd.f32 %v2209, 1.0
      %v4866 = vadd.f32 %v2216, 1.0
      %v4867 = vadd.f32 %v2223, 1.0
      %v4868 = vadd.f32 %v2230, 1.0
      %v4869 = vadd.f32 %v2237, 1.0
      %v4870 = vadd.f32 %v2244, 1.0
      %v4871 = vadd.f32 %v2251, 1.0
      %v4872 = vadd.f32 %v2258, 1.0
      %v4873 = vadd.f32 %v2265, 1.0
      %v4874 = vadd.f32 %v2272, 1.0
      %v4875 = vadd.f32 %v2279, 1.0
      %v4876 = vadd.f32 %v2286, 1.0
      %v4877 = vadd.f32 %v2293, 1.0
      %v4878 = vadd.f32 %v2300, 1.0
      %v4879 = vadd.f32 %v2307, 1.0
      %v4880 = vadd.f32 %v2314, 1.0
      %v4881 = vrcp.pop %v4849
      %v4882 = vmul.f32 %v4467, %v4881
      %v4883 = vrcp.pop %v4850
      %v4884 = vmul.f32 %v4472, %v4883
      %v4885 = vrcp.pop %v4851
      %v4886 = vmul.f32 %v4477, %v4885
      %v4887 = vrcp.pop %v4852
      %v4888 = vmul.f32 %v4482, %v4887
      %v4889 = vrcp.pop %v4853
      %v4890 = vmul.f32 %v4487, %v4889
      %v4891 = vrcp.pop %v4854
      %v4892 = vmul.f32 %v4492, %v4891
      %v4893 = vrcp.pop %v4855
      %v4894 = vmul.f32 %v4497, %v4893
      %v4895 = vrcp.pop %v4856
      %v4896 = vmul.f32 %v4502, %v4895
      %v4897 = vrcp.pop %v4857
      %v4898 = vmul.f32 %v4507, %v4897
      %v4899 = vrcp.pop %v4858
      %v4900 = vmul.f32 %v4512, %v4899
      %v4901 = vrcp.pop %v4859
      %v4902 = vmul.f32 %v4517, %v4901
      %v4903 = vrcp.pop %v4860
      %v4904 = vmul.f32 %v4522, %v4903
      %v4905 = vrcp.pop %v4861
      %v4906 = vmul.f32 %v4527, %v4905
      %v4907 = vrcp.pop %v4862
      %v4908 = vmul.f32 %v4532, %v4907
      %v4909 = vrcp.pop %v4863
      %v4910 = vmul.f32 %v4537, %v4909
      %v4911 = vrcp.pop %v4864
      %v4912 = vmul.f32 %v4542, %v4911
      %v4913 = vrcp.pop %v4865
      %v4914 = vmul.f32 %v4547, %v4913
      %v4915 = vrcp.pop %v4866
      %v4916 = vmul.f32 %v4552, %v4915
      %v4917 = vrcp.pop %v4867
      %v4918 = vmul.f32 %v4557, %v4917
      %v4919 = vrcp.pop %v4868
      %v4920 = vmul.f32 %v4562, %v4919
      %v4921 = vrcp.pop %v4869
      %v4922 = vmul.f32 %v4567, %v4921
      %v4923 = vrcp.pop %v4870
      %v4924 = vmul.f32 %v4572, %v4923
      %v4925 = vrcp.pop %v4871
      %v4926 = vmul.f32 %v4577, %v4925
      %v4927 = vrcp.pop %v4872
      %v4928 = vmul.f32 %v4582, %v4927
      %v4929 = vrcp.pop %v4873
      %v4930 = vmul.f32 %v4587, %v4929
      %v4931 = vrcp.pop %v4874
      %v4932 = vmul.f32 %v4592, %v4931
      %v4933 = vrcp.pop %v4875
      %v4934 = vmul.f32 %v4597, %v4933
      %v4935 = vrcp.pop %v4876
      %v4936 = vmul.f32 %v4602, %v4935
      %v4937 = vrcp.pop %v4877
      %v4938 = vmul.f32 %v4607, %v4937
      %v4939 = vrcp.pop %v4878
      %v4940 = vmul.f32 %v4612, %v4939
      %v4941 = vrcp.pop %v4879
      %v4942 = vmul.f32 %v4617, %v4941
      %v4943 = vrcp.pop %v4880
      %v4944 = vmul.f32 %v4622, %v4943
      %4946 = vset.pattern.permute.xlu0 0
      %4947 = vperm.xlu0 %4946, %v4882
      %v4948 = vpop.permute.xlu0 %4947
      %4951 = vset.pattern.permute.xlu0 0
      %4952 = vperm.xlu0 %4951, %v4884
      %v4953 = vpop.permute.xlu0 %4952
      %4956 = vset.pattern.permute.xlu0 0
      %4957 = vperm.xlu0 %4956, %v4886
      %v4958 = vpop.permute.xlu0 %4957
      %4961 = vset.pattern.permute.xlu0 0
      %4962 = vperm.xlu0 %4961, %v4888
      %v4963 = vpop.permute.xlu0 %4962
      %4966 = vset.pattern.permute.xlu0 0
      %4967 = vperm.xlu0 %4966, %v4890
      %v4968 = vpop.permute.xlu0 %4967
      %4971 = vset.pattern.permute.xlu0 0
      %4972 = vperm.xlu0 %4971, %v4892
      %v4973 = vpop.permute.xlu0 %4972
      %4976 = vset.pattern.permute.xlu0 0
      %4977 = vperm.xlu0 %4976, %v4894
      %v4978 = vpop.permute.xlu0 %4977
      %4981 = vset.pattern.permute.xlu0 0
      %4982 = vperm.xlu0 %4981, %v4896
      %v4983 = vpop.permute.xlu0 %4982
      %4986 = vset.pattern.permute.xlu0 0
      %4987 = vperm.xlu0 %4986, %v4898
      %v4988 = vpop.permute.xlu0 %4987
      %4991 = vset.pattern.permute.xlu0 0
      %4992 = vperm.xlu0 %4991, %v4900
      %v4993 = vpop.permute.xlu0 %4992
      %4996 = vset.pattern.permute.xlu0 0
      %4997 = vperm.xlu0 %4996, %v4902
      %v4998 = vpop.permute.xlu0 %4997
      %5001 = vset.pattern.permute.xlu0 0
      %5002 = vperm.xlu0 %5001, %v4904
      %v5003 = vpop.permute.xlu0 %5002
      %5006 = vset.pattern.permute.xlu0 0
      %5007 = vperm.xlu0 %5006, %v4906
      %v5008 = vpop.permute.xlu0 %5007
      %5011 = vset.pattern.permute.xlu0 0
      %5012 = vperm.xlu0 %5011, %v4908
      %v5013 = vpop.permute.xlu0 %5012
      %5016 = vset.pattern.permute.xlu0 0
      %5017 = vperm.xlu0 %5016, %v4910
      %v5018 = vpop.permute.xlu0 %5017
      %5021 = vset.pattern.permute.xlu0 0
      %5022 = vperm.xlu0 %5021, %v4912
      %v5023 = vpop.permute.xlu0 %5022
      %5026 = vset.pattern.permute.xlu0 0
      %5027 = vperm.xlu0 %5026, %v4914
      %v5028 = vpop.permute.xlu0 %5027
      %5031 = vset.pattern.permute.xlu0 0
      %5032 = vperm.xlu0 %5031, %v4916
      %v5033 = vpop.permute.xlu0 %5032
      %5036 = vset.pattern.permute.xlu0 0
      %5037 = vperm.xlu0 %5036, %v4918
      %v5038 = vpop.permute.xlu0 %5037
      %5041 = vset.pattern.permute.xlu0 0
      %5042 = vperm.xlu0 %5041, %v4920
      %v5043 = vpop.permute.xlu0 %5042
      %5046 = vset.pattern.permute.xlu0 0
      %5047 = vperm.xlu0 %5046, %v4922
      %v5048 = vpop.permute.xlu0 %5047
      %5051 = vset.pattern.permute.xlu0 0
      %5052 = vperm.xlu0 %5051, %v4924
      %v5053 = vpop.permute.xlu0 %5052
      %5056 = vset.pattern.permute.xlu0 0
      %5057 = vperm.xlu0 %5056, %v4926
      %v5058 = vpop.permute.xlu0 %5057
      %5061 = vset.pattern.permute.xlu0 0
      %5062 = vperm.xlu0 %5061, %v4928
      %v5063 = vpop.permute.xlu0 %5062
      %5066 = vset.pattern.permute.xlu0 0
      %5067 = vperm.xlu0 %5066, %v4930
      %v5068 = vpop.permute.xlu0 %5067
      %5071 = vset.pattern.permute.xlu0 0
      %5072 = vperm.xlu0 %5071, %v4932
      %v5073 = vpop.permute.xlu0 %5072
      %5076 = vset.pattern.permute.xlu0 0
      %5077 = vperm.xlu0 %5076, %v4934
      %v5078 = vpop.permute.xlu0 %5077
      %5081 = vset.pattern.permute.xlu0 0
      %5082 = vperm.xlu0 %5081, %v4936
      %v5083 = vpop.permute.xlu0 %5082
      %5086 = vset.pattern.permute.xlu0 0
      %5087 = vperm.xlu0 %5086, %v4938
      %v5088 = vpop.permute.xlu0 %5087
      %5091 = vset.pattern.permute.xlu0 0
      %5092 = vperm.xlu0 %5091, %v4940
      %v5093 = vpop.permute.xlu0 %5092
      %5096 = vset.pattern.permute.xlu0 0
      %5097 = vperm.xlu0 %5096, %v4942
      %v5098 = vpop.permute.xlu0 %5097
      %5101 = vset.pattern.permute.xlu0 0
      %5102 = vperm.xlu0 %5101, %v4944
      %v5103 = vpop.permute.xlu0 %5102
      %v5105 = vmul.f32 %v1930, %v4948
      %v5106 = vmul.f32 %v1931, %v4953
      %v5107 = vmul.f32 %v1932, %v4958
      %v5108 = vmul.f32 %v1933, %v4963
      %v5109 = vmul.f32 %v1934, %v4968
      %v5110 = vmul.f32 %v1935, %v4973
      %v5111 = vmul.f32 %v1936, %v4978
      %v5112 = vmul.f32 %v1937, %v4983
      %v5113 = vmul.f32 %v1938, %v4988
      %v5114 = vmul.f32 %v1939, %v4993
      %v5115 = vmul.f32 %v1940, %v4998
      %v5116 = vmul.f32 %v1941, %v5003
      %v5117 = vmul.f32 %v1942, %v5008
      %v5118 = vmul.f32 %v1943, %v5013
      %v5119 = vmul.f32 %v1944, %v5018
      %v5120 = vmul.f32 %v1945, %v5023
      %v5121 = vmul.f32 %v1946, %v5028
      %v5122 = vmul.f32 %v1947, %v5033
      %v5123 = vmul.f32 %v1948, %v5038
      %v5124 = vmul.f32 %v1949, %v5043
      %v5125 = vmul.f32 %v1950, %v5048
      %v5126 = vmul.f32 %v1951, %v5053
      %v5127 = vmul.f32 %v1952, %v5058
      %v5128 = vmul.f32 %v1953, %v5063
      %v5129 = vmul.f32 %v1954, %v5068
      %v5130 = vmul.f32 %v1955, %v5073
      %v5131 = vmul.f32 %v1956, %v5078
      %v5132 = vmul.f32 %v1957, %v5083
      %v5133 = vmul.f32 %v1958, %v5088
      %v5134 = vmul.f32 %v1959, %v5093
      %v5135 = vmul.f32 %v1960, %v5098
      %v5136 = vmul.f32 %v1961, %v5103
      %v5137 = vadd.f32 %v4817, %v5105
      %v5138 = vadd.f32 %v4818, %v5106
      %v5139 = vadd.f32 %v4819, %v5107
      %v5140 = vadd.f32 %v4820, %v5108
      %v5141 = vadd.f32 %v4821, %v5109
      %v5142 = vadd.f32 %v4822, %v5110
      %v5143 = vadd.f32 %v4823, %v5111
      %v5144 = vadd.f32 %v4824, %v5112
      %v5145 = vadd.f32 %v4825, %v5113
      %v5146 = vadd.f32 %v4826, %v5114
      %v5147 = vadd.f32 %v4827, %v5115
      %v5148 = vadd.f32 %v4828, %v5116
      %v5149 = vadd.f32 %v4829, %v5117
      %v5150 = vadd.f32 %v4830, %v5118
      %v5151 = vadd.f32 %v4831, %v5119
      %v5152 = vadd.f32 %v4832, %v5120
      %v5153 = vadd.f32 %v4833, %v5121
      %v5154 = vadd.f32 %v4834, %v5122
      %v5155 = vadd.f32 %v4835, %v5123
      %v5156 = vadd.f32 %v4836, %v5124
      %v5157 = vadd.f32 %v4837, %v5125
      %v5158 = vadd.f32 %v4838, %v5126
      %v5159 = vadd.f32 %v4839, %v5127
      %v5160 = vadd.f32 %v4840, %v5128
      %v5161 = vadd.f32 %v4841, %v5129
      %v5162 = vadd.f32 %v4842, %v5130
      %v5163 = vadd.f32 %v4843, %v5131
      %v5164 = vadd.f32 %v4844, %v5132
      %v5165 = vadd.f32 %v4845, %v5133
      %v5166 = vadd.f32 %v4846, %v5134
      %v5167 = vadd.f32 %v4847, %v5135
      %v5168 = vadd.f32 %v4848, %v5136
      %v5169 = vld [vmem:[#allocation3] sm:$0xff]
      %v5170 = vld [vmem:[#allocation3 + $0x8] sm:$0xff]
      %v5171 = vld [vmem:[#allocation3 + $0x10] sm:$0xff]
      %v5172 = vld [vmem:[#allocation3 + $0x18] sm:$0xff]
      %v5173 = vld [vmem:[#allocation3 + $0x20] sm:$0xff]
      %v5174 = vld [vmem:[#allocation3 + $0x28] sm:$0xff]
      %v5175 = vld [vmem:[#allocation3 + $0x30] sm:$0xff]
      %v5176 = vld [vmem:[#allocation3 + $0x38] sm:$0xff]
      %5177 = vxpose.xlu0.b32.start [1/16] %v1248, 128
      %5178 = vxpose.xlu0.b32.cont [2/16] %v1249, 128
      %5179 = vxpose.xlu0.b32.cont [3/16] %v1250, 128
      %5180 = vxpose.xlu0.b32.cont [4/16] %v1251, 128
      %5181 = vxpose.xlu0.b32.cont [5/16] %v1252, 128
      %5182 = vxpose.xlu0.b32.cont [6/16] %v1253, 128
      %5183 = vxpose.xlu0.b32.cont [7/16] %v1254, 128
      %5184 = vxpose.xlu0.b32.cont [8/16] %v1255, 128
      %5185 = vxpose.xlu0.b32.cont [9/16] %v1256, 128
      %5186 = vxpose.xlu0.b32.cont [10/16] %v1257, 128
      %5187 = vxpose.xlu0.b32.cont [11/16] %v1258, 128
      %5188 = vxpose.xlu0.b32.cont [12/16] %v1259, 128
      %5189 = vxpose.xlu0.b32.cont [13/16] %v1260, 128
      %5190 = vxpose.xlu0.b32.cont [14/16] %v1261, 128
      %5191 = vxpose.xlu0.b32.cont [15/16] %v1262, 128
      %5192 = vxpose.xlu0.b32.end [16/16] %v1263, 128
      %v5193 = vpop.trf.xlu0
      %v5194 = vpop.trf.xlu0
      %v5195 = vpop.trf.xlu0
      %v5196 = vpop.trf.xlu0
      %v5197 = vpop.trf.xlu0
      %v5198 = vpop.trf.xlu0
      %v5199 = vpop.trf.xlu0
      %v5200 = vpop.trf.xlu0
      %v5201 = vpop.trf.xlu0
      %v5202 = vpop.trf.xlu0
      %v5203 = vpop.trf.xlu0
      %v5204 = vpop.trf.xlu0
      %v5205 = vpop.trf.xlu0
      %v5206 = vpop.trf.xlu0
      %v5207 = vpop.trf.xlu0
      %v5208 = vpop.trf.xlu0
      %5209 = vxpose.xlu0.b32.start [1/16] %v1264, 128
      %5210 = vxpose.xlu0.b32.cont [2/16] %v1265, 128
      %5211 = vxpose.xlu0.b32.cont [3/16] %v1266, 128
      %5212 = vxpose.xlu0.b32.cont [4/16] %v1267, 128
      %5213 = vxpose.xlu0.b32.cont [5/16] %v1268, 128
      %5214 = vxpose.xlu0.b32.cont [6/16] %v1269, 128
      %5215 = vxpose.xlu0.b32.cont [7/16] %v1270, 128
      %5216 = vxpose.xlu0.b32.cont [8/16] %v1271, 128
      %5217 = vxpose.xlu0.b32.cont [9/16] %v1272, 128
      %5218 = vxpose.xlu0.b32.cont [10/16] %v1273, 128
      %5219 = vxpose.xlu0.b32.cont [11/16] %v1274, 128
      %5220 = vxpose.xlu0.b32.cont [12/16] %v1275, 128
      %5221 = vxpose.xlu0.b32.cont [13/16] %v1276, 128
      %5222 = vxpose.xlu0.b32.cont [14/16] %v1277, 128
      %5223 = vxpose.xlu0.b32.cont [15/16] %v1278, 128
      %5224 = vxpose.xlu0.b32.end [16/16] %v1279, 128
      %v5225 = vpop.trf.xlu0
      %v5226 = vpop.trf.xlu0
      %v5227 = vpop.trf.xlu0
      %v5228 = vpop.trf.xlu0
      %v5229 = vpop.trf.xlu0
      %v5230 = vpop.trf.xlu0
      %v5231 = vpop.trf.xlu0
      %v5232 = vpop.trf.xlu0
      %v5233 = vpop.trf.xlu0
      %v5234 = vpop.trf.xlu0
      %v5235 = vpop.trf.xlu0
      %v5236 = vpop.trf.xlu0
      %v5237 = vpop.trf.xlu0
      %v5238 = vpop.trf.xlu0
      %v5239 = vpop.trf.xlu0
      %v5240 = vpop.trf.xlu0
      %5241 = vmatprep.subr.mxu0 0.0
      %5242 = vmatpush1.msra.mxu0 %v5152
      %5243 = vmatprep.subr.mxu0 0.0
      %5244 = vmatpush1.msra.mxu0 %v5151
      %5245 = vmatprep.subr.mxu0 0.0
      %5246 = vmatpush1.msra.mxu0 %v5150
      %5247 = vmatprep.subr.mxu0 0.0
      %5248 = vmatpush1.msra.mxu0 %v5149
      %5249 = vmatprep.subr.mxu0 0.0
      %5250 = vmatpush1.msra.mxu0 %v5148
      %5251 = vmatprep.subr.mxu0 0.0
      %5252 = vmatpush1.msra.mxu0 %v5147
      %5253 = vmatprep.subr.mxu0 0.0
      %5254 = vmatpush1.msra.mxu0 %v5146
      %5255 = vmatprep.subr.mxu0 0.0
      %5256 = vmatpush1.msra.mxu0 %v5145
      %5257 = vmatprep.subr.mxu0 0.0
      %5258 = vmatpush1.msra.mxu0 %v5144
      %5259 = vmatprep.subr.mxu0 0.0
      %5260 = vmatpush1.msra.mxu0 %v5143
      %5261 = vmatprep.subr.mxu0 0.0
      %5262 = vmatpush1.msra.mxu0 %v5142
      %5263 = vmatprep.subr.mxu0 0.0
      %5264 = vmatpush1.msra.mxu0 %v5141
      %5265 = vmatprep.subr.mxu0 0.0
      %5266 = vmatpush1.msra.mxu0 %v5140
      %5267 = vmatprep.subr.mxu0 0.0
      %5268 = vmatpush1.msra.mxu0 %v5139
      %5269 = vmatprep.subr.mxu0 0.0
      %5270 = vmatpush1.msra.mxu0 %v5138
      %5271 = vmatprep.subr.mxu0 0.0
      %5272 = vmatpush1.msra.mxu0 %v5137
      %5273 = vmatprep.subr.mxu0 0.0
      %5274 = vmatpush2.msra.mxu0 %v5168
      %5275 = vmatprep.subr.mxu0 0.0
      %5276 = vmatpush2.msra.mxu0 %v5167
      %5277 = vmatprep.subr.mxu0 0.0
      %5278 = vmatpush2.msra.mxu0 %v5166
      %5279 = vmatprep.subr.mxu0 0.0
      %5280 = vmatpush2.msra.mxu0 %v5165
      %5281 = vmatprep.subr.mxu0 0.0
      %5282 = vmatpush2.msra.mxu0 %v5164
      %5283 = vmatprep.subr.mxu0 0.0
      %5284 = vmatpush2.msra.mxu0 %v5163
      %5285 = vmatprep.subr.mxu0 0.0
      %5286 = vmatpush2.msra.mxu0 %v5162
      %5287 = vmatprep.subr.mxu0 0.0
      %5288 = vmatpush2.msra.mxu0 %v5161
      %5289 = vmatprep.subr.mxu0 0.0
      %5290 = vmatpush2.msra.mxu0 %v5160
      %5291 = vmatprep.subr.mxu0 0.0
      %5292 = vmatpush2.msra.mxu0 %v5159
      %5293 = vmatprep.subr.mxu0 0.0
      %5294 = vmatpush2.msra.mxu0 %v5158
      %5295 = vmatprep.subr.mxu0 0.0
      %5296 = vmatpush2.msra.mxu0 %v5157
      %5297 = vmatprep.subr.mxu0 0.0
      %5298 = vmatpush2.msra.mxu0 %v5156
      %5299 = vmatprep.subr.mxu0 0.0
      %5300 = vmatpush2.msra.mxu0 %v5155
      %5301 = vmatprep.subr.mxu0 0.0
      %5302 = vmatpush2.msra.mxu0 %v5154
      %5303 = vmatprep.subr.mxu0 0.0
      %5304 = vmatpush2.msra.mxu0 %v5153
      %5305 = vmatprep.mubr.f32.mxu0 %v5225
      %5306 = vmatmul.mubr.f32.gmra.mxu0 %v5193
      %v5307 = vpop.f32.mrf.mxu0
      %v5308 = vadd.f32 0.0, %v5307
      %v5309 = vpop.f32.mrf.mxu0
      %5310 = vmatprep.mubr.f32.mxu0 %v5226
      %5311 = vmatmul.mubr.f32.gmra.mxu0 %v5194
      %v5312 = vpop.f32.mrf.mxu0
      %v5313 = vadd.f32 0.0, %v5312
      %v5314 = vpop.f32.mrf.mxu0
      %5315 = vmatprep.mubr.f32.mxu0 %v5227
      %5316 = vmatmul.mubr.f32.gmra.mxu0 %v5195
      %v5317 = vpop.f32.mrf.mxu0
      %v5318 = vadd.f32 0.0, %v5317
      %v5319 = vpop.f32.mrf.mxu0
      %5320 = vmatprep.mubr.f32.mxu0 %v5228
      %5321 = vmatmul.mubr.f32.gmra.mxu0 %v5196
      %v5322 = vpop.f32.mrf.mxu0
      %v5323 = vadd.f32 0.0, %v5322
      %v5324 = vpop.f32.mrf.mxu0
      %5325 = vmatprep.mubr.f32.mxu0 %v5229
      %5326 = vmatmul.mubr.f32.gmra.mxu0 %v5197
      %v5327 = vpop.f32.mrf.mxu0
      %v5328 = vadd.f32 0.0, %v5327
      %v5329 = vpop.f32.mrf.mxu0
      %5330 = vmatprep.mubr.f32.mxu0 %v5230
      %5331 = vmatmul.mubr.f32.gmra.mxu0 %v5198
      %v5332 = vpop.f32.mrf.mxu0
      %v5333 = vadd.f32 0.0, %v5332
      %v5334 = vpop.f32.mrf.mxu0
      %5335 = vmatprep.mubr.f32.mxu0 %v5231
      %5336 = vmatmul.mubr.f32.gmra.mxu0 %v5199
      %v5337 = vpop.f32.mrf.mxu0
      %v5338 = vadd.f32 0.0, %v5337
      %v5339 = vpop.f32.mrf.mxu0
      %5340 = vmatprep.mubr.f32.mxu0 %v5232
      %5341 = vmatmul.mubr.f32.gmra.mxu0 %v5200
      %v5342 = vpop.f32.mrf.mxu0
      %v5343 = vadd.f32 0.0, %v5342
      %v5344 = vpop.f32.mrf.mxu0
      %5345 = vdwg.mxu0
      %v5346 = vadd.f32 %v5169, %v5308
      %v5347 = vadd.f32 %v5170, %v5313
      %v5348 = vadd.f32 %v5171, %v5318
      %v5349 = vadd.f32 %v5172, %v5323
      %v5350 = vadd.f32 %v5173, %v5328
      %v5351 = vadd.f32 %v5174, %v5333
      %v5352 = vadd.f32 %v5175, %v5338
      %v5353 = vadd.f32 %v5176, %v5343
      %5354 = vst.msk [vmem:[#allocation3] sm:$0xff] %vm1994, %v5346
      %5355 = vst.msk [vmem:[#allocation3 + $0x8] sm:$0xff] %vm1994, %v5347
      %5356 = vst.msk [vmem:[#allocation3 + $0x10] sm:$0xff] %vm1994, %v5348
      %5357 = vst.msk [vmem:[#allocation3 + $0x18] sm:$0xff] %vm1994, %v5349
      %5358 = vst.msk [vmem:[#allocation3 + $0x20] sm:$0xff] %vm1994, %v5350
      %5359 = vst.msk [vmem:[#allocation3 + $0x28] sm:$0xff] %vm1994, %v5351
      %5360 = vst.msk [vmem:[#allocation3 + $0x30] sm:$0xff] %vm1994, %v5352
      %5361 = vst.msk [vmem:[#allocation3 + $0x38] sm:$0xff] %vm1994, %v5353
      // Predicated region
      $region128: #{e3egnn_forward.1} parent=83 // pred_check
        %p5362 = pneg %p781
      $region129: #{e3egnn_forward.1} parent=83 // pred_check_branch
        %5364 = sbr.rel (%p5362) target = $region131
      $region130: #{e3egnn_forward.1} parent=83 // pred_region
        %v5365 = vld [vmem:[#allocation2] sm:$0xff]
        %v5366 = vld [vmem:[#allocation2 + $0x8] sm:$0xff]
        %v5367 = vld [vmem:[#allocation2 + $0x10] sm:$0xff]
        %v5368 = vld [vmem:[#allocation2 + $0x18] sm:$0xff]
        %v5369 = vld [vmem:[#allocation2 + $0x20] sm:$0xff]
        %v5370 = vld [vmem:[#allocation2 + $0x28] sm:$0xff]
        %v5371 = vld [vmem:[#allocation2 + $0x30] sm:$0xff]
        %v5372 = vld [vmem:[#allocation2 + $0x38] sm:$0xff]
        %v5373 = vld [vmem:[#allocation3] sm:$0xff]
        %v5374 = vld [vmem:[#allocation3 + $0x8] sm:$0xff]
        %v5375 = vld [vmem:[#allocation3 + $0x10] sm:$0xff]
        %v5376 = vld [vmem:[#allocation3 + $0x18] sm:$0xff]
        %v5377 = vld [vmem:[#allocation3 + $0x20] sm:$0xff]
        %v5378 = vld [vmem:[#allocation3 + $0x28] sm:$0xff]
        %v5379 = vld [vmem:[#allocation3 + $0x30] sm:$0xff]
        %v5380 = vld [vmem:[#allocation3 + $0x38] sm:$0xff]
        %v5381 = vld [vmem:[%s763] sm:$0xff]
        %v5382 = vld [vmem:[%s763 + $0x8] sm:$0x3f]
        %v5383 = vld [vmem:[%s768] sm:$0xff]
        %v5384 = vld [vmem:[%s768 + $0x8] sm:$0x3f]
        %v5386 = vsel %vm1994, %v5373, 0
        %v5389 = vsel %vm1994, %v5374, 0
        %v5392 = vsel %vm1994, %v5375, 0
        %v5395 = vsel %vm1994, %v5376, 0
        %v5398 = vsel %vm1994, %v5377, 0
        %v5401 = vsel %vm1994, %v5378, 0
        %v5404 = vsel %vm1994, %v5379, 0
        %v5407 = vsel %vm1994, %v5380, 0
        %v5410 = vsel %vm2415, %v5384, 0
        %5412 = vmatprep.subr.mxu0 0.0
        %5413 = vmatpush1.msra.mxu0 0.0
        %5414 = vmatprep.subr.mxu0 0.0
        %5415 = vmatpush1.msra.mxu0 0.0
        %5416 = vmatprep.subr.mxu0 0.0
        %5417 = vmatpush1.msra.mxu0 0.0
        %5418 = vmatprep.subr.mxu0 0.0
        %5419 = vmatpush1.msra.mxu0 0.0
        %5420 = vmatprep.subr.mxu0 0.0
        %5421 = vmatpush1.msra.mxu0 0.0
        %5422 = vmatprep.subr.mxu0 0.0
        %5423 = vmatpush1.msra.mxu0 0.0
        %5424 = vmatprep.subr.mxu0 0.0
        %5425 = vmatpush1.msra.mxu0 0.0
        %5426 = vmatprep.subr.mxu0 0.0
        %5427 = vmatpush1.msra.mxu0 0.0
        %5428 = vmatprep.subr.mxu0 0.0
        %5429 = vmatpush1.msra.mxu0 0.0
        %5430 = vmatprep.subr.mxu0 0.0
        %5431 = vmatpush1.msra.mxu0 0.0
        %5432 = vmatprep.subr.mxu0 0.0
        %5433 = vmatpush1.msra.mxu0 0.0
        %5434 = vmatprep.subr.mxu0 0.0
        %5435 = vmatpush1.msra.mxu0 0.0
        %5436 = vmatprep.subr.mxu0 0.0
        %5437 = vmatpush1.msra.mxu0 0.0
        %5438 = vmatprep.subr.mxu0 0.0
        %5439 = vmatpush1.msra.mxu0 0.0
        %5440 = vmatprep.subr.mxu0 0.0
        %5441 = vmatpush1.msra.mxu0 %v5410
        %5442 = vmatprep.subr.mxu0 0.0
        %5443 = vmatpush1.msra.mxu0 %v5383
        %5444 = vmatprep.subr.mxu0 0.0
        %5445 = vmatpush2.msra.mxu0 0.0
        %5446 = vmatprep.subr.mxu0 0.0
        %5447 = vmatpush2.msra.mxu0 0.0
        %5448 = vmatprep.subr.mxu0 0.0
        %5449 = vmatpush2.msra.mxu0 0.0
        %5450 = vmatprep.subr.mxu0 0.0
        %5451 = vmatpush2.msra.mxu0 0.0
        %5452 = vmatprep.subr.mxu0 0.0
        %5453 = vmatpush2.msra.mxu0 0.0
        %5454 = vmatprep.subr.mxu0 0.0
        %5455 = vmatpush2.msra.mxu0 0.0
        %5456 = vmatprep.subr.mxu0 0.0
        %5457 = vmatpush2.msra.mxu0 0.0
        %5458 = vmatprep.subr.mxu0 0.0
        %5459 = vmatpush2.msra.mxu0 0.0
        %5460 = vmatprep.subr.mxu0 0.0
        %5461 = vmatpush2.msra.mxu0 0.0
        %5462 = vmatprep.subr.mxu0 0.0
        %5463 = vmatpush2.msra.mxu0 0.0
        %5464 = vmatprep.subr.mxu0 0.0
        %5465 = vmatpush2.msra.mxu0 0.0
        %5466 = vmatprep.subr.mxu0 0.0
        %5467 = vmatpush2.msra.mxu0 0.0
        %5468 = vmatprep.subr.mxu0 0.0
        %5469 = vmatpush2.msra.mxu0 0.0
        %5470 = vmatprep.subr.mxu0 0.0
        %5471 = vmatpush2.msra.mxu0 0.0
        %5472 = vmatprep.subr.mxu0 0.0
        %5473 = vmatpush2.msra.mxu0 0.0
        %5474 = vmatprep.subr.mxu0 0.0
        %5475 = vmatpush2.msra.mxu0 0.0
        %5476 = vmatprep.mubr.f32.mxu0 0.0
        %5477 = vmatmul.mubr.f32.gmra.mxu0 %v5386
        %v5478 = vpop.f32.mrf.mxu0
        %v5479 = vadd.f32 0.0, %v5478
        %v5480 = vpop.f32.mrf.mxu0
        %5481 = vmatprep.mubr.f32.mxu0 0.0
        %5482 = vmatmul.mubr.f32.gmra.mxu0 %v5389
        %v5483 = vpop.f32.mrf.mxu0
        %v5484 = vadd.f32 0.0, %v5483
        %v5485 = vpop.f32.mrf.mxu0
        %5486 = vmatprep.mubr.f32.mxu0 0.0
        %5487 = vmatmul.mubr.f32.gmra.mxu0 %v5392
        %v5488 = vpop.f32.mrf.mxu0
        %v5489 = vadd.f32 0.0, %v5488
        %v5490 = vpop.f32.mrf.mxu0
        %5491 = vmatprep.mubr.f32.mxu0 0.0
        %5492 = vmatmul.mubr.f32.gmra.mxu0 %v5395
        %v5493 = vpop.f32.mrf.mxu0
        %v5494 = vadd.f32 0.0, %v5493
        %v5495 = vpop.f32.mrf.mxu0
        %5496 = vmatprep.mubr.f32.mxu0 0.0
        %5497 = vmatmul.mubr.f32.gmra.mxu0 %v5398
        %v5498 = vpop.f32.mrf.mxu0
        %v5499 = vadd.f32 0.0, %v5498
        %v5500 = vpop.f32.mrf.mxu0
        %5501 = vmatprep.mubr.f32.mxu0 0.0
        %5502 = vmatmul.mubr.f32.gmra.mxu0 %v5401
        %v5503 = vpop.f32.mrf.mxu0
        %v5504 = vadd.f32 0.0, %v5503
        %v5505 = vpop.f32.mrf.mxu0
        %5506 = vmatprep.mubr.f32.mxu0 0.0
        %5507 = vmatmul.mubr.f32.gmra.mxu0 %v5404
        %v5508 = vpop.f32.mrf.mxu0
        %v5509 = vadd.f32 0.0, %v5508
        %v5510 = vpop.f32.mrf.mxu0
        %5511 = vmatprep.mubr.f32.mxu0 0.0
        %5512 = vmatmul.mubr.f32.gmra.mxu0 %v5407
        %v5513 = vpop.f32.mrf.mxu0
        %v5514 = vadd.f32 0.0, %v5513
        %v5515 = vpop.f32.mrf.mxu0
        %5516 = vdwg.mxu0
        %v5518 = vsel %vm1994, %v5365, 0
        %v5521 = vsel %vm1994, %v5366, 0
        %v5524 = vsel %vm1994, %v5367, 0
        %v5527 = vsel %vm1994, %v5368, 0
        %v5530 = vsel %vm1994, %v5369, 0
        %v5533 = vsel %vm1994, %v5370, 0
        %v5536 = vsel %vm1994, %v5371, 0
        %v5539 = vsel %vm1994, %v5372, 0
        %v5542 = vsel %vm2415, %v5382, 0
        %5544 = vmatprep.subr.mxu0 0.0
        %5545 = vmatpush1.msra.mxu0 0.0
        %5546 = vmatprep.subr.mxu0 0.0
        %5547 = vmatpush1.msra.mxu0 0.0
        %5548 = vmatprep.subr.mxu0 0.0
        %5549 = vmatpush1.msra.mxu0 0.0
        %5550 = vmatprep.subr.mxu0 0.0
        %5551 = vmatpush1.msra.mxu0 0.0
        %5552 = vmatprep.subr.mxu0 0.0
        %5553 = vmatpush1.msra.mxu0 0.0
        %5554 = vmatprep.subr.mxu0 0.0
        %5555 = vmatpush1.msra.mxu0 0.0
        %5556 = vmatprep.subr.mxu0 0.0
        %5557 = vmatpush1.msra.mxu0 0.0
        %5558 = vmatprep.subr.mxu0 0.0
        %5559 = vmatpush1.msra.mxu0 0.0
        %5560 = vmatprep.subr.mxu0 0.0
        %5561 = vmatpush1.msra.mxu0 0.0
        %5562 = vmatprep.subr.mxu0 0.0
        %5563 = vmatpush1.msra.mxu0 0.0
        %5564 = vmatprep.subr.mxu0 0.0
        %5565 = vmatpush1.msra.mxu0 0.0
        %5566 = vmatprep.subr.mxu0 0.0
        %5567 = vmatpush1.msra.mxu0 0.0
        %5568 = vmatprep.subr.mxu0 0.0
        %5569 = vmatpush1.msra.mxu0 0.0
        %5570 = vmatprep.subr.mxu0 0.0
        %5571 = vmatpush1.msra.mxu0 0.0
        %5572 = vmatprep.subr.mxu0 0.0
        %5573 = vmatpush1.msra.mxu0 %v5542
        %5574 = vmatprep.subr.mxu0 0.0
        %5575 = vmatpush1.msra.mxu0 %v5381
        %5576 = vmatprep.subr.mxu0 0.0
        %5577 = vmatpush2.msra.mxu0 0.0
        %5578 = vmatprep.subr.mxu0 0.0
        %5579 = vmatpush2.msra.mxu0 0.0
        %5580 = vmatprep.subr.mxu0 0.0
        %5581 = vmatpush2.msra.mxu0 0.0
        %5582 = vmatprep.subr.mxu0 0.0
        %5583 = vmatpush2.msra.mxu0 0.0
        %5584 = vmatprep.subr.mxu0 0.0
        %5585 = vmatpush2.msra.mxu0 0.0
        %5586 = vmatprep.subr.mxu0 0.0
        %5587 = vmatpush2.msra.mxu0 0.0
        %5588 = vmatprep.subr.mxu0 0.0
        %5589 = vmatpush2.msra.mxu0 0.0
        %5590 = vmatprep.subr.mxu0 0.0
        %5591 = vmatpush2.msra.mxu0 0.0
        %5592 = vmatprep.subr.mxu0 0.0
        %5593 = vmatpush2.msra.mxu0 0.0
        %5594 = vmatprep.subr.mxu0 0.0
        %5595 = vmatpush2.msra.mxu0 0.0
        %5596 = vmatprep.subr.mxu0 0.0
        %5597 = vmatpush2.msra.mxu0 0.0
        %5598 = vmatprep.subr.mxu0 0.0
        %5599 = vmatpush2.msra.mxu0 0.0
        %5600 = vmatprep.subr.mxu0 0.0
        %5601 = vmatpush2.msra.mxu0 0.0
        %5602 = vmatprep.subr.mxu0 0.0
        %5603 = vmatpush2.msra.mxu0 0.0
        %5604 = vmatprep.subr.mxu0 0.0
        %5605 = vmatpush2.msra.mxu0 0.0
        %5606 = vmatprep.subr.mxu0 0.0
        %5607 = vmatpush2.msra.mxu0 0.0
        %5608 = vmatprep.mubr.f32.mxu0 0.0
        %5609 = vmatmul.mubr.f32.gmra.mxu0 %v5518
        %v5610 = vpop.f32.mrf.mxu0
        %v5611 = vadd.f32 %v5479, %v5610
        %v5612 = vpop.f32.mrf.mxu0
        %5613 = vmatprep.mubr.f32.mxu0 0.0
        %5614 = vmatmul.mubr.f32.gmra.mxu0 %v5521
        %v5615 = vpop.f32.mrf.mxu0
        %v5616 = vadd.f32 %v5484, %v5615
        %v5617 = vpop.f32.mrf.mxu0
        %5618 = vmatprep.mubr.f32.mxu0 0.0
        %5619 = vmatmul.mubr.f32.gmra.mxu0 %v5524
        %v5620 = vpop.f32.mrf.mxu0
        %v5621 = vadd.f32 %v5489, %v5620
        %v5622 = vpop.f32.mrf.mxu0
        %5623 = vmatprep.mubr.f32.mxu0 0.0
        %5624 = vmatmul.mubr.f32.gmra.mxu0 %v5527
        %v5625 = vpop.f32.mrf.mxu0
        %v5626 = vadd.f32 %v5494, %v5625
        %v5627 = vpop.f32.mrf.mxu0
        %5628 = vmatprep.mubr.f32.mxu0 0.0
        %5629 = vmatmul.mubr.f32.gmra.mxu0 %v5530
        %v5630 = vpop.f32.mrf.mxu0
        %v5631 = vadd.f32 %v5499, %v5630
        %v5632 = vpop.f32.mrf.mxu0
        %5633 = vmatprep.mubr.f32.mxu0 0.0
        %5634 = vmatmul.mubr.f32.gmra.mxu0 %v5533
        %v5635 = vpop.f32.mrf.mxu0
        %v5636 = vadd.f32 %v5504, %v5635
        %v5637 = vpop.f32.mrf.mxu0
        %5638 = vmatprep.mubr.f32.mxu0 0.0
        %5639 = vmatmul.mubr.f32.gmra.mxu0 %v5536
        %v5640 = vpop.f32.mrf.mxu0
        %v5641 = vadd.f32 %v5509, %v5640
        %v5642 = vpop.f32.mrf.mxu0
        %5643 = vmatprep.mubr.f32.mxu0 0.0
        %5644 = vmatmul.mubr.f32.gmra.mxu0 %v5539
        %v5645 = vpop.f32.mrf.mxu0
        %v5646 = vadd.f32 %v5514, %v5645
        %v5647 = vpop.f32.mrf.mxu0
        %5648 = vdwg.mxu0
        %v5649 = vld [vmem:[%s771] sm:$0x1]
        %v5651 = vlaneseq
        %v5652 = vshrl.u32 %v5651, 7
        %v5653 = vsub.s32 0, %v5652
        %v5654 = vrot.slane %v5649, %v5653
        %v5656 = vadd.f32 %v5611, %v5654
        %v5657 = vadd.f32 %v5616, %v5654
        %v5658 = vadd.f32 %v5621, %v5654
        %v5659 = vadd.f32 %v5626, %v5654
        %v5660 = vadd.f32 %v5631, %v5654
        %v5661 = vadd.f32 %v5636, %v5654
        %v5662 = vadd.f32 %v5641, %v5654
        %v5663 = vadd.f32 %v5646, %v5654
        %v5664 = vxor.u32 %v5656, 2147483648
        %v5665 = vxor.u32 %v5657, 2147483648
        %v5666 = vxor.u32 %v5658, 2147483648
        %v5667 = vxor.u32 %v5659, 2147483648
        %v5668 = vxor.u32 %v5660, 2147483648
        %v5669 = vxor.u32 %v5661, 2147483648
        %v5670 = vxor.u32 %v5662, 2147483648
        %v5671 = vxor.u32 %v5663, 2147483648
        %v5672 = vmul.f32 %v5664, 1.442695
        %v5673 = vpow.pop %v5672
        %v5674 = vmul.f32 %v5665, 1.442695
        %v5675 = vpow.pop %v5674
        %v5676 = vmul.f32 %v5666, 1.442695
        %v5677 = vpow.pop %v5676
        %v5678 = vmul.f32 %v5667, 1.442695
        %v5679 = vpow.pop %v5678
        %v5680 = vmul.f32 %v5668, 1.442695
        %v5681 = vpow.pop %v5680
        %v5682 = vmul.f32 %v5669, 1.442695
        %v5683 = vpow.pop %v5682
        %v5684 = vmul.f32 %v5670, 1.442695
        %v5685 = vpow.pop %v5684
        %v5686 = vmul.f32 %v5671, 1.442695
        %v5687 = vpow.pop %v5686
        %v5688 = vadd.f32 %v5673, 1.0
        %v5689 = vadd.f32 %v5675, 1.0
        %v5690 = vadd.f32 %v5677, 1.0
        %v5691 = vadd.f32 %v5679, 1.0
        %v5692 = vadd.f32 %v5681, 1.0
        %v5693 = vadd.f32 %v5683, 1.0
        %v5694 = vadd.f32 %v5685, 1.0
        %v5695 = vadd.f32 %v5687, 1.0
        %v5696 = vrcp.pop %v5688
        %v5697 = vmul.f32 1.0, %v5696
        %v5698 = vrcp.pop %v5689
        %v5699 = vmul.f32 1.0, %v5698
        %v5700 = vrcp.pop %v5690
        %v5701 = vmul.f32 1.0, %v5700
        %v5702 = vrcp.pop %v5691
        %v5703 = vmul.f32 1.0, %v5702
        %v5704 = vrcp.pop %v5692
        %v5705 = vmul.f32 1.0, %v5704
        %v5706 = vrcp.pop %v5693
        %v5707 = vmul.f32 1.0, %v5706
        %v5708 = vrcp.pop %v5694
        %v5709 = vmul.f32 1.0, %v5708
        %v5710 = vrcp.pop %v5695
        %v5711 = vmul.f32 1.0, %v5710
        %v5712 = vmul.f32 %v5656, %v5697
        %v5713 = vmul.f32 %v5657, %v5699
        %v5714 = vmul.f32 %v5658, %v5701
        %v5715 = vmul.f32 %v5659, %v5703
        %v5716 = vmul.f32 %v5660, %v5705
        %v5717 = vmul.f32 %v5661, %v5707
        %v5718 = vmul.f32 %v5662, %v5709
        %v5719 = vmul.f32 %v5663, %v5711
        %v5720 = vld [vmem:[%s776] sm:$0xff]
        %v5721 = vld [vmem:[%s776 + $0x8] sm:$0x7]
        %vm5722 = vcmask 89088
        %v5724 = vsel %vm5722, %v5712, 0
        %v5727 = vsel %vm5722, %v5713, 0
        %v5730 = vsel %vm5722, %v5714, 0
        %v5733 = vsel %vm5722, %v5715, 0
        %v5736 = vsel %vm5722, %v5716, 0
        %v5739 = vsel %vm5722, %v5717, 0
        %v5742 = vsel %vm5722, %v5718, 0
        %v5745 = vsel %vm5722, %v5719, 0
        %vm5747 = vcmask 1042432
        %v5749 = vsel %vm5747, %v5721, 0
        %5751 = vmatprep.subr.mxu0 0.0
        %5752 = vmatpush1.msra.mxu0 0.0
        %5753 = vmatprep.subr.mxu0 0.0
        %5754 = vmatpush1.msra.mxu0 0.0
        %5755 = vmatprep.subr.mxu0 0.0
        %5756 = vmatpush1.msra.mxu0 0.0
        %5757 = vmatprep.subr.mxu0 0.0
        %5758 = vmatpush1.msra.mxu0 0.0
        %5759 = vmatprep.subr.mxu0 0.0
        %5760 = vmatpush1.msra.mxu0 0.0
        %5761 = vmatprep.subr.mxu0 0.0
        %5762 = vmatpush1.msra.mxu0 0.0
        %5763 = vmatprep.subr.mxu0 0.0
        %5764 = vmatpush1.msra.mxu0 0.0
        %5765 = vmatprep.subr.mxu0 0.0
        %5766 = vmatpush1.msra.mxu0 0.0
        %5767 = vmatprep.subr.mxu0 0.0
        %5768 = vmatpush1.msra.mxu0 0.0
        %5769 = vmatprep.subr.mxu0 0.0
        %5770 = vmatpush1.msra.mxu0 0.0
        %5771 = vmatprep.subr.mxu0 0.0
        %5772 = vmatpush1.msra.mxu0 0.0
        %5773 = vmatprep.subr.mxu0 0.0
        %5774 = vmatpush1.msra.mxu0 0.0
        %5775 = vmatprep.subr.mxu0 0.0
        %5776 = vmatpush1.msra.mxu0 0.0
        %5777 = vmatprep.subr.mxu0 0.0
        %5778 = vmatpush1.msra.mxu0 0.0
        %5779 = vmatprep.subr.mxu0 0.0
        %5780 = vmatpush1.msra.mxu0 %v5749
        %5781 = vmatprep.subr.mxu0 0.0
        %5782 = vmatpush1.msra.mxu0 %v5720
        %5783 = vmatprep.subr.mxu0 0.0
        %5784 = vmatpush2.msra.mxu0 0.0
        %5785 = vmatprep.subr.mxu0 0.0
        %5786 = vmatpush2.msra.mxu0 0.0
        %5787 = vmatprep.subr.mxu0 0.0
        %5788 = vmatpush2.msra.mxu0 0.0
        %5789 = vmatprep.subr.mxu0 0.0
        %5790 = vmatpush2.msra.mxu0 0.0
        %5791 = vmatprep.subr.mxu0 0.0
        %5792 = vmatpush2.msra.mxu0 0.0
        %5793 = vmatprep.subr.mxu0 0.0
        %5794 = vmatpush2.msra.mxu0 0.0
        %5795 = vmatprep.subr.mxu0 0.0
        %5796 = vmatpush2.msra.mxu0 0.0
        %5797 = vmatprep.subr.mxu0 0.0
        %5798 = vmatpush2.msra.mxu0 0.0
        %5799 = vmatprep.subr.mxu0 0.0
        %5800 = vmatpush2.msra.mxu0 0.0
        %5801 = vmatprep.subr.mxu0 0.0
        %5802 = vmatpush2.msra.mxu0 0.0
        %5803 = vmatprep.subr.mxu0 0.0
        %5804 = vmatpush2.msra.mxu0 0.0
        %5805 = vmatprep.subr.mxu0 0.0
        %5806 = vmatpush2.msra.mxu0 0.0
        %5807 = vmatprep.subr.mxu0 0.0
        %5808 = vmatpush2.msra.mxu0 0.0
        %5809 = vmatprep.subr.mxu0 0.0
        %5810 = vmatpush2.msra.mxu0 0.0
        %5811 = vmatprep.subr.mxu0 0.0
        %5812 = vmatpush2.msra.mxu0 0.0
        %5813 = vmatprep.subr.mxu0 0.0
        %5814 = vmatpush2.msra.mxu0 0.0
        %5815 = vmatprep.mubr.f32.mxu0 0.0
        %5816 = vmatmul.mubr.f32.gmra.mxu0 %v5724
        %v5817 = vpop.f32.mrf.mxu0
        %v5818 = vadd.f32 0.0, %v5817
        %v5819 = vpop.f32.mrf.mxu0
        %5820 = vmatprep.mubr.f32.mxu0 0.0
        %5821 = vmatmul.mubr.f32.gmra.mxu0 %v5727
        %v5822 = vpop.f32.mrf.mxu0
        %v5823 = vadd.f32 0.0, %v5822
        %v5824 = vpop.f32.mrf.mxu0
        %5825 = vmatprep.mubr.f32.mxu0 0.0
        %5826 = vmatmul.mubr.f32.gmra.mxu0 %v5730
        %v5827 = vpop.f32.mrf.mxu0
        %v5828 = vadd.f32 0.0, %v5827
        %v5829 = vpop.f32.mrf.mxu0
        %5830 = vmatprep.mubr.f32.mxu0 0.0
        %5831 = vmatmul.mubr.f32.gmra.mxu0 %v5733
        %v5832 = vpop.f32.mrf.mxu0
        %v5833 = vadd.f32 0.0, %v5832
        %v5834 = vpop.f32.mrf.mxu0
        %5835 = vmatprep.mubr.f32.mxu0 0.0
        %5836 = vmatmul.mubr.f32.gmra.mxu0 %v5736
        %v5837 = vpop.f32.mrf.mxu0
        %v5838 = vadd.f32 0.0, %v5837
        %v5839 = vpop.f32.mrf.mxu0
        %5840 = vmatprep.mubr.f32.mxu0 0.0
        %5841 = vmatmul.mubr.f32.gmra.mxu0 %v5739
        %v5842 = vpop.f32.mrf.mxu0
        %v5843 = vadd.f32 0.0, %v5842
        %v5844 = vpop.f32.mrf.mxu0
        %5845 = vmatprep.mubr.f32.mxu0 0.0
        %5846 = vmatmul.mubr.f32.gmra.mxu0 %v5742
        %v5847 = vpop.f32.mrf.mxu0
        %v5848 = vadd.f32 0.0, %v5847
        %v5849 = vpop.f32.mrf.mxu0
        %5850 = vmatprep.mubr.f32.mxu0 0.0
        %5851 = vmatmul.mubr.f32.gmra.mxu0 %v5745
        %v5852 = vpop.f32.mrf.mxu0
        %v5853 = vadd.f32 0.0, %v5852
        %v5854 = vpop.f32.mrf.mxu0
        %5855 = vdwg.mxu0
        %v5856 = vadd.f32 %v5365, %v5818
        %v5857 = vadd.f32 %v5366, %v5823
        %v5858 = vadd.f32 %v5367, %v5828
        %v5859 = vadd.f32 %v5368, %v5833
        %v5860 = vadd.f32 %v5369, %v5838
        %v5861 = vadd.f32 %v5370, %v5843
        %v5862 = vadd.f32 %v5371, %v5848
        %v5863 = vadd.f32 %v5372, %v5853
        %v5864 = vld [vmem:[%s779] sm:$0x1]
        %v5866 = vlaneseq
        %v5867 = vshrl.u32 %v5866, 7
        %v5868 = vsub.s32 0, %v5867
        %v5869 = vrot.slane %v5864, %v5868
        %v5871 = vadd.f32 %v5856, %v5869
        %v5872 = vadd.f32 %v5857, %v5869
        %v5873 = vadd.f32 %v5858, %v5869
        %v5874 = vadd.f32 %v5859, %v5869
        %v5875 = vadd.f32 %v5860, %v5869
        %v5876 = vadd.f32 %v5861, %v5869
        %v5877 = vadd.f32 %v5862, %v5869
        %v5878 = vadd.f32 %v5863, %v5869
        %v5879 = vmul.f32 %v5373, %v862
        %v5880 = vmul.f32 %v5374, %v862
        %v5881 = vmul.f32 %v5375, %v862
        %v5882 = vmul.f32 %v5376, %v862
        %v5883 = vmul.f32 %v5377, %v862
        %v5884 = vmul.f32 %v5378, %v862
        %v5885 = vmul.f32 %v5379, %v862
        %v5886 = vmul.f32 %v5380, %v862
        %v5887 = vadd.f32 %v5871, %v5879
        %v5888 = vadd.f32 %v5872, %v5880
        %v5889 = vadd.f32 %v5873, %v5881
        %v5890 = vadd.f32 %v5874, %v5882
        %v5891 = vadd.f32 %v5875, %v5883
        %v5892 = vadd.f32 %v5876, %v5884
        %v5893 = vadd.f32 %v5877, %v5885
        %v5894 = vadd.f32 %v5878, %v5886
        %5895 = vst.msk [vmem:[#allocation2] sm:$0xff] %vm1994, %v5887
        %5896 = vst.msk [vmem:[#allocation2 + $0x8] sm:$0xff] %vm1994, %v5888
        %5897 = vst.msk [vmem:[#allocation2 + $0x10] sm:$0xff] %vm1994, %v5889
        %5898 = vst.msk [vmem:[#allocation2 + $0x18] sm:$0xff] %vm1994, %v5890
        %5899 = vst.msk [vmem:[#allocation2 + $0x20] sm:$0xff] %vm1994, %v5891
        %5900 = vst.msk [vmem:[#allocation2 + $0x28] sm:$0xff] %vm1994, %v5892
        %5901 = vst.msk [vmem:[#allocation2 + $0x30] sm:$0xff] %vm1994, %v5893
        %5902 = vst.msk [vmem:[#allocation2 + $0x38] sm:$0xff] %vm1994, %v5894
      $region131: #{e3egnn_forward.1} parent=83 // pred_fallthru
        _
      %p5903 = scmp.eq.s32.totalorder %s32, 3
      %p5904 = pnand %p5903, %p781
      %p5905 = pneg %p5904
      // Predicated region
      $region132: #{e3egnn_forward.1} parent=83 // pred_check
        _
      $region133: #{e3egnn_forward.1} parent=83 // pred_check_branch
        %5907 = sbr.rel (%p5904) target = $region135
      $region134: #{e3egnn_forward.1} parent=83 // pred_region
        %v5908 = vld [vmem:[#allocation2] sm:$0xff]
        %v5909 = vld [vmem:[#allocation2 + $0x8] sm:$0xff]
        %v5910 = vld [vmem:[#allocation2 + $0x10] sm:$0xff]
        %v5911 = vld [vmem:[#allocation2 + $0x18] sm:$0xff]
        %v5912 = vld [vmem:[#allocation2 + $0x20] sm:$0xff]
        %v5913 = vld [vmem:[#allocation2 + $0x28] sm:$0xff]
        %v5914 = vld [vmem:[#allocation2 + $0x30] sm:$0xff]
        %v5915 = vld [vmem:[#allocation2 + $0x38] sm:$0xff]
        %5916 = vst.msk [vmem:[%s17] sm:$0xff] %vm1994, %v5908
        %5917 = vst.msk [vmem:[%s17 + $0x8] sm:$0xff] %vm1994, %v5909
        %5918 = vst.msk [vmem:[%s17 + $0x10] sm:$0xff] %vm1994, %v5910
        %5919 = vst.msk [vmem:[%s17 + $0x18] sm:$0xff] %vm1994, %v5911
        %5920 = vst.msk [vmem:[%s17 + $0x20] sm:$0xff] %vm1994, %v5912
        %5921 = vst.msk [vmem:[%s17 + $0x28] sm:$0xff] %vm1994, %v5913
        %5922 = vst.msk [vmem:[%s17 + $0x30] sm:$0xff] %vm1994, %v5914
        %5923 = vst.msk [vmem:[%s17 + $0x38] sm:$0xff] %vm1994, %v5915
      $region135: #{e3egnn_forward.1} parent=83 // pred_fallthru
        _
      // Predicated region
      $region136: #{e3egnn_forward.1} parent=83 // pred_check
        %p5924 = pneg %p469
      $region137: #{e3egnn_forward.1} parent=83 // pred_check_branch
        %5926 = sbr.rel (%p5924) target = $region139
      $region138: #{e3egnn_forward.1} parent=83 // pred_region
        _
      $region139: #{e3egnn_forward.1} parent=83 // pred_fallthru
        _
      // Predicated region
      $region140: #{e3egnn_forward.1} parent=83 // pred_check
        %p5927 = pneg %p469
      $region141: #{e3egnn_forward.1} parent=83 // pred_check_branch
        %5929 = sbr.rel (%p5927) target = $region143
      $region142: #{e3egnn_forward.1} parent=83 // pred_region
        _
      $region143: #{e3egnn_forward.1} parent=83 // pred_fallthru
        _
    $region84: #{e3egnn_forward.1} parent=5 // pred_fallthru
      _
    %p5930 = scmp.le.s32.totalorder 2, %s23
    // Predicated region
    $region144: #{e3egnn_forward.1} parent=5 // pred_check
      %p5931 = pneg %p5930
    $region145: #{e3egnn_forward.1} parent=5 // pred_check_branch
      %5933 = sbr.rel (%p5931) target = $region147
    $region146: #{e3egnn_forward.1} parent=5 // pred_region
      %s5934 = ssub.s32 %s23, 2
    $region147: #{e3egnn_forward.1} parent=5 // pred_fallthru
      _
  $region6: #{e3egnn_forward.1} parent=0 // loop_footer
    %s27 = sadd.s32 1, %s23
  $region7: #{e3egnn_forward.1} parent=0 // loop_footer_branch
    %22 = sbr.rel target = $region3
  $region8: #{e3egnn_forward.1} parent=0 // loop_exit
    _

</llo_original>
